<compile_context>
chip_gen: v7x
topology: tpu7x:2x2x1
jax: 0.10.0
libtpu: 0.0.40
codegen_flags: <defaults>
</compile_context>

<pallas_src>
import functools

import jax
import jax.numpy as jnp
from jax.experimental import pallas as pl
from jax.experimental.pallas import tpu as pltpu

INPUT = 64
HIDDEN = 128
MLP_HID = 64
OUT = 32
LANE = 128  # lane-dense padded output width


def _lstm_mlp_kernel(x_ref, wih_ref, whh_ref, b_ref,
                     w1_ref, b1_ref, w2_ref, b2_ref,
                     out_ref,
                     gx_ref, h_ref, c_ref,
                     *, chunk_t, b_blk, seq_len, unroll, needs_mask):
    """One (batch_block, time_chunk) grid step.

    x_ref : (chunk_t, b_blk, INPUT) f32 time-major activation block
    gx_ref: (chunk_t*b_blk, 4*HIDDEN) f32 scratch -- hoisted input projection
    h_ref / c_ref: (b_blk, HIDDEN) f32 scratch carried across time chunks
    """
    chunk = pl.program_id(1)

    # ---- init the recurrent state at the first time chunk ----
    @pl.when(chunk == 0)
    def _():
        h_ref[...] = jnp.zeros_like(h_ref)
        c_ref[...] = jnp.zeros_like(c_ref)

    # ---- hoisted input projection for this chunk: one MXU matmul ----
    # (chunk_t, b_blk, INPUT) -> (chunk_t*b_blk, INPUT); b_blk is a multiple
    # of 8 so this is a layout-preserving collapse of the leading dims.
    x2 = x_ref[...].reshape(chunk_t * b_blk, INPUT)
    gx_ref[...] = (
        jnp.dot(x2, wih_ref[...], preferred_element_type=jnp.float32)
        + b_ref[...])

    whh = whh_ref[...]  # (HIDDEN, 4*HIDDEN) f32, VMEM-resident for the loop

    def sigmoid(v):
        # single EUP op per sigmoid instead of exp + add + reciprocal
        return 0.5 * jnp.tanh(0.5 * v) + 0.5

    def step(t, carry):
        h, c = carry
        row = pl.multiple_of(t * b_blk, 8)          # aligned sublane slice
        gates = gx_ref[pl.ds(row, b_blk), :] + jnp.dot(
            h, whh, preferred_element_type=jnp.float32)
        # PyTorch gate order: i, f, g, o (slices are lane-aligned at 128).
        i_g = sigmoid(gates[:, 0 * HIDDEN:1 * HIDDEN])
        f_g = sigmoid(gates[:, 1 * HIDDEN:2 * HIDDEN])
        g_g = jnp.tanh(gates[:, 2 * HIDDEN:3 * HIDDEN])
        o_g = sigmoid(gates[:, 3 * HIDDEN:4 * HIDDEN])
        c_new = f_g * c + i_g * g_g
        h_new = o_g * jnp.tanh(c_new)
        if needs_mask:
            # Only the last (padded) chunk ever has invalid steps.
            valid = (chunk * chunk_t + t) < seq_len
            h_new = jnp.where(valid, h_new, h)
            c_new = jnp.where(valid, c_new, c)
        return (h_new, c_new)

    h_last, c_last = jax.lax.fori_loop(
        0, chunk_t, step, (h_ref[...], c_ref[...]), unroll=unroll)
    h_ref[...] = h_last
    c_ref[...] = c_last

    # ---- fused MLP head on the final hidden state (last chunk only) ----
    @pl.when(chunk == pl.num_programs(1) - 1)
    def _():
        z = (jnp.dot(h_last, w1_ref[...], preferred_element_type=jnp.float32)
             + b1_ref[...])
        z = jnp.maximum(z, 0.0)
        out_ref[...] = (
            jnp.dot(z, w2_ref[...], preferred_element_type=jnp.float32)
            + b2_ref[...])


@jax.jit
def ganslstm_core_forward(x, params):
    """x: (B, T, INPUT) float32 -> (B, OUT) float32."""
    B, T, feat = x.shape
    assert feat == INPUT

    # --- batch padding / blocking ---
    # Pad to the f32 sublane tile (8). If >= 16 rows, split into two batch
    # blocks so the "parallel" grid axis can feed both v7x TensorCores.
    B_pad = ((B + 7) // 8) * 8
    if B_pad >= 16:
        B_pad = ((B_pad + 15) // 16) * 16
        b_blk = B_pad // 2
    else:
        b_blk = B_pad
    n_b = B_pad // b_blk

    # --- time chunking ---
    chunk_t = T if T <= 64 else 64
    n_chunks = pl.cdiv(T, chunk_t)
    T_pad = n_chunks * chunk_t
    needs_mask = (T_pad != T)

    # Pad batch/time with zeros (padded timesteps are masked in-kernel,
    # padded batch rows are sliced off afterwards).
    if B_pad != B or T_pad != T:
        x = jnp.pad(x, ((0, B_pad - B), (0, T_pad - T), (0, 0)))

    # Time-major so the per-step slice is a leading-axis index; one cheap
    # extra HBM pass over x (T*B*64 floats) outside the kernel.
    x_tm = jnp.transpose(x, (1, 0, 2))                     # (T_pad, B_pad, INPUT)

    # --- weights (all f32; recurrence is latency-bound so f32 is ~free) ---
    wih_t = params["w_ih"].T                               # (INPUT, 4H)
    whh_t = params["w_hh"].T                               # (HIDDEN, 4H)
    b = (params["b_ih"] + params["b_hh"]).reshape(1, 4 * HIDDEN)
    # MLP head zero-padded to 128 lanes -> lane-dense matmuls and output store.
    w1p = jnp.zeros((HIDDEN, LANE), jnp.float32).at[:, :MLP_HID].set(params["w1"].T)
    b1p = jnp.zeros((1, LANE), jnp.float32).at[:, :MLP_HID].set(params["b1"])
    w2p = jnp.zeros((LANE, LANE), jnp.float32).at[:MLP_HID, :OUT].set(params["w2"].T)
    b2p = jnp.zeros((1, LANE), jnp.float32).at[:, :OUT].set(params["b2"])

    unroll = True if chunk_t <= 16 else 8
    kernel = functools.partial(
        _lstm_mlp_kernel, chunk_t=chunk_t, b_blk=b_blk, seq_len=T,
        unroll=unroll, needs_mask=needs_mask)

    out = pl.pallas_call(
        kernel,
        out_shape=jax.ShapeDtypeStruct((B_pad, LANE), jnp.float32),
        grid_spec=pltpu.PrefetchScalarGridSpec(
            num_scalar_prefetch=0,
            grid=(n_b, n_chunks),
            in_specs=[
                # activations: streamed per (batch block, time chunk)
                pl.BlockSpec((chunk_t, b_blk, INPUT), lambda bb, c: (c, bb, 0)),
                # weights: constant block index -> DMA'd once, stay resident
                pl.BlockSpec((INPUT, 4 * HIDDEN), lambda bb, c: (0, 0)),
                pl.BlockSpec((HIDDEN, 4 * HIDDEN), lambda bb, c: (0, 0)),
                pl.BlockSpec((1, 4 * HIDDEN), lambda bb, c: (0, 0)),
                pl.BlockSpec((HIDDEN, LANE), lambda bb, c: (0, 0)),
                pl.BlockSpec((1, LANE), lambda bb, c: (0, 0)),
                pl.BlockSpec((LANE, LANE), lambda bb, c: (0, 0)),
                pl.BlockSpec((1, LANE), lambda bb, c: (0, 0)),
            ],
            out_specs=pl.BlockSpec((b_blk, LANE), lambda bb, c: (bb, 0)),
            scratch_shapes=[
                pltpu.VMEM((chunk_t * b_blk, 4 * HIDDEN), jnp.float32),  # gates_x
                pltpu.VMEM((b_blk, HIDDEN), jnp.float32),                # h
                pltpu.VMEM((b_blk, HIDDEN), jnp.float32),                # c
            ],
        ),
        compiler_params=pltpu.CompilerParams(
            dimension_semantics=("parallel", "arbitrary"),
            vmem_limit_bytes=32 * 1024 * 1024),
    )(x_tm, wih_t, whh_t, b, w1p, b1p, w2p, b2p)

    return out[:B, :OUT]


def init_params(key):
    """Deterministic parameter init matching the PyTorch module's shapes."""
    ks = jax.random.split(key, 8)
    s = 1.0 / jnp.sqrt(HIDDEN)
    u = lambda k, shape, scale: jax.random.uniform(k, shape, jnp.float32, -scale, scale)
    return {
        "w_ih": u(ks[0], (4 * HIDDEN, INPUT), s),
        "w_hh": u(ks[1], (4 * HIDDEN, HIDDEN), s),
        "b_ih": u(ks[2], (4 * HIDDEN,), s),
        "b_hh": u(ks[3], (4 * HIDDEN,), s),
        "w1":   u(ks[4], (MLP_HID, HIDDEN), 1.0 / jnp.sqrt(HIDDEN)),
        "b1":   u(ks[5], (MLP_HID,), 1.0 / jnp.sqrt(HIDDEN)),
        "w2":   u(ks[6], (OUT, MLP_HID), 1.0 / jnp.sqrt(MLP_HID)),
        "b2":   u(ks[7], (OUT,), 1.0 / jnp.sqrt(MLP_HID)),
    }


def reference_forward(x, params):
    """Pure-JAX f32 reference (PyTorch LSTM semantics) for validation."""
    B, T, _ = x.shape
    wih_t, whh_t = params["w_ih"].T, params["w_hh"].T
    b = params["b_ih"] + params["b_hh"]

    def step(carry, x_t):
        h, c = carry
        gates = x_t @ wih_t + h @ whh_t + b
        i = jax.nn.sigmoid(gates[:, 0 * HIDDEN:1 * HIDDEN])
        f = jax.nn.sigmoid(gates[:, 1 * HIDDEN:2 * HIDDEN])
        g = jnp.tanh(gates[:, 2 * HIDDEN:3 * HIDDEN])
        o = jax.nn.sigmoid(gates[:, 3 * HIDDEN:4 * HIDDEN])
        c = f * c + i * g
        h = o * jnp.tanh(c)
        return (h, c), None

    h0 = jnp.zeros((B, HIDDEN), jnp.float32)
    (h, _), _ = jax.lax.scan(step, (h0, h0), jnp.transpose(x, (1, 0, 2)))
    z = jnp.maximum(h @ params["w1"].T + params["b1"], 0.0)
    return z @ params["w2"].T + params["b2"]


if __name__ == "__main__":
    key = jax.random.PRNGKey(0)
    k_p, k_x1, k_x2 = jax.random.split(key, 3)
    params = init_params(k_p)

    # Case 1: the module's nominal shape (B=2, T=10) -- single time chunk,
    # single batch block.
    x1 = jax.random.normal(k_x1, (2, 10, INPUT), jnp.float32)
    y1 = jax.block_until_ready(ganslstm_core_forward(x1, params))
    y1_ref = reference_forward(x1, params)
    assert y1.shape == (2, OUT)
    assert jnp.allclose(y1, y1_ref, atol=1e-2, rtol=1e-2), "mismatch (small case)"

    # Case 2: exercises batch blocking (2 parallel blocks), time chunking
    # (3 chunks of 64) and the masked ragged tail (T=130 not a chunk multiple).
    x2 = jax.random.normal(k_x2, (20, 130, INPUT), jnp.float32)
    y2 = jax.block_until_ready(ganslstm_core_forward(x2, params))
    y2_ref = reference_forward(x2, params)
    assert y2.shape == (20, OUT)
    assert jnp.allclose(y2, y2_ref, atol=1e-2, rtol=1e-2), "mismatch (large case)"

    print("KERNEL_OK")
</pallas_src>

<mosaic_0001>
module attributes {stable_mosaic.version = 11 : i64} {
  func.func @_lstm_mlp_kernel(%arg0: i32, %arg1: i32, %arg2: memref<10x8x64xf32, #tpu.memory_space<vmem>>, %arg3: memref<64x512xf32, #tpu.memory_space<vmem>>, %arg4: memref<128x512xf32, #tpu.memory_space<vmem>>, %arg5: memref<1x512xf32, #tpu.memory_space<vmem>>, %arg6: memref<128x128xf32, #tpu.memory_space<vmem>>, %arg7: memref<1x128xf32, #tpu.memory_space<vmem>>, %arg8: memref<128x128xf32, #tpu.memory_space<vmem>>, %arg9: memref<1x128xf32, #tpu.memory_space<vmem>>, %arg10: memref<8x128xf32, #tpu.memory_space<vmem>>, %arg11: memref<80x512xf32, #tpu.memory_space<vmem>>, %arg12: memref<8x128xf32, #tpu.memory_space<vmem>>, %arg13: memref<8x128xf32, #tpu.memory_space<vmem>>) attributes {dimension_semantics = [#tpu.dimension_semantics<parallel>, #tpu.dimension_semantics<arbitrary>], iteration_bounds = array<i64: 1, 1>, scalar_prefetch = 0 : i64, scratch_operands = 3 : i64, tpu.core_type = #tpu.core_type<tc>, window_params = [{transform_indices = @transform_0, window_bounds = array<i64: 10, 8, 64>}, {pipeline_mode = #tpu.pipeline_mode<synchronous>, transform_indices = @transform_1, window_bounds = array<i64: 64, 512>}, {pipeline_mode = #tpu.pipeline_mode<synchronous>, transform_indices = @transform_2, window_bounds = array<i64: 128, 512>}, {pipeline_mode = #tpu.pipeline_mode<synchronous>, transform_indices = @transform_3, window_bounds = array<i64: 1, 512>}, {pipeline_mode = #tpu.pipeline_mode<synchronous>, transform_indices = @transform_4, window_bounds = array<i64: 128, 128>}, {pipeline_mode = #tpu.pipeline_mode<synchronous>, transform_indices = @transform_5, window_bounds = array<i64: 1, 128>}, {pipeline_mode = #tpu.pipeline_mode<synchronous>, transform_indices = @transform_6, window_bounds = array<i64: 128, 128>}, {pipeline_mode = #tpu.pipeline_mode<synchronous>, transform_indices = @transform_7, window_bounds = array<i64: 1, 128>}, {transform_indices = @transform_8, window_bounds = array<i64: 8, 128>}]} {
    %c0_i32 = arith.constant 0 : i32
    %0 = arith.cmpi eq, %arg1, %c0_i32 : i32
    %1 = arith.extui %0 : i1 to i32
    %c0_i32_0 = arith.constant 0 : i32
    %2 = arith.cmpi ne, %1, %c0_i32_0 : i32
    scf.if %2 {
      %cst_142 = arith.constant 0.000000e+00 : f32
      %389 = vector.broadcast %cst_142 : f32 to vector<8x128xf32>
      %c0_143 = arith.constant 0 : index
      %c0_144 = arith.constant 0 : index
      %390 = vector.load %arg12[%c0_143, %c0_144] : memref<8x128xf32, #tpu.memory_space<vmem>>, vector<8x128xf32>
      tpu.vector_store %arg12[%c0_143, %c0_144], %389 {strides = array<i32>} : memref<8x128xf32, #tpu.memory_space<vmem>>, vector<8x128xf32>,
      %cst_145 = arith.constant 0.000000e+00 : f32
      %391 = vector.broadcast %cst_145 : f32 to vector<8x128xf32>
      %c0_146 = arith.constant 0 : index
      %c0_147 = arith.constant 0 : index
      %392 = vector.load %arg13[%c0_146, %c0_147] : memref<8x128xf32, #tpu.memory_space<vmem>>, vector<8x128xf32>
      tpu.vector_store %arg13[%c0_146, %c0_147], %391 {strides = array<i32>} : memref<8x128xf32, #tpu.memory_space<vmem>>, vector<8x128xf32>,
    } else {
    }
    %c0 = arith.constant 0 : index
    %c0_1 = arith.constant 0 : index
    %c0_2 = arith.constant 0 : index
    %3 = vector.load %arg2[%c0, %c0_1, %c0_2] : memref<10x8x64xf32, #tpu.memory_space<vmem>>, vector<10x8x64xf32>
    %4 = vector.shape_cast %3 : vector<10x8x64xf32> to vector<80x64xf32>
    %c0_3 = arith.constant 0 : index
    %c0_4 = arith.constant 0 : index
    %5 = vector.load %arg3[%c0_3, %c0_4] : memref<64x512xf32, #tpu.memory_space<vmem>>, vector<64x512xf32>
    %cst = arith.constant dense<0.000000e+00> : vector<80x512xf32>
    %6 = tpu.matmul %4, %5, %cst {dimension_numbers = #tpu.dot_dimension_numbers<[1], [0], [0], [1], [0, 0, 1, 1], [], []>} : vector<80x64xf32>, vector<64x512xf32>, vector<80x512xf32> -> vector<80x512xf32>
    %c0_5 = arith.constant 0 : index
    %c0_6 = arith.constant 0 : index
    %7 = vector.load %arg5[%c0_5, %c0_6] : memref<1x512xf32, #tpu.memory_space<vmem>>, vector<1x512xf32>
    %8 = vector.broadcast %7 : vector<1x512xf32> to vector<80x512xf32>
    %9 = arith.addf %6, %8 : vector<80x512xf32>
    %c0_7 = arith.constant 0 : index
    %c0_8 = arith.constant 0 : index
    %10 = vector.load %arg11[%c0_7, %c0_8] : memref<80x512xf32, #tpu.memory_space<vmem>>, vector<80x512xf32>
    tpu.vector_store %arg11[%c0_7, %c0_8], %9 {strides = array<i32>} : memref<80x512xf32, #tpu.memory_space<vmem>>, vector<80x512xf32>,
    %c0_9 = arith.constant 0 : index
    %c0_10 = arith.constant 0 : index
    %11 = vector.load %arg4[%c0_9, %c0_10] : memref<128x512xf32, #tpu.memory_space<vmem>>, vector<128x512xf32>
    %c0_11 = arith.constant 0 : index
    %c0_12 = arith.constant 0 : index
    %12 = vector.load %arg12[%c0_11, %c0_12] : memref<8x128xf32, #tpu.memory_space<vmem>>, vector<8x128xf32>
    %c0_13 = arith.constant 0 : index
    %c0_14 = arith.constant 0 : index
    %13 = vector.load %arg13[%c0_13, %c0_14] : memref<8x128xf32, #tpu.memory_space<vmem>>, vector<8x128xf32>
    %c0_i32_15 = arith.constant 0 : i32
    %c8_i32 = arith.constant 8 : i32
    %14 = arith.muli %c0_i32_15, %c8_i32 : i32
    %15 = tpu.assume_multiple %14, 8 : i32
    %16 = arith.index_cast %15 : i32 to index
    %c0_16 = arith.constant 0 : index
    %17 = vector.load %arg11[%16, %c0_16] : memref<80x512xf32, #tpu.memory_space<vmem>>, vector<8x512xf32>
    %cst_17 = arith.constant dense<0.000000e+00> : vector<8x512xf32>
    %18 = tpu.matmul %12, %11, %cst_17 {dimension_numbers = #tpu.dot_dimension_numbers<[1], [0], [0], [1], [0, 0, 1, 1], [], []>} : vector<8x128xf32>, vector<128x512xf32>, vector<8x512xf32> -> vector<8x512xf32>
    %19 = arith.addf %17, %18 : vector<8x512xf32>
    %20 = vector.extract_strided_slice %19 {offsets = [0, 0], sizes = [8, 128], strides = [1, 1]} : vector<8x512xf32> to vector<8x128xf32>
    %cst_18 = arith.constant 5.000000e-01 : f32
    %21 = vector.broadcast %cst_18 : f32 to vector<8x128xf32>
    %22 = arith.mulf %21, %20 : vector<8x128xf32>
    %23 = math.tanh %22 : vector<8x128xf32>
    %cst_19 = arith.constant 5.000000e-01 : f32
    %24 = vector.broadcast %cst_19 : f32 to vector<8x128xf32>
    %25 = arith.mulf %24, %23 : vector<8x128xf32>
    %cst_20 = arith.constant 5.000000e-01 : f32
    %26 = vector.broadcast %cst_20 : f32 to vector<8x128xf32>
    %27 = arith.addf %25, %26 : vector<8x128xf32>
    %28 = vector.extract_strided_slice %19 {offsets = [0, 128], sizes = [8, 128], strides = [1, 1]} : vector<8x512xf32> to vector<8x128xf32>
    %cst_21 = arith.constant 5.000000e-01 : f32
    %29 = vector.broadcast %cst_21 : f32 to vector<8x128xf32>
    %30 = arith.mulf %29, %28 : vector<8x128xf32>
    %31 = math.tanh %30 : vector<8x128xf32>
    %cst_22 = arith.constant 5.000000e-01 : f32
    %32 = vector.broadcast %cst_22 : f32 to vector<8x128xf32>
    %33 = arith.mulf %32, %31 : vector<8x128xf32>
    %cst_23 = arith.constant 5.000000e-01 : f32
    %34 = vector.broadcast %cst_23 : f32 to vector<8x128xf32>
    %35 = arith.addf %33, %34 : vector<8x128xf32>
    %36 = vector.extract_strided_slice %19 {offsets = [0, 256], sizes = [8, 128], strides = [1, 1]} : vector<8x512xf32> to vector<8x128xf32>
    %37 = math.tanh %36 : vector<8x128xf32>
    %38 = vector.extract_strided_slice %19 {offsets = [0, 384], sizes = [8, 128], strides = [1, 1]} : vector<8x512xf32> to vector<8x128xf32>
    %cst_24 = arith.constant 5.000000e-01 : f32
    %39 = vector.broadcast %cst_24 : f32 to vector<8x128xf32>
    %40 = arith.mulf %39, %38 : vector<8x128xf32>
    %41 = math.tanh %40 : vector<8x128xf32>
    %cst_25 = arith.constant 5.000000e-01 : f32
    %42 = vector.broadcast %cst_25 : f32 to vector<8x128xf32>
    %43 = arith.mulf %42, %41 : vector<8x128xf32>
    %cst_26 = arith.constant 5.000000e-01 : f32
    %44 = vector.broadcast %cst_26 : f32 to vector<8x128xf32>
    %45 = arith.addf %43, %44 : vector<8x128xf32>
    %46 = arith.mulf %35, %13 : vector<8x128xf32>
    %47 = arith.mulf %27, %37 : vector<8x128xf32>
    %48 = arith.addf %46, %47 : vector<8x128xf32>
    %49 = math.tanh %48 : vector<8x128xf32>
    %50 = arith.mulf %45, %49 : vector<8x128xf32>
    %c1_i32 = arith.constant 1 : i32
    %c8_i32_27 = arith.constant 8 : i32
    %51 = arith.muli %c1_i32, %c8_i32_27 : i32
    %52 = tpu.assume_multiple %51, 8 : i32
    %53 = arith.index_cast %52 : i32 to index
    %c0_28 = arith.constant 0 : index
    %54 = vector.load %arg11[%53, %c0_28] : memref<80x512xf32, #tpu.memory_space<vmem>>, vector<8x512xf32>
    %cst_29 = arith.constant dense<0.000000e+00> : vector<8x512xf32>
    %55 = tpu.matmul %50, %11, %cst_29 {dimension_numbers = #tpu.dot_dimension_numbers<[1], [0], [0], [1], [0, 0, 1, 1], [], []>} : vector<8x128xf32>, vector<128x512xf32>, vector<8x512xf32> -> vector<8x512xf32>
    %56 = arith.addf %54, %55 : vector<8x512xf32>
    %57 = vector.extract_strided_slice %56 {offsets = [0, 0], sizes = [8, 128], strides = [1, 1]} : vector<8x512xf32> to vector<8x128xf32>
    %cst_30 = arith.constant 5.000000e-01 : f32
    %58 = vector.broadcast %cst_30 : f32 to vector<8x128xf32>
    %59 = arith.mulf %58, %57 : vector<8x128xf32>
    %60 = math.tanh %59 : vector<8x128xf32>
    %cst_31 = arith.constant 5.000000e-01 : f32
    %61 = vector.broadcast %cst_31 : f32 to vector<8x128xf32>
    %62 = arith.mulf %61, %60 : vector<8x128xf32>
    %cst_32 = arith.constant 5.000000e-01 : f32
    %63 = vector.broadcast %cst_32 : f32 to vector<8x128xf32>
    %64 = arith.addf %62, %63 : vector<8x128xf32>
    %65 = vector.extract_strided_slice %56 {offsets = [0, 128], sizes = [8, 128], strides = [1, 1]} : vector<8x512xf32> to vector<8x128xf32>
    %cst_33 = arith.constant 5.000000e-01 : f32
    %66 = vector.broadcast %cst_33 : f32 to vector<8x128xf32>
    %67 = arith.mulf %66, %65 : vector<8x128xf32>
    %68 = math.tanh %67 : vector<8x128xf32>
    %cst_34 = arith.constant 5.000000e-01 : f32
    %69 = vector.broadcast %cst_34 : f32 to vector<8x128xf32>
    %70 = arith.mulf %69, %68 : vector<8x128xf32>
    %cst_35 = arith.constant 5.000000e-01 : f32
    %71 = vector.broadcast %cst_35 : f32 to vector<8x128xf32>
    %72 = arith.addf %70, %71 : vector<8x128xf32>
    %73 = vector.extract_strided_slice %56 {offsets = [0, 256], sizes = [8, 128], strides = [1, 1]} : vector<8x512xf32> to vector<8x128xf32>
    %74 = math.tanh %73 : vector<8x128xf32>
    %75 = vector.extract_strided_slice %56 {offsets = [0, 384], sizes = [8, 128], strides = [1, 1]} : vector<8x512xf32> to vector<8x128xf32>
    %cst_36 = arith.constant 5.000000e-01 : f32
    %76 = vector.broadcast %cst_36 : f32 to vector<8x128xf32>
    %77 = arith.mulf %76, %75 : vector<8x128xf32>
    %78 = math.tanh %77 : vector<8x128xf32>
    %cst_37 = arith.constant 5.000000e-01 : f32
    %79 = vector.broadcast %cst_37 : f32 to vector<8x128xf32>
    %80 = arith.mulf %79, %78 : vector<8x128xf32>
    %cst_38 = arith.constant 5.000000e-01 : f32
    %81 = vector.broadcast %cst_38 : f32 to vector<8x128xf32>
    %82 = arith.addf %80, %81 : vector<8x128xf32>
    %83 = arith.mulf %72, %48 : vector<8x128xf32>
    %84 = arith.mulf %64, %74 : vector<8x128xf32>
    %85 = arith.addf %83, %84 : vector<8x128xf32>
    %86 = math.tanh %85 : vector<8x128xf32>
    %87 = arith.mulf %82, %86 : vector<8x128xf32>
    %c2_i32 = arith.constant 2 : i32
    %c8_i32_39 = arith.constant 8 : i32
    %88 = arith.muli %c2_i32, %c8_i32_39 : i32
    %89 = tpu.assume_multiple %88, 8 : i32
    %90 = arith.index_cast %89 : i32 to index
    %c0_40 = arith.constant 0 : index
    %91 = vector.load %arg11[%90, %c0_40] : memref<80x512xf32, #tpu.memory_space<vmem>>, vector<8x512xf32>
    %cst_41 = arith.constant dense<0.000000e+00> : vector<8x512xf32>
    %92 = tpu.matmul %87, %11, %cst_41 {dimension_numbers = #tpu.dot_dimension_numbers<[1], [0], [0], [1], [0, 0, 1, 1], [], []>} : vector<8x128xf32>, vector<128x512xf32>, vector<8x512xf32> -> vector<8x512xf32>
    %93 = arith.addf %91, %92 : vector<8x512xf32>
    %94 = vector.extract_strided_slice %93 {offsets = [0, 0], sizes = [8, 128], strides = [1, 1]} : vector<8x512xf32> to vector<8x128xf32>
    %cst_42 = arith.constant 5.000000e-01 : f32
    %95 = vector.broadcast %cst_42 : f32 to vector<8x128xf32>
    %96 = arith.mulf %95, %94 : vector<8x128xf32>
    %97 = math.tanh %96 : vector<8x128xf32>
    %cst_43 = arith.constant 5.000000e-01 : f32
    %98 = vector.broadcast %cst_43 : f32 to vector<8x128xf32>
    %99 = arith.mulf %98, %97 : vector<8x128xf32>
    %cst_44 = arith.constant 5.000000e-01 : f32
    %100 = vector.broadcast %cst_44 : f32 to vector<8x128xf32>
    %101 = arith.addf %99, %100 : vector<8x128xf32>
    %102 = vector.extract_strided_slice %93 {offsets = [0, 128], sizes = [8, 128], strides = [1, 1]} : vector<8x512xf32> to vector<8x128xf32>
    %cst_45 = arith.constant 5.000000e-01 : f32
    %103 = vector.broadcast %cst_45 : f32 to vector<8x128xf32>
    %104 = arith.mulf %103, %102 : vector<8x128xf32>
    %105 = math.tanh %104 : vector<8x128xf32>
    %cst_46 = arith.constant 5.000000e-01 : f32
    %106 = vector.broadcast %cst_46 : f32 to vector<8x128xf32>
    %107 = arith.mulf %106, %105 : vector<8x128xf32>
    %cst_47 = arith.constant 5.000000e-01 : f32
    %108 = vector.broadcast %cst_47 : f32 to vector<8x128xf32>
    %109 = arith.addf %107, %108 : vector<8x128xf32>
    %110 = vector.extract_strided_slice %93 {offsets = [0, 256], sizes = [8, 128], strides = [1, 1]} : vector<8x512xf32> to vector<8x128xf32>
    %111 = math.tanh %110 : vector<8x128xf32>
    %112 = vector.extract_strided_slice %93 {offsets = [0, 384], sizes = [8, 128], strides = [1, 1]} : vector<8x512xf32> to vector<8x128xf32>
    %cst_48 = arith.constant 5.000000e-01 : f32
    %113 = vector.broadcast %cst_48 : f32 to vector<8x128xf32>
    %114 = arith.mulf %113, %112 : vector<8x128xf32>
    %115 = math.tanh %114 : vector<8x128xf32>
    %cst_49 = arith.constant 5.000000e-01 : f32
    %116 = vector.broadcast %cst_49 : f32 to vector<8x128xf32>
    %117 = arith.mulf %116, %115 : vector<8x128xf32>
    %cst_50 = arith.constant 5.000000e-01 : f32
    %118 = vector.broadcast %cst_50 : f32 to vector<8x128xf32>
    %119 = arith.addf %117, %118 : vector<8x128xf32>
    %120 = arith.mulf %109, %85 : vector<8x128xf32>
    %121 = arith.mulf %101, %111 : vector<8x128xf32>
    %122 = arith.addf %120, %121 : vector<8x128xf32>
    %123 = math.tanh %122 : vector<8x128xf32>
    %124 = arith.mulf %119, %123 : vector<8x128xf32>
    %c3_i32 = arith.constant 3 : i32
    %c8_i32_51 = arith.constant 8 : i32
    %125 = arith.muli %c3_i32, %c8_i32_51 : i32
    %126 = tpu.assume_multiple %125, 8 : i32
    %127 = arith.index_cast %126 : i32 to index
    %c0_52 = arith.constant 0 : index
    %128 = vector.load %arg11[%127, %c0_52] : memref<80x512xf32, #tpu.memory_space<vmem>>, vector<8x512xf32>
    %cst_53 = arith.constant dense<0.000000e+00> : vector<8x512xf32>
    %129 = tpu.matmul %124, %11, %cst_53 {dimension_numbers = #tpu.dot_dimension_numbers<[1], [0], [0], [1], [0, 0, 1, 1], [], []>} : vector<8x128xf32>, vector<128x512xf32>, vector<8x512xf32> -> vector<8x512xf32>
    %130 = arith.addf %128, %129 : vector<8x512xf32>
    %131 = vector.extract_strided_slice %130 {offsets = [0, 0], sizes = [8, 128], strides = [1, 1]} : vector<8x512xf32> to vector<8x128xf32>
    %cst_54 = arith.constant 5.000000e-01 : f32
    %132 = vector.broadcast %cst_54 : f32 to vector<8x128xf32>
    %133 = arith.mulf %132, %131 : vector<8x128xf32>
    %134 = math.tanh %133 : vector<8x128xf32>
    %cst_55 = arith.constant 5.000000e-01 : f32
    %135 = vector.broadcast %cst_55 : f32 to vector<8x128xf32>
    %136 = arith.mulf %135, %134 : vector<8x128xf32>
    %cst_56 = arith.constant 5.000000e-01 : f32
    %137 = vector.broadcast %cst_56 : f32 to vector<8x128xf32>
    %138 = arith.addf %136, %137 : vector<8x128xf32>
    %139 = vector.extract_strided_slice %130 {offsets = [0, 128], sizes = [8, 128], strides = [1, 1]} : vector<8x512xf32> to vector<8x128xf32>
    %cst_57 = arith.constant 5.000000e-01 : f32
    %140 = vector.broadcast %cst_57 : f32 to vector<8x128xf32>
    %141 = arith.mulf %140, %139 : vector<8x128xf32>
    %142 = math.tanh %141 : vector<8x128xf32>
    %cst_58 = arith.constant 5.000000e-01 : f32
    %143 = vector.broadcast %cst_58 : f32 to vector<8x128xf32>
    %144 = arith.mulf %143, %142 : vector<8x128xf32>
    %cst_59 = arith.constant 5.000000e-01 : f32
    %145 = vector.broadcast %cst_59 : f32 to vector<8x128xf32>
    %146 = arith.addf %144, %145 : vector<8x128xf32>
    %147 = vector.extract_strided_slice %130 {offsets = [0, 256], sizes = [8, 128], strides = [1, 1]} : vector<8x512xf32> to vector<8x128xf32>
    %148 = math.tanh %147 : vector<8x128xf32>
    %149 = vector.extract_strided_slice %130 {offsets = [0, 384], sizes = [8, 128], strides = [1, 1]} : vector<8x512xf32> to vector<8x128xf32>
    %cst_60 = arith.constant 5.000000e-01 : f32
    %150 = vector.broadcast %cst_60 : f32 to vector<8x128xf32>
    %151 = arith.mulf %150, %149 : vector<8x128xf32>
    %152 = math.tanh %151 : vector<8x128xf32>
    %cst_61 = arith.constant 5.000000e-01 : f32
    %153 = vector.broadcast %cst_61 : f32 to vector<8x128xf32>
    %154 = arith.mulf %153, %152 : vector<8x128xf32>
    %cst_62 = arith.constant 5.000000e-01 : f32
    %155 = vector.broadcast %cst_62 : f32 to vector<8x128xf32>
    %156 = arith.addf %154, %155 : vector<8x128xf32>
    %157 = arith.mulf %146, %122 : vector<8x128xf32>
    %158 = arith.mulf %138, %148 : vector<8x128xf32>
    %159 = arith.addf %157, %158 : vector<8x128xf32>
    %160 = math.tanh %159 : vector<8x128xf32>
    %161 = arith.mulf %156, %160 : vector<8x128xf32>
    %c4_i32 = arith.constant 4 : i32
    %c8_i32_63 = arith.constant 8 : i32
    %162 = arith.muli %c4_i32, %c8_i32_63 : i32
    %163 = tpu.assume_multiple %162, 8 : i32
    %164 = arith.index_cast %163 : i32 to index
    %c0_64 = arith.constant 0 : index
    %165 = vector.load %arg11[%164, %c0_64] : memref<80x512xf32, #tpu.memory_space<vmem>>, vector<8x512xf32>
    %cst_65 = arith.constant dense<0.000000e+00> : vector<8x512xf32>
    %166 = tpu.matmul %161, %11, %cst_65 {dimension_numbers = #tpu.dot_dimension_numbers<[1], [0], [0], [1], [0, 0, 1, 1], [], []>} : vector<8x128xf32>, vector<128x512xf32>, vector<8x512xf32> -> vector<8x512xf32>
    %167 = arith.addf %165, %166 : vector<8x512xf32>
    %168 = vector.extract_strided_slice %167 {offsets = [0, 0], sizes = [8, 128], strides = [1, 1]} : vector<8x512xf32> to vector<8x128xf32>
    %cst_66 = arith.constant 5.000000e-01 : f32
    %169 = vector.broadcast %cst_66 : f32 to vector<8x128xf32>
    %170 = arith.mulf %169, %168 : vector<8x128xf32>
    %171 = math.tanh %170 : vector<8x128xf32>
    %cst_67 = arith.constant 5.000000e-01 : f32
    %172 = vector.broadcast %cst_67 : f32 to vector<8x128xf32>
    %173 = arith.mulf %172, %171 : vector<8x128xf32>
    %cst_68 = arith.constant 5.000000e-01 : f32
    %174 = vector.broadcast %cst_68 : f32 to vector<8x128xf32>
    %175 = arith.addf %173, %174 : vector<8x128xf32>
    %176 = vector.extract_strided_slice %167 {offsets = [0, 128], sizes = [8, 128], strides = [1, 1]} : vector<8x512xf32> to vector<8x128xf32>
    %cst_69 = arith.constant 5.000000e-01 : f32
    %177 = vector.broadcast %cst_69 : f32 to vector<8x128xf32>
    %178 = arith.mulf %177, %176 : vector<8x128xf32>
    %179 = math.tanh %178 : vector<8x128xf32>
    %cst_70 = arith.constant 5.000000e-01 : f32
    %180 = vector.broadcast %cst_70 : f32 to vector<8x128xf32>
    %181 = arith.mulf %180, %179 : vector<8x128xf32>
    %cst_71 = arith.constant 5.000000e-01 : f32
    %182 = vector.broadcast %cst_71 : f32 to vector<8x128xf32>
    %183 = arith.addf %181, %182 : vector<8x128xf32>
    %184 = vector.extract_strided_slice %167 {offsets = [0, 256], sizes = [8, 128], strides = [1, 1]} : vector<8x512xf32> to vector<8x128xf32>
    %185 = math.tanh %184 : vector<8x128xf32>
    %186 = vector.extract_strided_slice %167 {offsets = [0, 384], sizes = [8, 128], strides = [1, 1]} : vector<8x512xf32> to vector<8x128xf32>
    %cst_72 = arith.constant 5.000000e-01 : f32
    %187 = vector.broadcast %cst_72 : f32 to vector<8x128xf32>
    %188 = arith.mulf %187, %186 : vector<8x128xf32>
    %189 = math.tanh %188 : vector<8x128xf32>
    %cst_73 = arith.constant 5.000000e-01 : f32
    %190 = vector.broadcast %cst_73 : f32 to vector<8x128xf32>
    %191 = arith.mulf %190, %189 : vector<8x128xf32>
    %cst_74 = arith.constant 5.000000e-01 : f32
    %192 = vector.broadcast %cst_74 : f32 to vector<8x128xf32>
    %193 = arith.addf %191, %192 : vector<8x128xf32>
    %194 = arith.mulf %183, %159 : vector<8x128xf32>
    %195 = arith.mulf %175, %185 : vector<8x128xf32>
    %196 = arith.addf %194, %195 : vector<8x128xf32>
    %197 = math.tanh %196 : vector<8x128xf32>
    %198 = arith.mulf %193, %197 : vector<8x128xf32>
    %c5_i32 = arith.constant 5 : i32
    %c8_i32_75 = arith.constant 8 : i32
    %199 = arith.muli %c5_i32, %c8_i32_75 : i32
    %200 = tpu.assume_multiple %199, 8 : i32
    %201 = arith.index_cast %200 : i32 to index
    %c0_76 = arith.constant 0 : index
    %202 = vector.load %arg11[%201, %c0_76] : memref<80x512xf32, #tpu.memory_space<vmem>>, vector<8x512xf32>
    %cst_77 = arith.constant dense<0.000000e+00> : vector<8x512xf32>
    %203 = tpu.matmul %198, %11, %cst_77 {dimension_numbers = #tpu.dot_dimension_numbers<[1], [0], [0], [1], [0, 0, 1, 1], [], []>} : vector<8x128xf32>, vector<128x512xf32>, vector<8x512xf32> -> vector<8x512xf32>
    %204 = arith.addf %202, %203 : vector<8x512xf32>
    %205 = vector.extract_strided_slice %204 {offsets = [0, 0], sizes = [8, 128], strides = [1, 1]} : vector<8x512xf32> to vector<8x128xf32>
    %cst_78 = arith.constant 5.000000e-01 : f32
    %206 = vector.broadcast %cst_78 : f32 to vector<8x128xf32>
    %207 = arith.mulf %206, %205 : vector<8x128xf32>
    %208 = math.tanh %207 : vector<8x128xf32>
    %cst_79 = arith.constant 5.000000e-01 : f32
    %209 = vector.broadcast %cst_79 : f32 to vector<8x128xf32>
    %210 = arith.mulf %209, %208 : vector<8x128xf32>
    %cst_80 = arith.constant 5.000000e-01 : f32
    %211 = vector.broadcast %cst_80 : f32 to vector<8x128xf32>
    %212 = arith.addf %210, %211 : vector<8x128xf32>
    %213 = vector.extract_strided_slice %204 {offsets = [0, 128], sizes = [8, 128], strides = [1, 1]} : vector<8x512xf32> to vector<8x128xf32>
    %cst_81 = arith.constant 5.000000e-01 : f32
    %214 = vector.broadcast %cst_81 : f32 to vector<8x128xf32>
    %215 = arith.mulf %214, %213 : vector<8x128xf32>
    %216 = math.tanh %215 : vector<8x128xf32>
    %cst_82 = arith.constant 5.000000e-01 : f32
    %217 = vector.broadcast %cst_82 : f32 to vector<8x128xf32>
    %218 = arith.mulf %217, %216 : vector<8x128xf32>
    %cst_83 = arith.constant 5.000000e-01 : f32
    %219 = vector.broadcast %cst_83 : f32 to vector<8x128xf32>
    %220 = arith.addf %218, %219 : vector<8x128xf32>
    %221 = vector.extract_strided_slice %204 {offsets = [0, 256], sizes = [8, 128], strides = [1, 1]} : vector<8x512xf32> to vector<8x128xf32>
    %222 = math.tanh %221 : vector<8x128xf32>
    %223 = vector.extract_strided_slice %204 {offsets = [0, 384], sizes = [8, 128], strides = [1, 1]} : vector<8x512xf32> to vector<8x128xf32>
    %cst_84 = arith.constant 5.000000e-01 : f32
    %224 = vector.broadcast %cst_84 : f32 to vector<8x128xf32>
    %225 = arith.mulf %224, %223 : vector<8x128xf32>
    %226 = math.tanh %225 : vector<8x128xf32>
    %cst_85 = arith.constant 5.000000e-01 : f32
    %227 = vector.broadcast %cst_85 : f32 to vector<8x128xf32>
    %228 = arith.mulf %227, %226 : vector<8x128xf32>
    %cst_86 = arith.constant 5.000000e-01 : f32
    %229 = vector.broadcast %cst_86 : f32 to vector<8x128xf32>
    %230 = arith.addf %228, %229 : vector<8x128xf32>
    %231 = arith.mulf %220, %196 : vector<8x128xf32>
    %232 = arith.mulf %212, %222 : vector<8x128xf32>
    %233 = arith.addf %231, %232 : vector<8x128xf32>
    %234 = math.tanh %233 : vector<8x128xf32>
    %235 = arith.mulf %230, %234 : vector<8x128xf32>
    %c6_i32 = arith.constant 6 : i32
    %c8_i32_87 = arith.constant 8 : i32
    %236 = arith.muli %c6_i32, %c8_i32_87 : i32
    %237 = tpu.assume_multiple %236, 8 : i32
    %238 = arith.index_cast %237 : i32 to index
    %c0_88 = arith.constant 0 : index
    %239 = vector.load %arg11[%238, %c0_88] : memref<80x512xf32, #tpu.memory_space<vmem>>, vector<8x512xf32>
    %cst_89 = arith.constant dense<0.000000e+00> : vector<8x512xf32>
    %240 = tpu.matmul %235, %11, %cst_89 {dimension_numbers = #tpu.dot_dimension_numbers<[1], [0], [0], [1], [0, 0, 1, 1], [], []>} : vector<8x128xf32>, vector<128x512xf32>, vector<8x512xf32> -> vector<8x512xf32>
    %241 = arith.addf %239, %240 : vector<8x512xf32>
    %242 = vector.extract_strided_slice %241 {offsets = [0, 0], sizes = [8, 128], strides = [1, 1]} : vector<8x512xf32> to vector<8x128xf32>
    %cst_90 = arith.constant 5.000000e-01 : f32
    %243 = vector.broadcast %cst_90 : f32 to vector<8x128xf32>
    %244 = arith.mulf %243, %242 : vector<8x128xf32>
    %245 = math.tanh %244 : vector<8x128xf32>
    %cst_91 = arith.constant 5.000000e-01 : f32
    %246 = vector.broadcast %cst_91 : f32 to vector<8x128xf32>
    %247 = arith.mulf %246, %245 : vector<8x128xf32>
    %cst_92 = arith.constant 5.000000e-01 : f32
    %248 = vector.broadcast %cst_92 : f32 to vector<8x128xf32>
    %249 = arith.addf %247, %248 : vector<8x128xf32>
    %250 = vector.extract_strided_slice %241 {offsets = [0, 128], sizes = [8, 128], strides = [1, 1]} : vector<8x512xf32> to vector<8x128xf32>
    %cst_93 = arith.constant 5.000000e-01 : f32
    %251 = vector.broadcast %cst_93 : f32 to vector<8x128xf32>
    %252 = arith.mulf %251, %250 : vector<8x128xf32>
    %253 = math.tanh %252 : vector<8x128xf32>
    %cst_94 = arith.constant 5.000000e-01 : f32
    %254 = vector.broadcast %cst_94 : f32 to vector<8x128xf32>
    %255 = arith.mulf %254, %253 : vector<8x128xf32>
    %cst_95 = arith.constant 5.000000e-01 : f32
    %256 = vector.broadcast %cst_95 : f32 to vector<8x128xf32>
    %257 = arith.addf %255, %256 : vector<8x128xf32>
    %258 = vector.extract_strided_slice %241 {offsets = [0, 256], sizes = [8, 128], strides = [1, 1]} : vector<8x512xf32> to vector<8x128xf32>
    %259 = math.tanh %258 : vector<8x128xf32>
    %260 = vector.extract_strided_slice %241 {offsets = [0, 384], sizes = [8, 128], strides = [1, 1]} : vector<8x512xf32> to vector<8x128xf32>
    %cst_96 = arith.constant 5.000000e-01 : f32
    %261 = vector.broadcast %cst_96 : f32 to vector<8x128xf32>
    %262 = arith.mulf %261, %260 : vector<8x128xf32>
    %263 = math.tanh %262 : vector<8x128xf32>
    %cst_97 = arith.constant 5.000000e-01 : f32
    %264 = vector.broadcast %cst_97 : f32 to vector<8x128xf32>
    %265 = arith.mulf %264, %263 : vector<8x128xf32>
    %cst_98 = arith.constant 5.000000e-01 : f32
    %266 = vector.broadcast %cst_98 : f32 to vector<8x128xf32>
    %267 = arith.addf %265, %266 : vector<8x128xf32>
    %268 = arith.mulf %257, %233 : vector<8x128xf32>
    %269 = arith.mulf %249, %259 : vector<8x128xf32>
    %270 = arith.addf %268, %269 : vector<8x128xf32>
    %271 = math.tanh %270 : vector<8x128xf32>
    %272 = arith.mulf %267, %271 : vector<8x128xf32>
    %c7_i32 = arith.constant 7 : i32
    %c8_i32_99 = arith.constant 8 : i32
    %273 = arith.muli %c7_i32, %c8_i32_99 : i32
    %274 = tpu.assume_multiple %273, 8 : i32
    %275 = arith.index_cast %274 : i32 to index
    %c0_100 = arith.constant 0 : index
    %276 = vector.load %arg11[%275, %c0_100] : memref<80x512xf32, #tpu.memory_space<vmem>>, vector<8x512xf32>
    %cst_101 = arith.constant dense<0.000000e+00> : vector<8x512xf32>
    %277 = tpu.matmul %272, %11, %cst_101 {dimension_numbers = #tpu.dot_dimension_numbers<[1], [0], [0], [1], [0, 0, 1, 1], [], []>} : vector<8x128xf32>, vector<128x512xf32>, vector<8x512xf32> -> vector<8x512xf32>
    %278 = arith.addf %276, %277 : vector<8x512xf32>
    %279 = vector.extract_strided_slice %278 {offsets = [0, 0], sizes = [8, 128], strides = [1, 1]} : vector<8x512xf32> to vector<8x128xf32>
    %cst_102 = arith.constant 5.000000e-01 : f32
    %280 = vector.broadcast %cst_102 : f32 to vector<8x128xf32>
    %281 = arith.mulf %280, %279 : vector<8x128xf32>
    %282 = math.tanh %281 : vector<8x128xf32>
    %cst_103 = arith.constant 5.000000e-01 : f32
    %283 = vector.broadcast %cst_103 : f32 to vector<8x128xf32>
    %284 = arith.mulf %283, %282 : vector<8x128xf32>
    %cst_104 = arith.constant 5.000000e-01 : f32
    %285 = vector.broadcast %cst_104 : f32 to vector<8x128xf32>
    %286 = arith.addf %284, %285 : vector<8x128xf32>
    %287 = vector.extract_strided_slice %278 {offsets = [0, 128], sizes = [8, 128], strides = [1, 1]} : vector<8x512xf32> to vector<8x128xf32>
    %cst_105 = arith.constant 5.000000e-01 : f32
    %288 = vector.broadcast %cst_105 : f32 to vector<8x128xf32>
    %289 = arith.mulf %288, %287 : vector<8x128xf32>
    %290 = math.tanh %289 : vector<8x128xf32>
    %cst_106 = arith.constant 5.000000e-01 : f32
    %291 = vector.broadcast %cst_106 : f32 to vector<8x128xf32>
    %292 = arith.mulf %291, %290 : vector<8x128xf32>
    %cst_107 = arith.constant 5.000000e-01 : f32
    %293 = vector.broadcast %cst_107 : f32 to vector<8x128xf32>
    %294 = arith.addf %292, %293 : vector<8x128xf32>
    %295 = vector.extract_strided_slice %278 {offsets = [0, 256], sizes = [8, 128], strides = [1, 1]} : vector<8x512xf32> to vector<8x128xf32>
    %296 = math.tanh %295 : vector<8x128xf32>
    %297 = vector.extract_strided_slice %278 {offsets = [0, 384], sizes = [8, 128], strides = [1, 1]} : vector<8x512xf32> to vector<8x128xf32>
    %cst_108 = arith.constant 5.000000e-01 : f32
    %298 = vector.broadcast %cst_108 : f32 to vector<8x128xf32>
    %299 = arith.mulf %298, %297 : vector<8x128xf32>
    %300 = math.tanh %299 : vector<8x128xf32>
    %cst_109 = arith.constant 5.000000e-01 : f32
    %301 = vector.broadcast %cst_109 : f32 to vector<8x128xf32>
    %302 = arith.mulf %301, %300 : vector<8x128xf32>
    %cst_110 = arith.constant 5.000000e-01 : f32
    %303 = vector.broadcast %cst_110 : f32 to vector<8x128xf32>
    %304 = arith.addf %302, %303 : vector<8x128xf32>
    %305 = arith.mulf %294, %270 : vector<8x128xf32>
    %306 = arith.mulf %286, %296 : vector<8x128xf32>
    %307 = arith.addf %305, %306 : vector<8x128xf32>
    %308 = math.tanh %307 : vector<8x128xf32>
    %309 = arith.mulf %304, %308 : vector<8x128xf32>
    %c8_i32_111 = arith.constant 8 : i32
    %c8_i32_112 = arith.constant 8 : i32
    %310 = arith.muli %c8_i32_111, %c8_i32_112 : i32
    %311 = tpu.assume_multiple %310, 8 : i32
    %312 = arith.index_cast %311 : i32 to index
    %c0_113 = arith.constant 0 : index
    %313 = vector.load %arg11[%312, %c0_113] : memref<80x512xf32, #tpu.memory_space<vmem>>, vector<8x512xf32>
    %cst_114 = arith.constant dense<0.000000e+00> : vector<8x512xf32>
    %314 = tpu.matmul %309, %11, %cst_114 {dimension_numbers = #tpu.dot_dimension_numbers<[1], [0], [0], [1], [0, 0, 1, 1], [], []>} : vector<8x128xf32>, vector<128x512xf32>, vector<8x512xf32> -> vector<8x512xf32>
    %315 = arith.addf %313, %314 : vector<8x512xf32>
    %316 = vector.extract_strided_slice %315 {offsets = [0, 0], sizes = [8, 128], strides = [1, 1]} : vector<8x512xf32> to vector<8x128xf32>
    %cst_115 = arith.constant 5.000000e-01 : f32
    %317 = vector.broadcast %cst_115 : f32 to vector<8x128xf32>
    %318 = arith.mulf %317, %316 : vector<8x128xf32>
    %319 = math.tanh %318 : vector<8x128xf32>
    %cst_116 = arith.constant 5.000000e-01 : f32
    %320 = vector.broadcast %cst_116 : f32 to vector<8x128xf32>
    %321 = arith.mulf %320, %319 : vector<8x128xf32>
    %cst_117 = arith.constant 5.000000e-01 : f32
    %322 = vector.broadcast %cst_117 : f32 to vector<8x128xf32>
    %323 = arith.addf %321, %322 : vector<8x128xf32>
    %324 = vector.extract_strided_slice %315 {offsets = [0, 128], sizes = [8, 128], strides = [1, 1]} : vector<8x512xf32> to vector<8x128xf32>
    %cst_118 = arith.constant 5.000000e-01 : f32
    %325 = vector.broadcast %cst_118 : f32 to vector<8x128xf32>
    %326 = arith.mulf %325, %324 : vector<8x128xf32>
    %327 = math.tanh %326 : vector<8x128xf32>
    %cst_119 = arith.constant 5.000000e-01 : f32
    %328 = vector.broadcast %cst_119 : f32 to vector<8x128xf32>
    %329 = arith.mulf %328, %327 : vector<8x128xf32>
    %cst_120 = arith.constant 5.000000e-01 : f32
    %330 = vector.broadcast %cst_120 : f32 to vector<8x128xf32>
    %331 = arith.addf %329, %330 : vector<8x128xf32>
    %332 = vector.extract_strided_slice %315 {offsets = [0, 256], sizes = [8, 128], strides = [1, 1]} : vector<8x512xf32> to vector<8x128xf32>
    %333 = math.tanh %332 : vector<8x128xf32>
    %334 = vector.extract_strided_slice %315 {offsets = [0, 384], sizes = [8, 128], strides = [1, 1]} : vector<8x512xf32> to vector<8x128xf32>
    %cst_121 = arith.constant 5.000000e-01 : f32
    %335 = vector.broadcast %cst_121 : f32 to vector<8x128xf32>
    %336 = arith.mulf %335, %334 : vector<8x128xf32>
    %337 = math.tanh %336 : vector<8x128xf32>
    %cst_122 = arith.constant 5.000000e-01 : f32
    %338 = vector.broadcast %cst_122 : f32 to vector<8x128xf32>
    %339 = arith.mulf %338, %337 : vector<8x128xf32>
    %cst_123 = arith.constant 5.000000e-01 : f32
    %340 = vector.broadcast %cst_123 : f32 to vector<8x128xf32>
    %341 = arith.addf %339, %340 : vector<8x128xf32>
    %342 = arith.mulf %331, %307 : vector<8x128xf32>
    %343 = arith.mulf %323, %333 : vector<8x128xf32>
    %344 = arith.addf %342, %343 : vector<8x128xf32>
    %345 = math.tanh %344 : vector<8x128xf32>
    %346 = arith.mulf %341, %345 : vector<8x128xf32>
    %c9_i32 = arith.constant 9 : i32
    %c8_i32_124 = arith.constant 8 : i32
    %347 = arith.muli %c9_i32, %c8_i32_124 : i32
    %348 = tpu.assume_multiple %347, 8 : i32
    %349 = arith.index_cast %348 : i32 to index
    %c0_125 = arith.constant 0 : index
    %350 = vector.load %arg11[%349, %c0_125] : memref<80x512xf32, #tpu.memory_space<vmem>>, vector<8x512xf32>
    %cst_126 = arith.constant dense<0.000000e+00> : vector<8x512xf32>
    %351 = tpu.matmul %346, %11, %cst_126 {dimension_numbers = #tpu.dot_dimension_numbers<[1], [0], [0], [1], [0, 0, 1, 1], [], []>} : vector<8x128xf32>, vector<128x512xf32>, vector<8x512xf32> -> vector<8x512xf32>
    %352 = arith.addf %350, %351 : vector<8x512xf32>
    %353 = vector.extract_strided_slice %352 {offsets = [0, 0], sizes = [8, 128], strides = [1, 1]} : vector<8x512xf32> to vector<8x128xf32>
    %cst_127 = arith.constant 5.000000e-01 : f32
    %354 = vector.broadcast %cst_127 : f32 to vector<8x128xf32>
    %355 = arith.mulf %354, %353 : vector<8x128xf32>
    %356 = math.tanh %355 : vector<8x128xf32>
    %cst_128 = arith.constant 5.000000e-01 : f32
    %357 = vector.broadcast %cst_128 : f32 to vector<8x128xf32>
    %358 = arith.mulf %357, %356 : vector<8x128xf32>
    %cst_129 = arith.constant 5.000000e-01 : f32
    %359 = vector.broadcast %cst_129 : f32 to vector<8x128xf32>
    %360 = arith.addf %358, %359 : vector<8x128xf32>
    %361 = vector.extract_strided_slice %352 {offsets = [0, 128], sizes = [8, 128], strides = [1, 1]} : vector<8x512xf32> to vector<8x128xf32>
    %cst_130 = arith.constant 5.000000e-01 : f32
    %362 = vector.broadcast %cst_130 : f32 to vector<8x128xf32>
    %363 = arith.mulf %362, %361 : vector<8x128xf32>
    %364 = math.tanh %363 : vector<8x128xf32>
    %cst_131 = arith.constant 5.000000e-01 : f32
    %365 = vector.broadcast %cst_131 : f32 to vector<8x128xf32>
    %366 = arith.mulf %365, %364 : vector<8x128xf32>
    %cst_132 = arith.constant 5.000000e-01 : f32
    %367 = vector.broadcast %cst_132 : f32 to vector<8x128xf32>
    %368 = arith.addf %366, %367 : vector<8x128xf32>
    %369 = vector.extract_strided_slice %352 {offsets = [0, 256], sizes = [8, 128], strides = [1, 1]} : vector<8x512xf32> to vector<8x128xf32>
    %370 = math.tanh %369 : vector<8x128xf32>
    %371 = vector.extract_strided_slice %352 {offsets = [0, 384], sizes = [8, 128], strides = [1, 1]} : vector<8x512xf32> to vector<8x128xf32>
    %cst_133 = arith.constant 5.000000e-01 : f32
    %372 = vector.broadcast %cst_133 : f32 to vector<8x128xf32>
    %373 = arith.mulf %372, %371 : vector<8x128xf32>
    %374 = math.tanh %373 : vector<8x128xf32>
    %cst_134 = arith.constant 5.000000e-01 : f32
    %375 = vector.broadcast %cst_134 : f32 to vector<8x128xf32>
    %376 = arith.mulf %375, %374 : vector<8x128xf32>
    %cst_135 = arith.constant 5.000000e-01 : f32
    %377 = vector.broadcast %cst_135 : f32 to vector<8x128xf32>
    %378 = arith.addf %376, %377 : vector<8x128xf32>
    %379 = arith.mulf %368, %344 : vector<8x128xf32>
    %380 = arith.mulf %360, %370 : vector<8x128xf32>
    %381 = arith.addf %379, %380 : vector<8x128xf32>
    %382 = math.tanh %381 : vector<8x128xf32>
    %383 = arith.mulf %378, %382 : vector<8x128xf32>
    %c10_i32 = arith.constant 10 : i32
    %c0_136 = arith.constant 0 : index
    %c0_137 = arith.constant 0 : index
    %384 = vector.load %arg12[%c0_136, %c0_137] : memref<8x128xf32, #tpu.memory_space<vmem>>, vector<8x128xf32>
    tpu.vector_store %arg12[%c0_136, %c0_137], %383 {strides = array<i32>} : memref<8x128xf32, #tpu.memory_space<vmem>>, vector<8x128xf32>,
    %c0_138 = arith.constant 0 : index
    %c0_139 = arith.constant 0 : index
    %385 = vector.load %arg13[%c0_138, %c0_139] : memref<8x128xf32, #tpu.memory_space<vmem>>, vector<8x128xf32>
    tpu.vector_store %arg13[%c0_138, %c0_139], %381 {strides = array<i32>} : memref<8x128xf32, #tpu.memory_space<vmem>>, vector<8x128xf32>,
    %c0_i32_140 = arith.constant 0 : i32
    %386 = arith.cmpi eq, %arg1, %c0_i32_140 : i32
    %387 = arith.extui %386 : i1 to i32
    %c0_i32_141 = arith.constant 0 : i32
    %388 = arith.cmpi ne, %387, %c0_i32_141 : i32
    scf.if %388 {
      %c0_142 = arith.constant 0 : index
      %c0_143 = arith.constant 0 : index
      %389 = vector.load %arg6[%c0_142, %c0_143] : memref<128x128xf32, #tpu.memory_space<vmem>>, vector<128x128xf32>
      %cst_144 = arith.constant dense<0.000000e+00> : vector<8x128xf32>
      %390 = tpu.matmul %383, %389, %cst_144 {dimension_numbers = #tpu.dot_dimension_numbers<[1], [0], [0], [1], [0, 0, 1, 1], [], []>} : vector<8x128xf32>, vector<128x128xf32>, vector<8x128xf32> -> vector<8x128xf32>
      %c0_145 = arith.constant 0 : index
      %c0_146 = arith.constant 0 : index
      %391 = vector.load %arg7[%c0_145, %c0_146] : memref<1x128xf32, #tpu.memory_space<vmem>>, vector<1x128xf32>
      %392 = vector.broadcast %391 : vector<1x128xf32> to vector<8x128xf32>
      %393 = arith.addf %390, %392 : vector<8x128xf32>
      %cst_147 = arith.constant 0.000000e+00 : f32
      %394 = vector.broadcast %cst_147 : f32 to vector<8x128xf32>
      %395 = arith.maximumf %393, %394 : vector<8x128xf32>
      %c0_148 = arith.constant 0 : index
      %c0_149 = arith.constant 0 : index
      %396 = vector.load %arg8[%c0_148, %c0_149] : memref<128x128xf32, #tpu.memory_space<vmem>>, vector<128x128xf32>
      %cst_150 = arith.constant dense<0.000000e+00> : vector<8x128xf32>
      %397 = tpu.matmul %395, %396, %cst_150 {dimension_numbers = #tpu.dot_dimension_numbers<[1], [0], [0], [1], [0, 0, 1, 1], [], []>} : vector<8x128xf32>, vector<128x128xf32>, vector<8x128xf32> -> vector<8x128xf32>
      %c0_151 = arith.constant 0 : index
      %c0_152 = arith.constant 0 : index
      %398 = vector.load %arg9[%c0_151, %c0_152] : memref<1x128xf32, #tpu.memory_space<vmem>>, vector<1x128xf32>
      %399 = vector.broadcast %398 : vector<1x128xf32> to vector<8x128xf32>
      %400 = arith.addf %397, %399 : vector<8x128xf32>
      %c0_153 = arith.constant 0 : index
      %c0_154 = arith.constant 0 : index
      %401 = vector.load %arg10[%c0_153, %c0_154] : memref<8x128xf32, #tpu.memory_space<vmem>>, vector<8x128xf32>
      tpu.vector_store %arg10[%c0_153, %c0_154], %400 {strides = array<i32>} : memref<8x128xf32, #tpu.memory_space<vmem>>, vector<8x128xf32>,
    } else {
    }
    return
  }
  func.func @transform_0(%arg0: i32, %arg1: i32) -> (i32, i32, i32) {
    %c0_i32 = arith.constant 0 : i32
    %c0_i32_0 = arith.constant 0 : i32
    return %arg1, %arg0, %c0_i32 : i32, i32, i32
  }
  func.func @transform_1(%arg0: i32, %arg1: i32) -> (i32, i32) {
    %c0_i32 = arith.constant 0 : i32
    %c0_i32_0 = arith.constant 0 : i32
    %c0_i32_1 = arith.constant 0 : i32
    return %c0_i32, %c0_i32_0 : i32, i32
  }
  func.func @transform_2(%arg0: i32, %arg1: i32) -> (i32, i32) {
    %c0_i32 = arith.constant 0 : i32
    %c0_i32_0 = arith.constant 0 : i32
    %c0_i32_1 = arith.constant 0 : i32
    return %c0_i32, %c0_i32_0 : i32, i32
  }
  func.func @transform_3(%arg0: i32, %arg1: i32) -> (i32, i32) {
    %c0_i32 = arith.constant 0 : i32
    %c0_i32_0 = arith.constant 0 : i32
    %c0_i32_1 = arith.constant 0 : i32
    return %c0_i32, %c0_i32_0 : i32, i32
  }
  func.func @transform_4(%arg0: i32, %arg1: i32) -> (i32, i32) {
    %c0_i32 = arith.constant 0 : i32
    %c0_i32_0 = arith.constant 0 : i32
    %c0_i32_1 = arith.constant 0 : i32
    return %c0_i32, %c0_i32_0 : i32, i32
  }
  func.func @transform_5(%arg0: i32, %arg1: i32) -> (i32, i32) {
    %c0_i32 = arith.constant 0 : i32
    %c0_i32_0 = arith.constant 0 : i32
    %c0_i32_1 = arith.constant 0 : i32
    return %c0_i32, %c0_i32_0 : i32, i32
  }
  func.func @transform_6(%arg0: i32, %arg1: i32) -> (i32, i32) {
    %c0_i32 = arith.constant 0 : i32
    %c0_i32_0 = arith.constant 0 : i32
    %c0_i32_1 = arith.constant 0 : i32
    return %c0_i32, %c0_i32_0 : i32, i32
  }
  func.func @transform_7(%arg0: i32, %arg1: i32) -> (i32, i32) {
    %c0_i32 = arith.constant 0 : i32
    %c0_i32_0 = arith.constant 0 : i32
    %c0_i32_1 = arith.constant 0 : i32
    return %c0_i32, %c0_i32_0 : i32, i32
  }
  func.func @transform_8(%arg0: i32, %arg1: i32) -> (i32, i32) {
    %c0_i32 = arith.constant 0 : i32
    %c0_i32_0 = arith.constant 0 : i32
    return %arg0, %c0_i32 : i32, i32
  }
}

</mosaic_0001>

<llo_original>
// kernel: ganslstm_core_forward.1
$region0: #{ganslstm_core_forward.1}
  #allocation0 [shape = 'u32[]', space=smem, size = 0x4, offset = 0x4, fixed_abs, tag = 'smem constant byte address 0x4 - core index']
  #allocation1 [shape = 'u32[144,128]{1,0:T(1,128)}', space=vmem, size = 0x12000, scoped, tag = 'internal scratch']
  #allocation2 [shape = 'f32[80,512]{1,0:T(8,128)}', space=vmem, size = 0x28000, scoped, tag = 'scratch operand']
  #allocation3 [shape = 'f32[8,128]{1,0:T(8,128)}', space=vmem, size = 0x1000, scoped, tag = 'scratch operand']
  #allocation4 [shape = 'f32[8,128]{1,0:T(8,128)}', space=vmem, size = 0x1000, scoped, tag = 'scratch operand']
  %s0 = inlined_call_operand.vmem [shape: f32[10,8,64], index: 0, kind: input, shape index: {}]
  %s1 = inlined_call_operand.vmem [shape: f32[64,512], index: 1, kind: input, shape index: {}]
  %s2 = inlined_call_operand.vmem [shape: f32[128,512], index: 2, kind: input, shape index: {}]
  %s3 = inlined_call_operand.vmem [shape: f32[1,512], index: 3, kind: input, shape index: {}]
  %s4 = inlined_call_operand.vmem [shape: f32[128,128], index: 4, kind: input, shape index: {}]
  %s5 = inlined_call_operand.vmem [shape: f32[1,128], index: 5, kind: input, shape index: {}]
  %s6 = inlined_call_operand.vmem [shape: f32[128,128], index: 6, kind: input, shape index: {}]
  %s7 = inlined_call_operand.vmem [shape: f32[1,128], index: 7, kind: input, shape index: {}]
  %s8 = inlined_call_operand.vmem [shape: f32[8,128], index: 8, kind: output, shape index: {}]
  %s9 = sld [smem:[#allocation0]]
  $region50: #{ganslstm_core_forward.1} parent=0
    _
  %s11 = ssub.s32 1, %s9
  %s12 = scalar_select 0, %s11, %s9
  // Predicated region
  $region2: #{ganslstm_core_forward.1} parent=0 // pred_check
    _
  $region3: #{ganslstm_core_forward.1} parent=0 // pred_check_branch
    %14 = sbr.rel (0) target = $region5
  $region4: #{ganslstm_core_forward.1} parent=0 // pred_region
    _
  $region5: #{ganslstm_core_forward.1} parent=0 // pred_fallthru
    _
  // Predicated region
  $region6: #{ganslstm_core_forward.1} parent=0 // pred_check
    _
  $region7: #{ganslstm_core_forward.1} parent=0 // pred_check_branch
    %16 = sbr.rel (0) target = $region9
  $region8: #{ganslstm_core_forward.1} parent=0 // pred_region
    _
  $region9: #{ganslstm_core_forward.1} parent=0 // pred_fallthru
    _
  // Predicated region
  $region10: #{ganslstm_core_forward.1} parent=0 // pred_check
    _
  $region11: #{ganslstm_core_forward.1} parent=0 // pred_check_branch
    %18 = sbr.rel (0) target = $region13
  $region12: #{ganslstm_core_forward.1} parent=0 // pred_region
    _
  $region13: #{ganslstm_core_forward.1} parent=0 // pred_fallthru
    _
  // Predicated region
  $region14: #{ganslstm_core_forward.1} parent=0 // pred_check
    _
  $region15: #{ganslstm_core_forward.1} parent=0 // pred_check_branch
    %20 = sbr.rel (0) target = $region17
  $region16: #{ganslstm_core_forward.1} parent=0 // pred_region
    _
  $region17: #{ganslstm_core_forward.1} parent=0 // pred_fallthru
    _
  // Predicated region
  $region18: #{ganslstm_core_forward.1} parent=0 // pred_check
    _
  $region19: #{ganslstm_core_forward.1} parent=0 // pred_check_branch
    %22 = sbr.rel (0) target = $region21
  $region20: #{ganslstm_core_forward.1} parent=0 // pred_region
    _
  $region21: #{ganslstm_core_forward.1} parent=0 // pred_fallthru
    _
  // Predicated region
  $region22: #{ganslstm_core_forward.1} parent=0 // pred_check
    _
  $region23: #{ganslstm_core_forward.1} parent=0 // pred_check_branch
    %24 = sbr.rel (0) target = $region25
  $region24: #{ganslstm_core_forward.1} parent=0 // pred_region
    _
  $region25: #{ganslstm_core_forward.1} parent=0 // pred_fallthru
    _
  // Predicated region
  $region26: #{ganslstm_core_forward.1} parent=0 // pred_check
    _
  $region27: #{ganslstm_core_forward.1} parent=0 // pred_check_branch
    %26 = sbr.rel (0) target = $region29
  $region28: #{ganslstm_core_forward.1} parent=0 // pred_region
    _
  $region29: #{ganslstm_core_forward.1} parent=0 // pred_fallthru
    _
  // Predicated region
  $region30: #{ganslstm_core_forward.1} parent=0 // pred_check
    _
  $region31: #{ganslstm_core_forward.1} parent=0 // pred_check_branch
    %28 = sbr.rel (0) target = $region33
  $region32: #{ganslstm_core_forward.1} parent=0 // pred_region
    _
  $region33: #{ganslstm_core_forward.1} parent=0 // pred_fallthru
    _
  %p29 = scmp.eq.s32.totalorder 0, 0
  // Predicated region
  $region34: #{ganslstm_core_forward.1} parent=0 // pred_check
    %p30 = pneg %p29
  $region35: #{ganslstm_core_forward.1} parent=0 // pred_check_branch
    %32 = sbr.rel (%p30) target = $region37
  $region36: #{ganslstm_core_forward.1} parent=0 // pred_region
    %33 = vst [vmem:[#allocation3] sm:$0xff] 0.0
    %34 = vst [vmem:[#allocation4] sm:$0xff] 0.0
  $region37: #{ganslstm_core_forward.1} parent=0 // pred_fallthru
    _
  %v35 = vld [vmem:[%s0] sm:$0xff]
  %v36 = vld [vmem:[%s0 + $0x8] sm:$0xff]
  %v37 = vld [vmem:[%s0 + $0x10] sm:$0xff]
  %v38 = vld [vmem:[%s0 + $0x18] sm:$0xff]
  %v39 = vld [vmem:[%s0 + $0x20] sm:$0xff]
  %v40 = vld [vmem:[%s0 + $0x28] sm:$0xff]
  %v41 = vld [vmem:[%s0 + $0x30] sm:$0xff]
  %v42 = vld [vmem:[%s0 + $0x38] sm:$0xff]
  %v43 = vld [vmem:[%s0 + $0x40] sm:$0xff]
  %v44 = vld [vmem:[%s0 + $0x48] sm:$0xff]
  %v45 = vld [vmem:[%s1] sm:$0xff]
  %v46 = vld [vmem:[%s1 + $0x8] sm:$0xff]
  %v47 = vld [vmem:[%s1 + $0x10] sm:$0xff]
  %v48 = vld [vmem:[%s1 + $0x18] sm:$0xff]
  %v49 = vld [vmem:[%s1 + $0x20] sm:$0xff]
  %v50 = vld [vmem:[%s1 + $0x28] sm:$0xff]
  %v51 = vld [vmem:[%s1 + $0x30] sm:$0xff]
  %v52 = vld [vmem:[%s1 + $0x38] sm:$0xff]
  %v53 = vld [vmem:[%s1 + $0x40] sm:$0xff]
  %v54 = vld [vmem:[%s1 + $0x48] sm:$0xff]
  %v55 = vld [vmem:[%s1 + $0x50] sm:$0xff]
  %v56 = vld [vmem:[%s1 + $0x58] sm:$0xff]
  %v57 = vld [vmem:[%s1 + $0x60] sm:$0xff]
  %v58 = vld [vmem:[%s1 + $0x68] sm:$0xff]
  %v59 = vld [vmem:[%s1 + $0x70] sm:$0xff]
  %v60 = vld [vmem:[%s1 + $0x78] sm:$0xff]
  %v61 = vld [vmem:[%s1 + $0x80] sm:$0xff]
  %v62 = vld [vmem:[%s1 + $0x88] sm:$0xff]
  %v63 = vld [vmem:[%s1 + $0x90] sm:$0xff]
  %v64 = vld [vmem:[%s1 + $0x98] sm:$0xff]
  %v65 = vld [vmem:[%s1 + $0xa0] sm:$0xff]
  %v66 = vld [vmem:[%s1 + $0xa8] sm:$0xff]
  %v67 = vld [vmem:[%s1 + $0xb0] sm:$0xff]
  %v68 = vld [vmem:[%s1 + $0xb8] sm:$0xff]
  %v69 = vld [vmem:[%s1 + $0xc0] sm:$0xff]
  %v70 = vld [vmem:[%s1 + $0xc8] sm:$0xff]
  %v71 = vld [vmem:[%s1 + $0xd0] sm:$0xff]
  %v72 = vld [vmem:[%s1 + $0xd8] sm:$0xff]
  %v73 = vld [vmem:[%s1 + $0xe0] sm:$0xff]
  %v74 = vld [vmem:[%s1 + $0xe8] sm:$0xff]
  %v75 = vld [vmem:[%s1 + $0xf0] sm:$0xff]
  %v76 = vld [vmem:[%s1 + $0xf8] sm:$0xff]
  %v77 = vld [vmem:[%s3] sm:$0xf]
  %v79 = vlaneseq
  %v80 = vshrl.u32 %v79, 7
  %v81 = vsub.s32 0, %v80
  %v82 = vrot.slane %v77, %v81
  %v83 = vlaneseq
  %v84 = vshrl.u32 %v83, 7
  %v85 = vsub.s32 1, %v84
  %v86 = vrot.slane %v77, %v85
  %v87 = vlaneseq
  %v88 = vshrl.u32 %v87, 7
  %v89 = vsub.s32 2, %v88
  %v90 = vrot.slane %v77, %v89
  %v91 = vlaneseq
  %v92 = vshrl.u32 %v91, 7
  %v93 = vsub.s32 3, %v92
  %v94 = vrot.slane %v77, %v93
  %vm99 = vcmask 523264
  %v101 = vsel %vm99, %v35, 0
  %v104 = vsel %vm99, %v36, 0
  %v107 = vsel %vm99, %v37, 0
  %v110 = vsel %vm99, %v38, 0
  %v113 = vsel %vm99, %v39, 0
  %v116 = vsel %vm99, %v40, 0
  %v119 = vsel %vm99, %v41, 0
  %v122 = vsel %vm99, %v42, 0
  %v125 = vsel %vm99, %v43, 0
  %v128 = vsel %vm99, %v44, 0
  %130 = vmatprep.subr.mxu0 %v46
  %131 = vmatpush1.msra.mxu0 %v45
  %132 = vmatprep.subr.mxu0 %v50
  %133 = vmatpush1.msra.mxu0 %v49
  %134 = vmatprep.subr.mxu0 %v54
  %135 = vmatpush1.msra.mxu0 %v53
  %136 = vmatprep.subr.mxu0 %v58
  %137 = vmatpush1.msra.mxu0 %v57
  %138 = vmatprep.subr.mxu0 %v62
  %139 = vmatpush1.msra.mxu0 %v61
  %140 = vmatprep.subr.mxu0 %v66
  %141 = vmatpush1.msra.mxu0 %v65
  %142 = vmatprep.subr.mxu0 %v70
  %143 = vmatpush1.msra.mxu0 %v69
  %144 = vmatprep.subr.mxu0 %v74
  %145 = vmatpush1.msra.mxu0 %v73
  %146 = vmatprep.subr.mxu0 0.0
  %147 = vmatpush1.msra.mxu0 0.0
  %148 = vmatprep.subr.mxu0 0.0
  %149 = vmatpush1.msra.mxu0 0.0
  %150 = vmatprep.subr.mxu0 0.0
  %151 = vmatpush1.msra.mxu0 0.0
  %152 = vmatprep.subr.mxu0 0.0
  %153 = vmatpush1.msra.mxu0 0.0
  %154 = vmatprep.subr.mxu0 0.0
  %155 = vmatpush1.msra.mxu0 0.0
  %156 = vmatprep.subr.mxu0 0.0
  %157 = vmatpush1.msra.mxu0 0.0
  %158 = vmatprep.subr.mxu0 0.0
  %159 = vmatpush1.msra.mxu0 0.0
  %160 = vmatprep.subr.mxu0 0.0
  %161 = vmatpush1.msra.mxu0 0.0
  %162 = vmatprep.subr.mxu0 0.0
  %163 = vmatpush1.msra.mxu0 0.0
  %164 = vmatprep.subr.mxu0 0.0
  %165 = vmatpush1.msra.mxu0 0.0
  %166 = vmatprep.subr.mxu0 0.0
  %167 = vmatpush1.msra.mxu0 0.0
  %168 = vmatprep.subr.mxu0 0.0
  %169 = vmatpush1.msra.mxu0 0.0
  %170 = vmatprep.subr.mxu0 0.0
  %171 = vmatpush1.msra.mxu0 0.0
  %172 = vmatprep.subr.mxu0 0.0
  %173 = vmatpush1.msra.mxu0 0.0
  %174 = vmatprep.subr.mxu0 0.0
  %175 = vmatpush1.msra.mxu0 0.0
  %176 = vmatprep.subr.mxu0 0.0
  %177 = vmatpush1.msra.mxu0 0.0
  %178 = vmatprep.subr.mxu0 0.0
  %179 = vmatpush1.msra.mxu0 0.0
  %180 = vmatprep.subr.mxu0 0.0
  %181 = vmatpush1.msra.mxu0 0.0
  %182 = vmatprep.subr.mxu0 0.0
  %183 = vmatpush1.msra.mxu0 0.0
  %184 = vmatprep.subr.mxu0 0.0
  %185 = vmatpush1.msra.mxu0 0.0
  %186 = vmatprep.subr.mxu0 0.0
  %187 = vmatpush1.msra.mxu0 0.0
  %188 = vmatprep.subr.mxu0 0.0
  %189 = vmatpush1.msra.mxu0 0.0
  %190 = vmatprep.subr.mxu0 0.0
  %191 = vmatpush1.msra.mxu0 0.0
  %192 = vmatprep.subr.mxu0 0.0
  %193 = vmatpush1.msra.mxu0 0.0
  %194 = vmatprep.mubr.f32.mxu0 0.0
  %195 = vmatmul.mubr.f32.gmra.mrb[0].mxu0 %v101
  %v196 = vpop.f32.mrb[0].mxu0
  %v197 = vadd.f32 %v82, %v196
  %v198 = vpop.f32.mrb[0].mxu0
  %v199 = vadd.f32 %v86, %v198
  %200 = vmatprep.mubr.f32.mxu0 0.0
  %201 = vmatmul.mubr.f32.gmra.mrb[0].mxu0 %v104
  %v202 = vpop.f32.mrb[0].mxu0
  %v203 = vadd.f32 %v82, %v202
  %v204 = vpop.f32.mrb[0].mxu0
  %v205 = vadd.f32 %v86, %v204
  %206 = vmatprep.mubr.f32.mxu0 0.0
  %207 = vmatmul.mubr.f32.gmra.mrb[0].mxu0 %v107
  %v208 = vpop.f32.mrb[0].mxu0
  %v209 = vadd.f32 %v82, %v208
  %v210 = vpop.f32.mrb[0].mxu0
  %v211 = vadd.f32 %v86, %v210
  %212 = vmatprep.mubr.f32.mxu0 0.0
  %213 = vmatmul.mubr.f32.gmra.mrb[0].mxu0 %v110
  %v214 = vpop.f32.mrb[0].mxu0
  %v215 = vadd.f32 %v82, %v214
  %v216 = vpop.f32.mrb[0].mxu0
  %v217 = vadd.f32 %v86, %v216
  %218 = vmatprep.mubr.f32.mxu0 0.0
  %219 = vmatmul.mubr.f32.gmra.mrb[0].mxu0 %v113
  %v220 = vpop.f32.mrb[0].mxu0
  %v221 = vadd.f32 %v82, %v220
  %v222 = vpop.f32.mrb[0].mxu0
  %v223 = vadd.f32 %v86, %v222
  %224 = vmatprep.mubr.f32.mxu0 0.0
  %225 = vmatmul.mubr.f32.gmra.mrb[0].mxu0 %v116
  %v226 = vpop.f32.mrb[0].mxu0
  %v227 = vadd.f32 %v82, %v226
  %v228 = vpop.f32.mrb[0].mxu0
  %v229 = vadd.f32 %v86, %v228
  %230 = vmatprep.mubr.f32.mxu0 0.0
  %231 = vmatmul.mubr.f32.gmra.mrb[0].mxu0 %v119
  %v232 = vpop.f32.mrb[0].mxu0
  %v233 = vadd.f32 %v82, %v232
  %v234 = vpop.f32.mrb[0].mxu0
  %v235 = vadd.f32 %v86, %v234
  %236 = vmatprep.mubr.f32.mxu0 0.0
  %237 = vmatmul.mubr.f32.gmra.mrb[0].mxu0 %v122
  %v238 = vpop.f32.mrb[0].mxu0
  %v239 = vadd.f32 %v82, %v238
  %v240 = vpop.f32.mrb[0].mxu0
  %v241 = vadd.f32 %v86, %v240
  %242 = vmatprep.mubr.f32.mxu0 0.0
  %243 = vmatmul.mubr.f32.gmra.mrb[0].mxu0 %v125
  %v244 = vpop.f32.mrb[0].mxu0
  %v245 = vadd.f32 %v82, %v244
  %v246 = vpop.f32.mrb[0].mxu0
  %v247 = vadd.f32 %v86, %v246
  %248 = vmatprep.mubr.f32.mxu0 0.0
  %249 = vmatmul.mubr.f32.gmra.mrb[0].mxu0 %v128
  %v250 = vpop.f32.mrb[0].mxu0
  %v251 = vadd.f32 %v82, %v250
  %v252 = vpop.f32.mrb[0].mxu0
  %v253 = vadd.f32 %v86, %v252
  %254 = vdwg.mxu0
  %255 = vmatprep.subr.mxu0 %v48
  %256 = vmatpush1.msra.mxu0 %v47
  %257 = vmatprep.subr.mxu0 %v52
  %258 = vmatpush1.msra.mxu0 %v51
  %259 = vmatprep.subr.mxu0 %v56
  %260 = vmatpush1.msra.mxu0 %v55
  %261 = vmatprep.subr.mxu0 %v60
  %262 = vmatpush1.msra.mxu0 %v59
  %263 = vmatprep.subr.mxu0 %v64
  %264 = vmatpush1.msra.mxu0 %v63
  %265 = vmatprep.subr.mxu0 %v68
  %266 = vmatpush1.msra.mxu0 %v67
  %267 = vmatprep.subr.mxu0 %v72
  %268 = vmatpush1.msra.mxu0 %v71
  %269 = vmatprep.subr.mxu0 %v76
  %270 = vmatpush1.msra.mxu0 %v75
  %271 = vmatprep.subr.mxu0 0.0
  %272 = vmatpush1.msra.mxu0 0.0
  %273 = vmatprep.subr.mxu0 0.0
  %274 = vmatpush1.msra.mxu0 0.0
  %275 = vmatprep.subr.mxu0 0.0
  %276 = vmatpush1.msra.mxu0 0.0
  %277 = vmatprep.subr.mxu0 0.0
  %278 = vmatpush1.msra.mxu0 0.0
  %279 = vmatprep.subr.mxu0 0.0
  %280 = vmatpush1.msra.mxu0 0.0
  %281 = vmatprep.subr.mxu0 0.0
  %282 = vmatpush1.msra.mxu0 0.0
  %283 = vmatprep.subr.mxu0 0.0
  %284 = vmatpush1.msra.mxu0 0.0
  %285 = vmatprep.subr.mxu0 0.0
  %286 = vmatpush1.msra.mxu0 0.0
  %287 = vmatprep.subr.mxu0 0.0
  %288 = vmatpush1.msra.mxu0 0.0
  %289 = vmatprep.subr.mxu0 0.0
  %290 = vmatpush1.msra.mxu0 0.0
  %291 = vmatprep.subr.mxu0 0.0
  %292 = vmatpush1.msra.mxu0 0.0
  %293 = vmatprep.subr.mxu0 0.0
  %294 = vmatpush1.msra.mxu0 0.0
  %295 = vmatprep.subr.mxu0 0.0
  %296 = vmatpush1.msra.mxu0 0.0
  %297 = vmatprep.subr.mxu0 0.0
  %298 = vmatpush1.msra.mxu0 0.0
  %299 = vmatprep.subr.mxu0 0.0
  %300 = vmatpush1.msra.mxu0 0.0
  %301 = vmatprep.subr.mxu0 0.0
  %302 = vmatpush1.msra.mxu0 0.0
  %303 = vmatprep.subr.mxu0 0.0
  %304 = vmatpush1.msra.mxu0 0.0
  %305 = vmatprep.subr.mxu0 0.0
  %306 = vmatpush1.msra.mxu0 0.0
  %307 = vmatprep.subr.mxu0 0.0
  %308 = vmatpush1.msra.mxu0 0.0
  %309 = vmatprep.subr.mxu0 0.0
  %310 = vmatpush1.msra.mxu0 0.0
  %311 = vmatprep.subr.mxu0 0.0
  %312 = vmatpush1.msra.mxu0 0.0
  %313 = vmatprep.subr.mxu0 0.0
  %314 = vmatpush1.msra.mxu0 0.0
  %315 = vmatprep.subr.mxu0 0.0
  %316 = vmatpush1.msra.mxu0 0.0
  %317 = vmatprep.subr.mxu0 0.0
  %318 = vmatpush1.msra.mxu0 0.0
  %319 = vmatprep.mubr.f32.mxu0 0.0
  %320 = vmatmul.mubr.f32.gmra.mrb[0].mxu0 %v101
  %v321 = vpop.f32.mrb[0].mxu0
  %v322 = vadd.f32 %v90, %v321
  %v323 = vpop.f32.mrb[0].mxu0
  %v324 = vadd.f32 %v94, %v323
  %325 = vmatprep.mubr.f32.mxu0 0.0
  %326 = vmatmul.mubr.f32.gmra.mrb[0].mxu0 %v104
  %v327 = vpop.f32.mrb[0].mxu0
  %v328 = vadd.f32 %v90, %v327
  %v329 = vpop.f32.mrb[0].mxu0
  %v330 = vadd.f32 %v94, %v329
  %331 = vmatprep.mubr.f32.mxu0 0.0
  %332 = vmatmul.mubr.f32.gmra.mrb[0].mxu0 %v107
  %v333 = vpop.f32.mrb[0].mxu0
  %v334 = vadd.f32 %v90, %v333
  %v335 = vpop.f32.mrb[0].mxu0
  %v336 = vadd.f32 %v94, %v335
  %337 = vmatprep.mubr.f32.mxu0 0.0
  %338 = vmatmul.mubr.f32.gmra.mrb[0].mxu0 %v110
  %v339 = vpop.f32.mrb[0].mxu0
  %v340 = vadd.f32 %v90, %v339
  %v341 = vpop.f32.mrb[0].mxu0
  %v342 = vadd.f32 %v94, %v341
  %343 = vmatprep.mubr.f32.mxu0 0.0
  %344 = vmatmul.mubr.f32.gmra.mrb[0].mxu0 %v113
  %v345 = vpop.f32.mrb[0].mxu0
  %v346 = vadd.f32 %v90, %v345
  %v347 = vpop.f32.mrb[0].mxu0
  %v348 = vadd.f32 %v94, %v347
  %349 = vmatprep.mubr.f32.mxu0 0.0
  %350 = vmatmul.mubr.f32.gmra.mrb[0].mxu0 %v116
  %v351 = vpop.f32.mrb[0].mxu0
  %v352 = vadd.f32 %v90, %v351
  %v353 = vpop.f32.mrb[0].mxu0
  %v354 = vadd.f32 %v94, %v353
  %355 = vmatprep.mubr.f32.mxu0 0.0
  %356 = vmatmul.mubr.f32.gmra.mrb[0].mxu0 %v119
  %v357 = vpop.f32.mrb[0].mxu0
  %v358 = vadd.f32 %v90, %v357
  %v359 = vpop.f32.mrb[0].mxu0
  %v360 = vadd.f32 %v94, %v359
  %361 = vmatprep.mubr.f32.mxu0 0.0
  %362 = vmatmul.mubr.f32.gmra.mrb[0].mxu0 %v122
  %v363 = vpop.f32.mrb[0].mxu0
  %v364 = vadd.f32 %v90, %v363
  %v365 = vpop.f32.mrb[0].mxu0
  %v366 = vadd.f32 %v94, %v365
  %367 = vmatprep.mubr.f32.mxu0 0.0
  %368 = vmatmul.mubr.f32.gmra.mrb[0].mxu0 %v125
  %v369 = vpop.f32.mrb[0].mxu0
  %v370 = vadd.f32 %v90, %v369
  %v371 = vpop.f32.mrb[0].mxu0
  %v372 = vadd.f32 %v94, %v371
  %373 = vmatprep.mubr.f32.mxu0 0.0
  %374 = vmatmul.mubr.f32.gmra.mrb[0].mxu0 %v128
  %v375 = vpop.f32.mrb[0].mxu0
  %v376 = vadd.f32 %v90, %v375
  %v377 = vpop.f32.mrb[0].mxu0
  %v378 = vadd.f32 %v94, %v377
  %379 = vdwg.mxu0
  %380 = vst [vmem:[#allocation2] sm:$0xff] %v197
  %381 = vst [vmem:[#allocation2 + $0x8] sm:$0xff] %v199
  %382 = vst [vmem:[#allocation2 + $0x10] sm:$0xff] %v322
  %383 = vst [vmem:[#allocation2 + $0x18] sm:$0xff] %v324
  %384 = vst [vmem:[#allocation2 + $0x20] sm:$0xff] %v203
  %385 = vst [vmem:[#allocation2 + $0x28] sm:$0xff] %v205
  %386 = vst [vmem:[#allocation2 + $0x30] sm:$0xff] %v328
  %387 = vst [vmem:[#allocation2 + $0x38] sm:$0xff] %v330
  %388 = vst [vmem:[#allocation2 + $0x40] sm:$0xff] %v209
  %389 = vst [vmem:[#allocation2 + $0x48] sm:$0xff] %v211
  %390 = vst [vmem:[#allocation2 + $0x50] sm:$0xff] %v334
  %391 = vst [vmem:[#allocation2 + $0x58] sm:$0xff] %v336
  %392 = vst [vmem:[#allocation2 + $0x60] sm:$0xff] %v215
  %393 = vst [vmem:[#allocation2 + $0x68] sm:$0xff] %v217
  %394 = vst [vmem:[#allocation2 + $0x70] sm:$0xff] %v340
  %395 = vst [vmem:[#allocation2 + $0x78] sm:$0xff] %v342
  %396 = vst [vmem:[#allocation2 + $0x80] sm:$0xff] %v221
  %397 = vst [vmem:[#allocation2 + $0x88] sm:$0xff] %v223
  %398 = vst [vmem:[#allocation2 + $0x90] sm:$0xff] %v346
  %399 = vst [vmem:[#allocation2 + $0x98] sm:$0xff] %v348
  %400 = vst [vmem:[#allocation2 + $0xa0] sm:$0xff] %v227
  %401 = vst [vmem:[#allocation2 + $0xa8] sm:$0xff] %v229
  %402 = vst [vmem:[#allocation2 + $0xb0] sm:$0xff] %v352
  %403 = vst [vmem:[#allocation2 + $0xb8] sm:$0xff] %v354
  %404 = vst [vmem:[#allocation2 + $0xc0] sm:$0xff] %v233
  %405 = vst [vmem:[#allocation2 + $0xc8] sm:$0xff] %v235
  %406 = vst [vmem:[#allocation2 + $0xd0] sm:$0xff] %v358
  %407 = vst [vmem:[#allocation2 + $0xd8] sm:$0xff] %v360
  %408 = vst [vmem:[#allocation2 + $0xe0] sm:$0xff] %v239
  %409 = vst [vmem:[#allocation2 + $0xe8] sm:$0xff] %v241
  %410 = vst [vmem:[#allocation2 + $0xf0] sm:$0xff] %v364
  %411 = vst [vmem:[#allocation2 + $0xf8] sm:$0xff] %v366
  %412 = vst [vmem:[#allocation2 + $0x100] sm:$0xff] %v245
  %413 = vst [vmem:[#allocation2 + $0x108] sm:$0xff] %v247
  %414 = vst [vmem:[#allocation2 + $0x110] sm:$0xff] %v370
  %415 = vst [vmem:[#allocation2 + $0x118] sm:$0xff] %v372
  %416 = vst [vmem:[#allocation2 + $0x120] sm:$0xff] %v251
  %417 = vst [vmem:[#allocation2 + $0x128] sm:$0xff] %v253
  %418 = vst [vmem:[#allocation2 + $0x130] sm:$0xff] %v376
  %419 = vst [vmem:[#allocation2 + $0x138] sm:$0xff] %v378
  %v420 = vld [vmem:[%s2] sm:$0xff]
  %v421 = vld [vmem:[%s2 + $0x8] sm:$0xff]
  %v422 = vld [vmem:[%s2 + $0x10] sm:$0xff]
  %v423 = vld [vmem:[%s2 + $0x18] sm:$0xff]
  %v424 = vld [vmem:[%s2 + $0x20] sm:$0xff]
  %v425 = vld [vmem:[%s2 + $0x28] sm:$0xff]
  %v426 = vld [vmem:[%s2 + $0x30] sm:$0xff]
  %v427 = vld [vmem:[%s2 + $0x38] sm:$0xff]
  %v428 = vld [vmem:[%s2 + $0x40] sm:$0xff]
  %v429 = vld [vmem:[%s2 + $0x48] sm:$0xff]
  %v430 = vld [vmem:[%s2 + $0x50] sm:$0xff]
  %v431 = vld [vmem:[%s2 + $0x58] sm:$0xff]
  %v432 = vld [vmem:[%s2 + $0x60] sm:$0xff]
  %v433 = vld [vmem:[%s2 + $0x68] sm:$0xff]
  %v434 = vld [vmem:[%s2 + $0x70] sm:$0xff]
  %v435 = vld [vmem:[%s2 + $0x78] sm:$0xff]
  %v436 = vld [vmem:[%s2 + $0x80] sm:$0xff]
  %v437 = vld [vmem:[%s2 + $0x88] sm:$0xff]
  %v438 = vld [vmem:[%s2 + $0x90] sm:$0xff]
  %v439 = vld [vmem:[%s2 + $0x98] sm:$0xff]
  %v440 = vld [vmem:[%s2 + $0xa0] sm:$0xff]
  %v441 = vld [vmem:[%s2 + $0xa8] sm:$0xff]
  %v442 = vld [vmem:[%s2 + $0xb0] sm:$0xff]
  %v443 = vld [vmem:[%s2 + $0xb8] sm:$0xff]
  %v444 = vld [vmem:[%s2 + $0xc0] sm:$0xff]
  %v445 = vld [vmem:[%s2 + $0xc8] sm:$0xff]
  %v446 = vld [vmem:[%s2 + $0xd0] sm:$0xff]
  %v447 = vld [vmem:[%s2 + $0xd8] sm:$0xff]
  %v448 = vld [vmem:[%s2 + $0xe0] sm:$0xff]
  %v449 = vld [vmem:[%s2 + $0xe8] sm:$0xff]
  %v450 = vld [vmem:[%s2 + $0xf0] sm:$0xff]
  %v451 = vld [vmem:[%s2 + $0xf8] sm:$0xff]
  %v452 = vld [vmem:[%s2 + $0x100] sm:$0xff]
  %v453 = vld [vmem:[%s2 + $0x108] sm:$0xff]
  %v454 = vld [vmem:[%s2 + $0x110] sm:$0xff]
  %v455 = vld [vmem:[%s2 + $0x118] sm:$0xff]
  %v456 = vld [vmem:[%s2 + $0x120] sm:$0xff]
  %v457 = vld [vmem:[%s2 + $0x128] sm:$0xff]
  %v458 = vld [vmem:[%s2 + $0x130] sm:$0xff]
  %v459 = vld [vmem:[%s2 + $0x138] sm:$0xff]
  %v460 = vld [vmem:[%s2 + $0x140] sm:$0xff]
  %v461 = vld [vmem:[%s2 + $0x148] sm:$0xff]
  %v462 = vld [vmem:[%s2 + $0x150] sm:$0xff]
  %v463 = vld [vmem:[%s2 + $0x158] sm:$0xff]
  %v464 = vld [vmem:[%s2 + $0x160] sm:$0xff]
  %v465 = vld [vmem:[%s2 + $0x168] sm:$0xff]
  %v466 = vld [vmem:[%s2 + $0x170] sm:$0xff]
  %v467 = vld [vmem:[%s2 + $0x178] sm:$0xff]
  %v468 = vld [vmem:[%s2 + $0x180] sm:$0xff]
  %v469 = vld [vmem:[%s2 + $0x188] sm:$0xff]
  %v470 = vld [vmem:[%s2 + $0x190] sm:$0xff]
  %v471 = vld [vmem:[%s2 + $0x198] sm:$0xff]
  %v472 = vld [vmem:[%s2 + $0x1a0] sm:$0xff]
  %v473 = vld [vmem:[%s2 + $0x1a8] sm:$0xff]
  %v474 = vld [vmem:[%s2 + $0x1b0] sm:$0xff]
  %v475 = vld [vmem:[%s2 + $0x1b8] sm:$0xff]
  %v476 = vld [vmem:[%s2 + $0x1c0] sm:$0xff]
  %v477 = vld [vmem:[%s2 + $0x1c8] sm:$0xff]
  %v478 = vld [vmem:[%s2 + $0x1d0] sm:$0xff]
  %v479 = vld [vmem:[%s2 + $0x1d8] sm:$0xff]
  %v480 = vld [vmem:[%s2 + $0x1e0] sm:$0xff]
  %v481 = vld [vmem:[%s2 + $0x1e8] sm:$0xff]
  %v482 = vld [vmem:[%s2 + $0x1f0] sm:$0xff]
  %v483 = vld [vmem:[%s2 + $0x1f8] sm:$0xff]
  %v484 = vld [vmem:[#allocation3] sm:$0xff]
  %v485 = vld [vmem:[#allocation4] sm:$0xff]
  %s486 = smul.u32 0, 4
  %s487 = smul.addr %s486, 8
  %s488 = scalar_lea.vmem [#allocation2], %s487
  %v489 = vld [vmem:[%s488] sm:$0xff]
  %v490 = vld [vmem:[%s488 + $0x8] sm:$0xff]
  %v491 = vld [vmem:[%s488 + $0x10] sm:$0xff]
  %v492 = vld [vmem:[%s488 + $0x18] sm:$0xff]
  %493 = vmatprep.subr.mxu0 %v421
  %494 = vmatpush1.msra.mxu0 %v420
  %495 = vmatprep.subr.mxu0 %v425
  %496 = vmatpush1.msra.mxu0 %v424
  %497 = vmatprep.subr.mxu0 %v429
  %498 = vmatpush1.msra.mxu0 %v428
  %499 = vmatprep.subr.mxu0 %v433
  %500 = vmatpush1.msra.mxu0 %v432
  %501 = vmatprep.subr.mxu0 %v437
  %502 = vmatpush1.msra.mxu0 %v436
  %503 = vmatprep.subr.mxu0 %v441
  %504 = vmatpush1.msra.mxu0 %v440
  %505 = vmatprep.subr.mxu0 %v445
  %506 = vmatpush1.msra.mxu0 %v444
  %507 = vmatprep.subr.mxu0 %v449
  %508 = vmatpush1.msra.mxu0 %v448
  %509 = vmatprep.subr.mxu0 %v453
  %510 = vmatpush1.msra.mxu0 %v452
  %511 = vmatprep.subr.mxu0 %v457
  %512 = vmatpush1.msra.mxu0 %v456
  %513 = vmatprep.subr.mxu0 %v461
  %514 = vmatpush1.msra.mxu0 %v460
  %515 = vmatprep.subr.mxu0 %v465
  %516 = vmatpush1.msra.mxu0 %v464
  %517 = vmatprep.subr.mxu0 %v469
  %518 = vmatpush1.msra.mxu0 %v468
  %519 = vmatprep.subr.mxu0 %v473
  %520 = vmatpush1.msra.mxu0 %v472
  %521 = vmatprep.subr.mxu0 %v477
  %522 = vmatpush1.msra.mxu0 %v476
  %523 = vmatprep.subr.mxu0 %v481
  %524 = vmatpush1.msra.mxu0 %v480
  %525 = vmatprep.subr.mxu0 0.0
  %526 = vmatpush1.msra.mxu0 0.0
  %527 = vmatprep.subr.mxu0 0.0
  %528 = vmatpush1.msra.mxu0 0.0
  %529 = vmatprep.subr.mxu0 0.0
  %530 = vmatpush1.msra.mxu0 0.0
  %531 = vmatprep.subr.mxu0 0.0
  %532 = vmatpush1.msra.mxu0 0.0
  %533 = vmatprep.subr.mxu0 0.0
  %534 = vmatpush1.msra.mxu0 0.0
  %535 = vmatprep.subr.mxu0 0.0
  %536 = vmatpush1.msra.mxu0 0.0
  %537 = vmatprep.subr.mxu0 0.0
  %538 = vmatpush1.msra.mxu0 0.0
  %539 = vmatprep.subr.mxu0 0.0
  %540 = vmatpush1.msra.mxu0 0.0
  %541 = vmatprep.subr.mxu0 0.0
  %542 = vmatpush1.msra.mxu0 0.0
  %543 = vmatprep.subr.mxu0 0.0
  %544 = vmatpush1.msra.mxu0 0.0
  %545 = vmatprep.subr.mxu0 0.0
  %546 = vmatpush1.msra.mxu0 0.0
  %547 = vmatprep.subr.mxu0 0.0
  %548 = vmatpush1.msra.mxu0 0.0
  %549 = vmatprep.subr.mxu0 0.0
  %550 = vmatpush1.msra.mxu0 0.0
  %551 = vmatprep.subr.mxu0 0.0
  %552 = vmatpush1.msra.mxu0 0.0
  %553 = vmatprep.subr.mxu0 0.0
  %554 = vmatpush1.msra.mxu0 0.0
  %555 = vmatprep.subr.mxu0 0.0
  %556 = vmatpush1.msra.mxu0 0.0
  %557 = vmatprep.mubr.f32.mxu0 0.0
  %558 = vmatmul.mubr.f32.gmra.mrb[0].mxu0 %v484
  %v559 = vpop.f32.mrb[0].mxu0
  %v560 = vadd.f32 0.0, %v559
  %v561 = vpop.f32.mrb[0].mxu0
  %v562 = vadd.f32 0.0, %v561
  %563 = vdwg.mxu0
  %564 = vmatprep.subr.mxu0 %v423
  %565 = vmatpush1.msra.mxu0 %v422
  %566 = vmatprep.subr.mxu0 %v427
  %567 = vmatpush1.msra.mxu0 %v426
  %568 = vmatprep.subr.mxu0 %v431
  %569 = vmatpush1.msra.mxu0 %v430
  %570 = vmatprep.subr.mxu0 %v435
  %571 = vmatpush1.msra.mxu0 %v434
  %572 = vmatprep.subr.mxu0 %v439
  %573 = vmatpush1.msra.mxu0 %v438
  %574 = vmatprep.subr.mxu0 %v443
  %575 = vmatpush1.msra.mxu0 %v442
  %576 = vmatprep.subr.mxu0 %v447
  %577 = vmatpush1.msra.mxu0 %v446
  %578 = vmatprep.subr.mxu0 %v451
  %579 = vmatpush1.msra.mxu0 %v450
  %580 = vmatprep.subr.mxu0 %v455
  %581 = vmatpush1.msra.mxu0 %v454
  %582 = vmatprep.subr.mxu0 %v459
  %583 = vmatpush1.msra.mxu0 %v458
  %584 = vmatprep.subr.mxu0 %v463
  %585 = vmatpush1.msra.mxu0 %v462
  %586 = vmatprep.subr.mxu0 %v467
  %587 = vmatpush1.msra.mxu0 %v466
  %588 = vmatprep.subr.mxu0 %v471
  %589 = vmatpush1.msra.mxu0 %v470
  %590 = vmatprep.subr.mxu0 %v475
  %591 = vmatpush1.msra.mxu0 %v474
  %592 = vmatprep.subr.mxu0 %v479
  %593 = vmatpush1.msra.mxu0 %v478
  %594 = vmatprep.subr.mxu0 %v483
  %595 = vmatpush1.msra.mxu0 %v482
  %596 = vmatprep.subr.mxu0 0.0
  %597 = vmatpush1.msra.mxu0 0.0
  %598 = vmatprep.subr.mxu0 0.0
  %599 = vmatpush1.msra.mxu0 0.0
  %600 = vmatprep.subr.mxu0 0.0
  %601 = vmatpush1.msra.mxu0 0.0
  %602 = vmatprep.subr.mxu0 0.0
  %603 = vmatpush1.msra.mxu0 0.0
  %604 = vmatprep.subr.mxu0 0.0
  %605 = vmatpush1.msra.mxu0 0.0
  %606 = vmatprep.subr.mxu0 0.0
  %607 = vmatpush1.msra.mxu0 0.0
  %608 = vmatprep.subr.mxu0 0.0
  %609 = vmatpush1.msra.mxu0 0.0
  %610 = vmatprep.subr.mxu0 0.0
  %611 = vmatpush1.msra.mxu0 0.0
  %612 = vmatprep.subr.mxu0 0.0
  %613 = vmatpush1.msra.mxu0 0.0
  %614 = vmatprep.subr.mxu0 0.0
  %615 = vmatpush1.msra.mxu0 0.0
  %616 = vmatprep.subr.mxu0 0.0
  %617 = vmatpush1.msra.mxu0 0.0
  %618 = vmatprep.subr.mxu0 0.0
  %619 = vmatpush1.msra.mxu0 0.0
  %620 = vmatprep.subr.mxu0 0.0
  %621 = vmatpush1.msra.mxu0 0.0
  %622 = vmatprep.subr.mxu0 0.0
  %623 = vmatpush1.msra.mxu0 0.0
  %624 = vmatprep.subr.mxu0 0.0
  %625 = vmatpush1.msra.mxu0 0.0
  %626 = vmatprep.subr.mxu0 0.0
  %627 = vmatpush1.msra.mxu0 0.0
  %628 = vmatprep.mubr.f32.mxu0 0.0
  %629 = vmatmul.mubr.f32.gmra.mrb[0].mxu0 %v484
  %v630 = vpop.f32.mrb[0].mxu0
  %v631 = vadd.f32 0.0, %v630
  %v632 = vpop.f32.mrb[0].mxu0
  %v633 = vadd.f32 0.0, %v632
  %634 = vdwg.mxu0
  %v635 = vadd.f32 %v489, %v560
  %v636 = vadd.f32 %v490, %v562
  %v637 = vadd.f32 %v491, %v631
  %v638 = vadd.f32 %v492, %v633
  %v639 = vmul.f32 %v635, 0.5
  %v640 = vtanh.pop %v639
  %v641 = vmul.f32 %v640, 0.5
  %v642 = vadd.f32 %v641, 0.5
  %v643 = vmul.f32 %v636, 0.5
  %v644 = vtanh.pop %v643
  %v645 = vmul.f32 %v644, 0.5
  %v646 = vadd.f32 %v645, 0.5
  %v647 = vtanh.pop %v637
  %v648 = vmul.f32 %v638, 0.5
  %v649 = vtanh.pop %v648
  %v650 = vmul.f32 %v649, 0.5
  %v651 = vadd.f32 %v650, 0.5
  %v652 = vmul.f32 %v646, %v485
  %v653 = vmul.f32 %v642, %v647
  %v654 = vadd.f32 %v652, %v653
  %v655 = vtanh.pop %v654
  %v656 = vmul.f32 %v651, %v655
  %s657 = smul.u32 1, 4
  %s658 = smul.addr %s657, 8
  %s659 = scalar_lea.vmem [#allocation2], %s658
  %v660 = vld [vmem:[%s659] sm:$0xff]
  %v661 = vld [vmem:[%s659 + $0x8] sm:$0xff]
  %v662 = vld [vmem:[%s659 + $0x10] sm:$0xff]
  %v663 = vld [vmem:[%s659 + $0x18] sm:$0xff]
  %664 = vmatprep.subr.mxu0 %v421
  %665 = vmatpush1.msra.mxu0 %v420
  %666 = vmatprep.subr.mxu0 %v425
  %667 = vmatpush1.msra.mxu0 %v424
  %668 = vmatprep.subr.mxu0 %v429
  %669 = vmatpush1.msra.mxu0 %v428
  %670 = vmatprep.subr.mxu0 %v433
  %671 = vmatpush1.msra.mxu0 %v432
  %672 = vmatprep.subr.mxu0 %v437
  %673 = vmatpush1.msra.mxu0 %v436
  %674 = vmatprep.subr.mxu0 %v441
  %675 = vmatpush1.msra.mxu0 %v440
  %676 = vmatprep.subr.mxu0 %v445
  %677 = vmatpush1.msra.mxu0 %v444
  %678 = vmatprep.subr.mxu0 %v449
  %679 = vmatpush1.msra.mxu0 %v448
  %680 = vmatprep.subr.mxu0 %v453
  %681 = vmatpush1.msra.mxu0 %v452
  %682 = vmatprep.subr.mxu0 %v457
  %683 = vmatpush1.msra.mxu0 %v456
  %684 = vmatprep.subr.mxu0 %v461
  %685 = vmatpush1.msra.mxu0 %v460
  %686 = vmatprep.subr.mxu0 %v465
  %687 = vmatpush1.msra.mxu0 %v464
  %688 = vmatprep.subr.mxu0 %v469
  %689 = vmatpush1.msra.mxu0 %v468
  %690 = vmatprep.subr.mxu0 %v473
  %691 = vmatpush1.msra.mxu0 %v472
  %692 = vmatprep.subr.mxu0 %v477
  %693 = vmatpush1.msra.mxu0 %v476
  %694 = vmatprep.subr.mxu0 %v481
  %695 = vmatpush1.msra.mxu0 %v480
  %696 = vmatprep.subr.mxu0 0.0
  %697 = vmatpush1.msra.mxu0 0.0
  %698 = vmatprep.subr.mxu0 0.0
  %699 = vmatpush1.msra.mxu0 0.0
  %700 = vmatprep.subr.mxu0 0.0
  %701 = vmatpush1.msra.mxu0 0.0
  %702 = vmatprep.subr.mxu0 0.0
  %703 = vmatpush1.msra.mxu0 0.0
  %704 = vmatprep.subr.mxu0 0.0
  %705 = vmatpush1.msra.mxu0 0.0
  %706 = vmatprep.subr.mxu0 0.0
  %707 = vmatpush1.msra.mxu0 0.0
  %708 = vmatprep.subr.mxu0 0.0
  %709 = vmatpush1.msra.mxu0 0.0
  %710 = vmatprep.subr.mxu0 0.0
  %711 = vmatpush1.msra.mxu0 0.0
  %712 = vmatprep.subr.mxu0 0.0
  %713 = vmatpush1.msra.mxu0 0.0
  %714 = vmatprep.subr.mxu0 0.0
  %715 = vmatpush1.msra.mxu0 0.0
  %716 = vmatprep.subr.mxu0 0.0
  %717 = vmatpush1.msra.mxu0 0.0
  %718 = vmatprep.subr.mxu0 0.0
  %719 = vmatpush1.msra.mxu0 0.0
  %720 = vmatprep.subr.mxu0 0.0
  %721 = vmatpush1.msra.mxu0 0.0
  %722 = vmatprep.subr.mxu0 0.0
  %723 = vmatpush1.msra.mxu0 0.0
  %724 = vmatprep.subr.mxu0 0.0
  %725 = vmatpush1.msra.mxu0 0.0
  %726 = vmatprep.subr.mxu0 0.0
  %727 = vmatpush1.msra.mxu0 0.0
  %728 = vmatprep.mubr.f32.mxu0 0.0
  %729 = vmatmul.mubr.f32.gmra.mrb[0].mxu0 %v656
  %v730 = vpop.f32.mrb[0].mxu0
  %v731 = vadd.f32 0.0, %v730
  %v732 = vpop.f32.mrb[0].mxu0
  %v733 = vadd.f32 0.0, %v732
  %734 = vdwg.mxu0
  %735 = vmatprep.subr.mxu0 %v423
  %736 = vmatpush1.msra.mxu0 %v422
  %737 = vmatprep.subr.mxu0 %v427
  %738 = vmatpush1.msra.mxu0 %v426
  %739 = vmatprep.subr.mxu0 %v431
  %740 = vmatpush1.msra.mxu0 %v430
  %741 = vmatprep.subr.mxu0 %v435
  %742 = vmatpush1.msra.mxu0 %v434
  %743 = vmatprep.subr.mxu0 %v439
  %744 = vmatpush1.msra.mxu0 %v438
  %745 = vmatprep.subr.mxu0 %v443
  %746 = vmatpush1.msra.mxu0 %v442
  %747 = vmatprep.subr.mxu0 %v447
  %748 = vmatpush1.msra.mxu0 %v446
  %749 = vmatprep.subr.mxu0 %v451
  %750 = vmatpush1.msra.mxu0 %v450
  %751 = vmatprep.subr.mxu0 %v455
  %752 = vmatpush1.msra.mxu0 %v454
  %753 = vmatprep.subr.mxu0 %v459
  %754 = vmatpush1.msra.mxu0 %v458
  %755 = vmatprep.subr.mxu0 %v463
  %756 = vmatpush1.msra.mxu0 %v462
  %757 = vmatprep.subr.mxu0 %v467
  %758 = vmatpush1.msra.mxu0 %v466
  %759 = vmatprep.subr.mxu0 %v471
  %760 = vmatpush1.msra.mxu0 %v470
  %761 = vmatprep.subr.mxu0 %v475
  %762 = vmatpush1.msra.mxu0 %v474
  %763 = vmatprep.subr.mxu0 %v479
  %764 = vmatpush1.msra.mxu0 %v478
  %765 = vmatprep.subr.mxu0 %v483
  %766 = vmatpush1.msra.mxu0 %v482
  %767 = vmatprep.subr.mxu0 0.0
  %768 = vmatpush1.msra.mxu0 0.0
  %769 = vmatprep.subr.mxu0 0.0
  %770 = vmatpush1.msra.mxu0 0.0
  %771 = vmatprep.subr.mxu0 0.0
  %772 = vmatpush1.msra.mxu0 0.0
  %773 = vmatprep.subr.mxu0 0.0
  %774 = vmatpush1.msra.mxu0 0.0
  %775 = vmatprep.subr.mxu0 0.0
  %776 = vmatpush1.msra.mxu0 0.0
  %777 = vmatprep.subr.mxu0 0.0
  %778 = vmatpush1.msra.mxu0 0.0
  %779 = vmatprep.subr.mxu0 0.0
  %780 = vmatpush1.msra.mxu0 0.0
  %781 = vmatprep.subr.mxu0 0.0
  %782 = vmatpush1.msra.mxu0 0.0
  %783 = vmatprep.subr.mxu0 0.0
  %784 = vmatpush1.msra.mxu0 0.0
  %785 = vmatprep.subr.mxu0 0.0
  %786 = vmatpush1.msra.mxu0 0.0
  %787 = vmatprep.subr.mxu0 0.0
  %788 = vmatpush1.msra.mxu0 0.0
  %789 = vmatprep.subr.mxu0 0.0
  %790 = vmatpush1.msra.mxu0 0.0
  %791 = vmatprep.subr.mxu0 0.0
  %792 = vmatpush1.msra.mxu0 0.0
  %793 = vmatprep.subr.mxu0 0.0
  %794 = vmatpush1.msra.mxu0 0.0
  %795 = vmatprep.subr.mxu0 0.0
  %796 = vmatpush1.msra.mxu0 0.0
  %797 = vmatprep.subr.mxu0 0.0
  %798 = vmatpush1.msra.mxu0 0.0
  %799 = vmatprep.mubr.f32.mxu0 0.0
  %800 = vmatmul.mubr.f32.gmra.mrb[0].mxu0 %v656
  %v801 = vpop.f32.mrb[0].mxu0
  %v802 = vadd.f32 0.0, %v801
  %v803 = vpop.f32.mrb[0].mxu0
  %v804 = vadd.f32 0.0, %v803
  %805 = vdwg.mxu0
  %v806 = vadd.f32 %v660, %v731
  %v807 = vadd.f32 %v661, %v733
  %v808 = vadd.f32 %v662, %v802
  %v809 = vadd.f32 %v663, %v804
  %v810 = vmul.f32 %v806, 0.5
  %v811 = vtanh.pop %v810
  %v812 = vmul.f32 %v811, 0.5
  %v813 = vadd.f32 %v812, 0.5
  %v814 = vmul.f32 %v807, 0.5
  %v815 = vtanh.pop %v814
  %v816 = vmul.f32 %v815, 0.5
  %v817 = vadd.f32 %v816, 0.5
  %v818 = vtanh.pop %v808
  %v819 = vmul.f32 %v809, 0.5
  %v820 = vtanh.pop %v819
  %v821 = vmul.f32 %v820, 0.5
  %v822 = vadd.f32 %v821, 0.5
  %v823 = vmul.f32 %v817, %v654
  %v824 = vmul.f32 %v813, %v818
  %v825 = vadd.f32 %v823, %v824
  %v826 = vtanh.pop %v825
  %v827 = vmul.f32 %v822, %v826
  %s828 = smul.u32 2, 4
  %s829 = smul.addr %s828, 8
  %s830 = scalar_lea.vmem [#allocation2], %s829
  %v831 = vld [vmem:[%s830] sm:$0xff]
  %v832 = vld [vmem:[%s830 + $0x8] sm:$0xff]
  %v833 = vld [vmem:[%s830 + $0x10] sm:$0xff]
  %v834 = vld [vmem:[%s830 + $0x18] sm:$0xff]
  %835 = vmatprep.subr.mxu0 %v421
  %836 = vmatpush1.msra.mxu0 %v420
  %837 = vmatprep.subr.mxu0 %v425
  %838 = vmatpush1.msra.mxu0 %v424
  %839 = vmatprep.subr.mxu0 %v429
  %840 = vmatpush1.msra.mxu0 %v428
  %841 = vmatprep.subr.mxu0 %v433
  %842 = vmatpush1.msra.mxu0 %v432
  %843 = vmatprep.subr.mxu0 %v437
  %844 = vmatpush1.msra.mxu0 %v436
  %845 = vmatprep.subr.mxu0 %v441
  %846 = vmatpush1.msra.mxu0 %v440
  %847 = vmatprep.subr.mxu0 %v445
  %848 = vmatpush1.msra.mxu0 %v444
  %849 = vmatprep.subr.mxu0 %v449
  %850 = vmatpush1.msra.mxu0 %v448
  %851 = vmatprep.subr.mxu0 %v453
  %852 = vmatpush1.msra.mxu0 %v452
  %853 = vmatprep.subr.mxu0 %v457
  %854 = vmatpush1.msra.mxu0 %v456
  %855 = vmatprep.subr.mxu0 %v461
  %856 = vmatpush1.msra.mxu0 %v460
  %857 = vmatprep.subr.mxu0 %v465
  %858 = vmatpush1.msra.mxu0 %v464
  %859 = vmatprep.subr.mxu0 %v469
  %860 = vmatpush1.msra.mxu0 %v468
  %861 = vmatprep.subr.mxu0 %v473
  %862 = vmatpush1.msra.mxu0 %v472
  %863 = vmatprep.subr.mxu0 %v477
  %864 = vmatpush1.msra.mxu0 %v476
  %865 = vmatprep.subr.mxu0 %v481
  %866 = vmatpush1.msra.mxu0 %v480
  %867 = vmatprep.subr.mxu0 0.0
  %868 = vmatpush1.msra.mxu0 0.0
  %869 = vmatprep.subr.mxu0 0.0
  %870 = vmatpush1.msra.mxu0 0.0
  %871 = vmatprep.subr.mxu0 0.0
  %872 = vmatpush1.msra.mxu0 0.0
  %873 = vmatprep.subr.mxu0 0.0
  %874 = vmatpush1.msra.mxu0 0.0
  %875 = vmatprep.subr.mxu0 0.0
  %876 = vmatpush1.msra.mxu0 0.0
  %877 = vmatprep.subr.mxu0 0.0
  %878 = vmatpush1.msra.mxu0 0.0
  %879 = vmatprep.subr.mxu0 0.0
  %880 = vmatpush1.msra.mxu0 0.0
  %881 = vmatprep.subr.mxu0 0.0
  %882 = vmatpush1.msra.mxu0 0.0
  %883 = vmatprep.subr.mxu0 0.0
  %884 = vmatpush1.msra.mxu0 0.0
  %885 = vmatprep.subr.mxu0 0.0
  %886 = vmatpush1.msra.mxu0 0.0
  %887 = vmatprep.subr.mxu0 0.0
  %888 = vmatpush1.msra.mxu0 0.0
  %889 = vmatprep.subr.mxu0 0.0
  %890 = vmatpush1.msra.mxu0 0.0
  %891 = vmatprep.subr.mxu0 0.0
  %892 = vmatpush1.msra.mxu0 0.0
  %893 = vmatprep.subr.mxu0 0.0
  %894 = vmatpush1.msra.mxu0 0.0
  %895 = vmatprep.subr.mxu0 0.0
  %896 = vmatpush1.msra.mxu0 0.0
  %897 = vmatprep.subr.mxu0 0.0
  %898 = vmatpush1.msra.mxu0 0.0
  %899 = vmatprep.mubr.f32.mxu0 0.0
  %900 = vmatmul.mubr.f32.gmra.mrb[0].mxu0 %v827
  %v901 = vpop.f32.mrb[0].mxu0
  %v902 = vadd.f32 0.0, %v901
  %v903 = vpop.f32.mrb[0].mxu0
  %v904 = vadd.f32 0.0, %v903
  %905 = vdwg.mxu0
  %906 = vmatprep.subr.mxu0 %v423
  %907 = vmatpush1.msra.mxu0 %v422
  %908 = vmatprep.subr.mxu0 %v427
  %909 = vmatpush1.msra.mxu0 %v426
  %910 = vmatprep.subr.mxu0 %v431
  %911 = vmatpush1.msra.mxu0 %v430
  %912 = vmatprep.subr.mxu0 %v435
  %913 = vmatpush1.msra.mxu0 %v434
  %914 = vmatprep.subr.mxu0 %v439
  %915 = vmatpush1.msra.mxu0 %v438
  %916 = vmatprep.subr.mxu0 %v443
  %917 = vmatpush1.msra.mxu0 %v442
  %918 = vmatprep.subr.mxu0 %v447
  %919 = vmatpush1.msra.mxu0 %v446
  %920 = vmatprep.subr.mxu0 %v451
  %921 = vmatpush1.msra.mxu0 %v450
  %922 = vmatprep.subr.mxu0 %v455
  %923 = vmatpush1.msra.mxu0 %v454
  %924 = vmatprep.subr.mxu0 %v459
  %925 = vmatpush1.msra.mxu0 %v458
  %926 = vmatprep.subr.mxu0 %v463
  %927 = vmatpush1.msra.mxu0 %v462
  %928 = vmatprep.subr.mxu0 %v467
  %929 = vmatpush1.msra.mxu0 %v466
  %930 = vmatprep.subr.mxu0 %v471
  %931 = vmatpush1.msra.mxu0 %v470
  %932 = vmatprep.subr.mxu0 %v475
  %933 = vmatpush1.msra.mxu0 %v474
  %934 = vmatprep.subr.mxu0 %v479
  %935 = vmatpush1.msra.mxu0 %v478
  %936 = vmatprep.subr.mxu0 %v483
  %937 = vmatpush1.msra.mxu0 %v482
  %938 = vmatprep.subr.mxu0 0.0
  %939 = vmatpush1.msra.mxu0 0.0
  %940 = vmatprep.subr.mxu0 0.0
  %941 = vmatpush1.msra.mxu0 0.0
  %942 = vmatprep.subr.mxu0 0.0
  %943 = vmatpush1.msra.mxu0 0.0
  %944 = vmatprep.subr.mxu0 0.0
  %945 = vmatpush1.msra.mxu0 0.0
  %946 = vmatprep.subr.mxu0 0.0
  %947 = vmatpush1.msra.mxu0 0.0
  %948 = vmatprep.subr.mxu0 0.0
  %949 = vmatpush1.msra.mxu0 0.0
  %950 = vmatprep.subr.mxu0 0.0
  %951 = vmatpush1.msra.mxu0 0.0
  %952 = vmatprep.subr.mxu0 0.0
  %953 = vmatpush1.msra.mxu0 0.0
  %954 = vmatprep.subr.mxu0 0.0
  %955 = vmatpush1.msra.mxu0 0.0
  %956 = vmatprep.subr.mxu0 0.0
  %957 = vmatpush1.msra.mxu0 0.0
  %958 = vmatprep.subr.mxu0 0.0
  %959 = vmatpush1.msra.mxu0 0.0
  %960 = vmatprep.subr.mxu0 0.0
  %961 = vmatpush1.msra.mxu0 0.0
  %962 = vmatprep.subr.mxu0 0.0
  %963 = vmatpush1.msra.mxu0 0.0
  %964 = vmatprep.subr.mxu0 0.0
  %965 = vmatpush1.msra.mxu0 0.0
  %966 = vmatprep.subr.mxu0 0.0
  %967 = vmatpush1.msra.mxu0 0.0
  %968 = vmatprep.subr.mxu0 0.0
  %969 = vmatpush1.msra.mxu0 0.0
  %970 = vmatprep.mubr.f32.mxu0 0.0
  %971 = vmatmul.mubr.f32.gmra.mrb[0].mxu0 %v827
  %v972 = vpop.f32.mrb[0].mxu0
  %v973 = vadd.f32 0.0, %v972
  %v974 = vpop.f32.mrb[0].mxu0
  %v975 = vadd.f32 0.0, %v974
  %976 = vdwg.mxu0
  %v977 = vadd.f32 %v831, %v902
  %v978 = vadd.f32 %v832, %v904
  %v979 = vadd.f32 %v833, %v973
  %v980 = vadd.f32 %v834, %v975
  %v981 = vmul.f32 %v977, 0.5
  %v982 = vtanh.pop %v981
  %v983 = vmul.f32 %v982, 0.5
  %v984 = vadd.f32 %v983, 0.5
  %v985 = vmul.f32 %v978, 0.5
  %v986 = vtanh.pop %v985
  %v987 = vmul.f32 %v986, 0.5
  %v988 = vadd.f32 %v987, 0.5
  %v989 = vtanh.pop %v979
  %v990 = vmul.f32 %v980, 0.5
  %v991 = vtanh.pop %v990
  %v992 = vmul.f32 %v991, 0.5
  %v993 = vadd.f32 %v992, 0.5
  %v994 = vmul.f32 %v988, %v825
  %v995 = vmul.f32 %v984, %v989
  %v996 = vadd.f32 %v994, %v995
  %v997 = vtanh.pop %v996
  %v998 = vmul.f32 %v993, %v997
  %s999 = smul.u32 3, 4
  %s1000 = smul.addr %s999, 8
  %s1001 = scalar_lea.vmem [#allocation2], %s1000
  %v1002 = vld [vmem:[%s1001] sm:$0xff]
  %v1003 = vld [vmem:[%s1001 + $0x8] sm:$0xff]
  %v1004 = vld [vmem:[%s1001 + $0x10] sm:$0xff]
  %v1005 = vld [vmem:[%s1001 + $0x18] sm:$0xff]
  %1006 = vmatprep.subr.mxu0 %v421
  %1007 = vmatpush1.msra.mxu0 %v420
  %1008 = vmatprep.subr.mxu0 %v425
  %1009 = vmatpush1.msra.mxu0 %v424
  %1010 = vmatprep.subr.mxu0 %v429
  %1011 = vmatpush1.msra.mxu0 %v428
  %1012 = vmatprep.subr.mxu0 %v433
  %1013 = vmatpush1.msra.mxu0 %v432
  %1014 = vmatprep.subr.mxu0 %v437
  %1015 = vmatpush1.msra.mxu0 %v436
  %1016 = vmatprep.subr.mxu0 %v441
  %1017 = vmatpush1.msra.mxu0 %v440
  %1018 = vmatprep.subr.mxu0 %v445
  %1019 = vmatpush1.msra.mxu0 %v444
  %1020 = vmatprep.subr.mxu0 %v449
  %1021 = vmatpush1.msra.mxu0 %v448
  %1022 = vmatprep.subr.mxu0 %v453
  %1023 = vmatpush1.msra.mxu0 %v452
  %1024 = vmatprep.subr.mxu0 %v457
  %1025 = vmatpush1.msra.mxu0 %v456
  %1026 = vmatprep.subr.mxu0 %v461
  %1027 = vmatpush1.msra.mxu0 %v460
  %1028 = vmatprep.subr.mxu0 %v465
  %1029 = vmatpush1.msra.mxu0 %v464
  %1030 = vmatprep.subr.mxu0 %v469
  %1031 = vmatpush1.msra.mxu0 %v468
  %1032 = vmatprep.subr.mxu0 %v473
  %1033 = vmatpush1.msra.mxu0 %v472
  %1034 = vmatprep.subr.mxu0 %v477
  %1035 = vmatpush1.msra.mxu0 %v476
  %1036 = vmatprep.subr.mxu0 %v481
  %1037 = vmatpush1.msra.mxu0 %v480
  %1038 = vmatprep.subr.mxu0 0.0
  %1039 = vmatpush1.msra.mxu0 0.0
  %1040 = vmatprep.subr.mxu0 0.0
  %1041 = vmatpush1.msra.mxu0 0.0
  %1042 = vmatprep.subr.mxu0 0.0
  %1043 = vmatpush1.msra.mxu0 0.0
  %1044 = vmatprep.subr.mxu0 0.0
  %1045 = vmatpush1.msra.mxu0 0.0
  %1046 = vmatprep.subr.mxu0 0.0
  %1047 = vmatpush1.msra.mxu0 0.0
  %1048 = vmatprep.subr.mxu0 0.0
  %1049 = vmatpush1.msra.mxu0 0.0
  %1050 = vmatprep.subr.mxu0 0.0
  %1051 = vmatpush1.msra.mxu0 0.0
  %1052 = vmatprep.subr.mxu0 0.0
  %1053 = vmatpush1.msra.mxu0 0.0
  %1054 = vmatprep.subr.mxu0 0.0
  %1055 = vmatpush1.msra.mxu0 0.0
  %1056 = vmatprep.subr.mxu0 0.0
  %1057 = vmatpush1.msra.mxu0 0.0
  %1058 = vmatprep.subr.mxu0 0.0
  %1059 = vmatpush1.msra.mxu0 0.0
  %1060 = vmatprep.subr.mxu0 0.0
  %1061 = vmatpush1.msra.mxu0 0.0
  %1062 = vmatprep.subr.mxu0 0.0
  %1063 = vmatpush1.msra.mxu0 0.0
  %1064 = vmatprep.subr.mxu0 0.0
  %1065 = vmatpush1.msra.mxu0 0.0
  %1066 = vmatprep.subr.mxu0 0.0
  %1067 = vmatpush1.msra.mxu0 0.0
  %1068 = vmatprep.subr.mxu0 0.0
  %1069 = vmatpush1.msra.mxu0 0.0
  %1070 = vmatprep.mubr.f32.mxu0 0.0
  %1071 = vmatmul.mubr.f32.gmra.mrb[0].mxu0 %v998
  %v1072 = vpop.f32.mrb[0].mxu0
  %v1073 = vadd.f32 0.0, %v1072
  %v1074 = vpop.f32.mrb[0].mxu0
  %v1075 = vadd.f32 0.0, %v1074
  %1076 = vdwg.mxu0
  %1077 = vmatprep.subr.mxu0 %v423
  %1078 = vmatpush1.msra.mxu0 %v422
  %1079 = vmatprep.subr.mxu0 %v427
  %1080 = vmatpush1.msra.mxu0 %v426
  %1081 = vmatprep.subr.mxu0 %v431
  %1082 = vmatpush1.msra.mxu0 %v430
  %1083 = vmatprep.subr.mxu0 %v435
  %1084 = vmatpush1.msra.mxu0 %v434
  %1085 = vmatprep.subr.mxu0 %v439
  %1086 = vmatpush1.msra.mxu0 %v438
  %1087 = vmatprep.subr.mxu0 %v443
  %1088 = vmatpush1.msra.mxu0 %v442
  %1089 = vmatprep.subr.mxu0 %v447
  %1090 = vmatpush1.msra.mxu0 %v446
  %1091 = vmatprep.subr.mxu0 %v451
  %1092 = vmatpush1.msra.mxu0 %v450
  %1093 = vmatprep.subr.mxu0 %v455
  %1094 = vmatpush1.msra.mxu0 %v454
  %1095 = vmatprep.subr.mxu0 %v459
  %1096 = vmatpush1.msra.mxu0 %v458
  %1097 = vmatprep.subr.mxu0 %v463
  %1098 = vmatpush1.msra.mxu0 %v462
  %1099 = vmatprep.subr.mxu0 %v467
  %1100 = vmatpush1.msra.mxu0 %v466
  %1101 = vmatprep.subr.mxu0 %v471
  %1102 = vmatpush1.msra.mxu0 %v470
  %1103 = vmatprep.subr.mxu0 %v475
  %1104 = vmatpush1.msra.mxu0 %v474
  %1105 = vmatprep.subr.mxu0 %v479
  %1106 = vmatpush1.msra.mxu0 %v478
  %1107 = vmatprep.subr.mxu0 %v483
  %1108 = vmatpush1.msra.mxu0 %v482
  %1109 = vmatprep.subr.mxu0 0.0
  %1110 = vmatpush1.msra.mxu0 0.0
  %1111 = vmatprep.subr.mxu0 0.0
  %1112 = vmatpush1.msra.mxu0 0.0
  %1113 = vmatprep.subr.mxu0 0.0
  %1114 = vmatpush1.msra.mxu0 0.0
  %1115 = vmatprep.subr.mxu0 0.0
  %1116 = vmatpush1.msra.mxu0 0.0
  %1117 = vmatprep.subr.mxu0 0.0
  %1118 = vmatpush1.msra.mxu0 0.0
  %1119 = vmatprep.subr.mxu0 0.0
  %1120 = vmatpush1.msra.mxu0 0.0
  %1121 = vmatprep.subr.mxu0 0.0
  %1122 = vmatpush1.msra.mxu0 0.0
  %1123 = vmatprep.subr.mxu0 0.0
  %1124 = vmatpush1.msra.mxu0 0.0
  %1125 = vmatprep.subr.mxu0 0.0
  %1126 = vmatpush1.msra.mxu0 0.0
  %1127 = vmatprep.subr.mxu0 0.0
  %1128 = vmatpush1.msra.mxu0 0.0
  %1129 = vmatprep.subr.mxu0 0.0
  %1130 = vmatpush1.msra.mxu0 0.0
  %1131 = vmatprep.subr.mxu0 0.0
  %1132 = vmatpush1.msra.mxu0 0.0
  %1133 = vmatprep.subr.mxu0 0.0
  %1134 = vmatpush1.msra.mxu0 0.0
  %1135 = vmatprep.subr.mxu0 0.0
  %1136 = vmatpush1.msra.mxu0 0.0
  %1137 = vmatprep.subr.mxu0 0.0
  %1138 = vmatpush1.msra.mxu0 0.0
  %1139 = vmatprep.subr.mxu0 0.0
  %1140 = vmatpush1.msra.mxu0 0.0
  %1141 = vmatprep.mubr.f32.mxu0 0.0
  %1142 = vmatmul.mubr.f32.gmra.mrb[0].mxu0 %v998
  %v1143 = vpop.f32.mrb[0].mxu0
  %v1144 = vadd.f32 0.0, %v1143
  %v1145 = vpop.f32.mrb[0].mxu0
  %v1146 = vadd.f32 0.0, %v1145
  %1147 = vdwg.mxu0
  %v1148 = vadd.f32 %v1002, %v1073
  %v1149 = vadd.f32 %v1003, %v1075
  %v1150 = vadd.f32 %v1004, %v1144
  %v1151 = vadd.f32 %v1005, %v1146
  %v1152 = vmul.f32 %v1148, 0.5
  %v1153 = vtanh.pop %v1152
  %v1154 = vmul.f32 %v1153, 0.5
  %v1155 = vadd.f32 %v1154, 0.5
  %v1156 = vmul.f32 %v1149, 0.5
  %v1157 = vtanh.pop %v1156
  %v1158 = vmul.f32 %v1157, 0.5
  %v1159 = vadd.f32 %v1158, 0.5
  %v1160 = vtanh.pop %v1150
  %v1161 = vmul.f32 %v1151, 0.5
  %v1162 = vtanh.pop %v1161
  %v1163 = vmul.f32 %v1162, 0.5
  %v1164 = vadd.f32 %v1163, 0.5
  %v1165 = vmul.f32 %v1159, %v996
  %v1166 = vmul.f32 %v1155, %v1160
  %v1167 = vadd.f32 %v1165, %v1166
  %v1168 = vtanh.pop %v1167
  %v1169 = vmul.f32 %v1164, %v1168
  %s1170 = smul.u32 4, 4
  %s1171 = smul.addr %s1170, 8
  %s1172 = scalar_lea.vmem [#allocation2], %s1171
  %v1173 = vld [vmem:[%s1172] sm:$0xff]
  %v1174 = vld [vmem:[%s1172 + $0x8] sm:$0xff]
  %v1175 = vld [vmem:[%s1172 + $0x10] sm:$0xff]
  %v1176 = vld [vmem:[%s1172 + $0x18] sm:$0xff]
  %1177 = vmatprep.subr.mxu0 %v421
  %1178 = vmatpush1.msra.mxu0 %v420
  %1179 = vmatprep.subr.mxu0 %v425
  %1180 = vmatpush1.msra.mxu0 %v424
  %1181 = vmatprep.subr.mxu0 %v429
  %1182 = vmatpush1.msra.mxu0 %v428
  %1183 = vmatprep.subr.mxu0 %v433
  %1184 = vmatpush1.msra.mxu0 %v432
  %1185 = vmatprep.subr.mxu0 %v437
  %1186 = vmatpush1.msra.mxu0 %v436
  %1187 = vmatprep.subr.mxu0 %v441
  %1188 = vmatpush1.msra.mxu0 %v440
  %1189 = vmatprep.subr.mxu0 %v445
  %1190 = vmatpush1.msra.mxu0 %v444
  %1191 = vmatprep.subr.mxu0 %v449
  %1192 = vmatpush1.msra.mxu0 %v448
  %1193 = vmatprep.subr.mxu0 %v453
  %1194 = vmatpush1.msra.mxu0 %v452
  %1195 = vmatprep.subr.mxu0 %v457
  %1196 = vmatpush1.msra.mxu0 %v456
  %1197 = vmatprep.subr.mxu0 %v461
  %1198 = vmatpush1.msra.mxu0 %v460
  %1199 = vmatprep.subr.mxu0 %v465
  %1200 = vmatpush1.msra.mxu0 %v464
  %1201 = vmatprep.subr.mxu0 %v469
  %1202 = vmatpush1.msra.mxu0 %v468
  %1203 = vmatprep.subr.mxu0 %v473
  %1204 = vmatpush1.msra.mxu0 %v472
  %1205 = vmatprep.subr.mxu0 %v477
  %1206 = vmatpush1.msra.mxu0 %v476
  %1207 = vmatprep.subr.mxu0 %v481
  %1208 = vmatpush1.msra.mxu0 %v480
  %1209 = vmatprep.subr.mxu0 0.0
  %1210 = vmatpush1.msra.mxu0 0.0
  %1211 = vmatprep.subr.mxu0 0.0
  %1212 = vmatpush1.msra.mxu0 0.0
  %1213 = vmatprep.subr.mxu0 0.0
  %1214 = vmatpush1.msra.mxu0 0.0
  %1215 = vmatprep.subr.mxu0 0.0
  %1216 = vmatpush1.msra.mxu0 0.0
  %1217 = vmatprep.subr.mxu0 0.0
  %1218 = vmatpush1.msra.mxu0 0.0
  %1219 = vmatprep.subr.mxu0 0.0
  %1220 = vmatpush1.msra.mxu0 0.0
  %1221 = vmatprep.subr.mxu0 0.0
  %1222 = vmatpush1.msra.mxu0 0.0
  %1223 = vmatprep.subr.mxu0 0.0
  %1224 = vmatpush1.msra.mxu0 0.0
  %1225 = vmatprep.subr.mxu0 0.0
  %1226 = vmatpush1.msra.mxu0 0.0
  %1227 = vmatprep.subr.mxu0 0.0
  %1228 = vmatpush1.msra.mxu0 0.0
  %1229 = vmatprep.subr.mxu0 0.0
  %1230 = vmatpush1.msra.mxu0 0.0
  %1231 = vmatprep.subr.mxu0 0.0
  %1232 = vmatpush1.msra.mxu0 0.0
  %1233 = vmatprep.subr.mxu0 0.0
  %1234 = vmatpush1.msra.mxu0 0.0
  %1235 = vmatprep.subr.mxu0 0.0
  %1236 = vmatpush1.msra.mxu0 0.0
  %1237 = vmatprep.subr.mxu0 0.0
  %1238 = vmatpush1.msra.mxu0 0.0
  %1239 = vmatprep.subr.mxu0 0.0
  %1240 = vmatpush1.msra.mxu0 0.0
  %1241 = vmatprep.mubr.f32.mxu0 0.0
  %1242 = vmatmul.mubr.f32.gmra.mrb[0].mxu0 %v1169
  %v1243 = vpop.f32.mrb[0].mxu0
  %v1244 = vadd.f32 0.0, %v1243
  %v1245 = vpop.f32.mrb[0].mxu0
  %v1246 = vadd.f32 0.0, %v1245
  %1247 = vdwg.mxu0
  %1248 = vmatprep.subr.mxu0 %v423
  %1249 = vmatpush1.msra.mxu0 %v422
  %1250 = vmatprep.subr.mxu0 %v427
  %1251 = vmatpush1.msra.mxu0 %v426
  %1252 = vmatprep.subr.mxu0 %v431
  %1253 = vmatpush1.msra.mxu0 %v430
  %1254 = vmatprep.subr.mxu0 %v435
  %1255 = vmatpush1.msra.mxu0 %v434
  %1256 = vmatprep.subr.mxu0 %v439
  %1257 = vmatpush1.msra.mxu0 %v438
  %1258 = vmatprep.subr.mxu0 %v443
  %1259 = vmatpush1.msra.mxu0 %v442
  %1260 = vmatprep.subr.mxu0 %v447
  %1261 = vmatpush1.msra.mxu0 %v446
  %1262 = vmatprep.subr.mxu0 %v451
  %1263 = vmatpush1.msra.mxu0 %v450
  %1264 = vmatprep.subr.mxu0 %v455
  %1265 = vmatpush1.msra.mxu0 %v454
  %1266 = vmatprep.subr.mxu0 %v459
  %1267 = vmatpush1.msra.mxu0 %v458
  %1268 = vmatprep.subr.mxu0 %v463
  %1269 = vmatpush1.msra.mxu0 %v462
  %1270 = vmatprep.subr.mxu0 %v467
  %1271 = vmatpush1.msra.mxu0 %v466
  %1272 = vmatprep.subr.mxu0 %v471
  %1273 = vmatpush1.msra.mxu0 %v470
  %1274 = vmatprep.subr.mxu0 %v475
  %1275 = vmatpush1.msra.mxu0 %v474
  %1276 = vmatprep.subr.mxu0 %v479
  %1277 = vmatpush1.msra.mxu0 %v478
  %1278 = vmatprep.subr.mxu0 %v483
  %1279 = vmatpush1.msra.mxu0 %v482
  %1280 = vmatprep.subr.mxu0 0.0
  %1281 = vmatpush1.msra.mxu0 0.0
  %1282 = vmatprep.subr.mxu0 0.0
  %1283 = vmatpush1.msra.mxu0 0.0
  %1284 = vmatprep.subr.mxu0 0.0
  %1285 = vmatpush1.msra.mxu0 0.0
  %1286 = vmatprep.subr.mxu0 0.0
  %1287 = vmatpush1.msra.mxu0 0.0
  %1288 = vmatprep.subr.mxu0 0.0
  %1289 = vmatpush1.msra.mxu0 0.0
  %1290 = vmatprep.subr.mxu0 0.0
  %1291 = vmatpush1.msra.mxu0 0.0
  %1292 = vmatprep.subr.mxu0 0.0
  %1293 = vmatpush1.msra.mxu0 0.0
  %1294 = vmatprep.subr.mxu0 0.0
  %1295 = vmatpush1.msra.mxu0 0.0
  %1296 = vmatprep.subr.mxu0 0.0
  %1297 = vmatpush1.msra.mxu0 0.0
  %1298 = vmatprep.subr.mxu0 0.0
  %1299 = vmatpush1.msra.mxu0 0.0
  %1300 = vmatprep.subr.mxu0 0.0
  %1301 = vmatpush1.msra.mxu0 0.0
  %1302 = vmatprep.subr.mxu0 0.0
  %1303 = vmatpush1.msra.mxu0 0.0
  %1304 = vmatprep.subr.mxu0 0.0
  %1305 = vmatpush1.msra.mxu0 0.0
  %1306 = vmatprep.subr.mxu0 0.0
  %1307 = vmatpush1.msra.mxu0 0.0
  %1308 = vmatprep.subr.mxu0 0.0
  %1309 = vmatpush1.msra.mxu0 0.0
  %1310 = vmatprep.subr.mxu0 0.0
  %1311 = vmatpush1.msra.mxu0 0.0
  %1312 = vmatprep.mubr.f32.mxu0 0.0
  %1313 = vmatmul.mubr.f32.gmra.mrb[0].mxu0 %v1169
  %v1314 = vpop.f32.mrb[0].mxu0
  %v1315 = vadd.f32 0.0, %v1314
  %v1316 = vpop.f32.mrb[0].mxu0
  %v1317 = vadd.f32 0.0, %v1316
  %1318 = vdwg.mxu0
  %v1319 = vadd.f32 %v1173, %v1244
  %v1320 = vadd.f32 %v1174, %v1246
  %v1321 = vadd.f32 %v1175, %v1315
  %v1322 = vadd.f32 %v1176, %v1317
  %v1323 = vmul.f32 %v1319, 0.5
  %v1324 = vtanh.pop %v1323
  %v1325 = vmul.f32 %v1324, 0.5
  %v1326 = vadd.f32 %v1325, 0.5
  %v1327 = vmul.f32 %v1320, 0.5
  %v1328 = vtanh.pop %v1327
  %v1329 = vmul.f32 %v1328, 0.5
  %v1330 = vadd.f32 %v1329, 0.5
  %v1331 = vtanh.pop %v1321
  %v1332 = vmul.f32 %v1322, 0.5
  %v1333 = vtanh.pop %v1332
  %v1334 = vmul.f32 %v1333, 0.5
  %v1335 = vadd.f32 %v1334, 0.5
  %v1336 = vmul.f32 %v1330, %v1167
  %v1337 = vmul.f32 %v1326, %v1331
  %v1338 = vadd.f32 %v1336, %v1337
  %v1339 = vtanh.pop %v1338
  %v1340 = vmul.f32 %v1335, %v1339
  %s1341 = smul.u32 5, 4
  %s1342 = smul.addr %s1341, 8
  %s1343 = scalar_lea.vmem [#allocation2], %s1342
  %v1344 = vld [vmem:[%s1343] sm:$0xff]
  %v1345 = vld [vmem:[%s1343 + $0x8] sm:$0xff]
  %v1346 = vld [vmem:[%s1343 + $0x10] sm:$0xff]
  %v1347 = vld [vmem:[%s1343 + $0x18] sm:$0xff]
  %1348 = vmatprep.subr.mxu0 %v421
  %1349 = vmatpush1.msra.mxu0 %v420
  %1350 = vmatprep.subr.mxu0 %v425
  %1351 = vmatpush1.msra.mxu0 %v424
  %1352 = vmatprep.subr.mxu0 %v429
  %1353 = vmatpush1.msra.mxu0 %v428
  %1354 = vmatprep.subr.mxu0 %v433
  %1355 = vmatpush1.msra.mxu0 %v432
  %1356 = vmatprep.subr.mxu0 %v437
  %1357 = vmatpush1.msra.mxu0 %v436
  %1358 = vmatprep.subr.mxu0 %v441
  %1359 = vmatpush1.msra.mxu0 %v440
  %1360 = vmatprep.subr.mxu0 %v445
  %1361 = vmatpush1.msra.mxu0 %v444
  %1362 = vmatprep.subr.mxu0 %v449
  %1363 = vmatpush1.msra.mxu0 %v448
  %1364 = vmatprep.subr.mxu0 %v453
  %1365 = vmatpush1.msra.mxu0 %v452
  %1366 = vmatprep.subr.mxu0 %v457
  %1367 = vmatpush1.msra.mxu0 %v456
  %1368 = vmatprep.subr.mxu0 %v461
  %1369 = vmatpush1.msra.mxu0 %v460
  %1370 = vmatprep.subr.mxu0 %v465
  %1371 = vmatpush1.msra.mxu0 %v464
  %1372 = vmatprep.subr.mxu0 %v469
  %1373 = vmatpush1.msra.mxu0 %v468
  %1374 = vmatprep.subr.mxu0 %v473
  %1375 = vmatpush1.msra.mxu0 %v472
  %1376 = vmatprep.subr.mxu0 %v477
  %1377 = vmatpush1.msra.mxu0 %v476
  %1378 = vmatprep.subr.mxu0 %v481
  %1379 = vmatpush1.msra.mxu0 %v480
  %1380 = vmatprep.subr.mxu0 0.0
  %1381 = vmatpush1.msra.mxu0 0.0
  %1382 = vmatprep.subr.mxu0 0.0
  %1383 = vmatpush1.msra.mxu0 0.0
  %1384 = vmatprep.subr.mxu0 0.0
  %1385 = vmatpush1.msra.mxu0 0.0
  %1386 = vmatprep.subr.mxu0 0.0
  %1387 = vmatpush1.msra.mxu0 0.0
  %1388 = vmatprep.subr.mxu0 0.0
  %1389 = vmatpush1.msra.mxu0 0.0
  %1390 = vmatprep.subr.mxu0 0.0
  %1391 = vmatpush1.msra.mxu0 0.0
  %1392 = vmatprep.subr.mxu0 0.0
  %1393 = vmatpush1.msra.mxu0 0.0
  %1394 = vmatprep.subr.mxu0 0.0
  %1395 = vmatpush1.msra.mxu0 0.0
  %1396 = vmatprep.subr.mxu0 0.0
  %1397 = vmatpush1.msra.mxu0 0.0
  %1398 = vmatprep.subr.mxu0 0.0
  %1399 = vmatpush1.msra.mxu0 0.0
  %1400 = vmatprep.subr.mxu0 0.0
  %1401 = vmatpush1.msra.mxu0 0.0
  %1402 = vmatprep.subr.mxu0 0.0
  %1403 = vmatpush1.msra.mxu0 0.0
  %1404 = vmatprep.subr.mxu0 0.0
  %1405 = vmatpush1.msra.mxu0 0.0
  %1406 = vmatprep.subr.mxu0 0.0
  %1407 = vmatpush1.msra.mxu0 0.0
  %1408 = vmatprep.subr.mxu0 0.0
  %1409 = vmatpush1.msra.mxu0 0.0
  %1410 = vmatprep.subr.mxu0 0.0
  %1411 = vmatpush1.msra.mxu0 0.0
  %1412 = vmatprep.mubr.f32.mxu0 0.0
  %1413 = vmatmul.mubr.f32.gmra.mrb[0].mxu0 %v1340
  %v1414 = vpop.f32.mrb[0].mxu0
  %v1415 = vadd.f32 0.0, %v1414
  %v1416 = vpop.f32.mrb[0].mxu0
  %v1417 = vadd.f32 0.0, %v1416
  %1418 = vdwg.mxu0
  %1419 = vmatprep.subr.mxu0 %v423
  %1420 = vmatpush1.msra.mxu0 %v422
  %1421 = vmatprep.subr.mxu0 %v427
  %1422 = vmatpush1.msra.mxu0 %v426
  %1423 = vmatprep.subr.mxu0 %v431
  %1424 = vmatpush1.msra.mxu0 %v430
  %1425 = vmatprep.subr.mxu0 %v435
  %1426 = vmatpush1.msra.mxu0 %v434
  %1427 = vmatprep.subr.mxu0 %v439
  %1428 = vmatpush1.msra.mxu0 %v438
  %1429 = vmatprep.subr.mxu0 %v443
  %1430 = vmatpush1.msra.mxu0 %v442
  %1431 = vmatprep.subr.mxu0 %v447
  %1432 = vmatpush1.msra.mxu0 %v446
  %1433 = vmatprep.subr.mxu0 %v451
  %1434 = vmatpush1.msra.mxu0 %v450
  %1435 = vmatprep.subr.mxu0 %v455
  %1436 = vmatpush1.msra.mxu0 %v454
  %1437 = vmatprep.subr.mxu0 %v459
  %1438 = vmatpush1.msra.mxu0 %v458
  %1439 = vmatprep.subr.mxu0 %v463
  %1440 = vmatpush1.msra.mxu0 %v462
  %1441 = vmatprep.subr.mxu0 %v467
  %1442 = vmatpush1.msra.mxu0 %v466
  %1443 = vmatprep.subr.mxu0 %v471
  %1444 = vmatpush1.msra.mxu0 %v470
  %1445 = vmatprep.subr.mxu0 %v475
  %1446 = vmatpush1.msra.mxu0 %v474
  %1447 = vmatprep.subr.mxu0 %v479
  %1448 = vmatpush1.msra.mxu0 %v478
  %1449 = vmatprep.subr.mxu0 %v483
  %1450 = vmatpush1.msra.mxu0 %v482
  %1451 = vmatprep.subr.mxu0 0.0
  %1452 = vmatpush1.msra.mxu0 0.0
  %1453 = vmatprep.subr.mxu0 0.0
  %1454 = vmatpush1.msra.mxu0 0.0
  %1455 = vmatprep.subr.mxu0 0.0
  %1456 = vmatpush1.msra.mxu0 0.0
  %1457 = vmatprep.subr.mxu0 0.0
  %1458 = vmatpush1.msra.mxu0 0.0
  %1459 = vmatprep.subr.mxu0 0.0
  %1460 = vmatpush1.msra.mxu0 0.0
  %1461 = vmatprep.subr.mxu0 0.0
  %1462 = vmatpush1.msra.mxu0 0.0
  %1463 = vmatprep.subr.mxu0 0.0
  %1464 = vmatpush1.msra.mxu0 0.0
  %1465 = vmatprep.subr.mxu0 0.0
  %1466 = vmatpush1.msra.mxu0 0.0
  %1467 = vmatprep.subr.mxu0 0.0
  %1468 = vmatpush1.msra.mxu0 0.0
  %1469 = vmatprep.subr.mxu0 0.0
  %1470 = vmatpush1.msra.mxu0 0.0
  %1471 = vmatprep.subr.mxu0 0.0
  %1472 = vmatpush1.msra.mxu0 0.0
  %1473 = vmatprep.subr.mxu0 0.0
  %1474 = vmatpush1.msra.mxu0 0.0
  %1475 = vmatprep.subr.mxu0 0.0
  %1476 = vmatpush1.msra.mxu0 0.0
  %1477 = vmatprep.subr.mxu0 0.0
  %1478 = vmatpush1.msra.mxu0 0.0
  %1479 = vmatprep.subr.mxu0 0.0
  %1480 = vmatpush1.msra.mxu0 0.0
  %1481 = vmatprep.subr.mxu0 0.0
  %1482 = vmatpush1.msra.mxu0 0.0
  %1483 = vmatprep.mubr.f32.mxu0 0.0
  %1484 = vmatmul.mubr.f32.gmra.mrb[0].mxu0 %v1340
  %v1485 = vpop.f32.mrb[0].mxu0
  %v1486 = vadd.f32 0.0, %v1485
  %v1487 = vpop.f32.mrb[0].mxu0
  %v1488 = vadd.f32 0.0, %v1487
  %1489 = vdwg.mxu0
  %v1490 = vadd.f32 %v1344, %v1415
  %v1491 = vadd.f32 %v1345, %v1417
  %v1492 = vadd.f32 %v1346, %v1486
  %v1493 = vadd.f32 %v1347, %v1488
  %v1494 = vmul.f32 %v1490, 0.5
  %v1495 = vtanh.pop %v1494
  %v1496 = vmul.f32 %v1495, 0.5
  %v1497 = vadd.f32 %v1496, 0.5
  %v1498 = vmul.f32 %v1491, 0.5
  %v1499 = vtanh.pop %v1498
  %v1500 = vmul.f32 %v1499, 0.5
  %v1501 = vadd.f32 %v1500, 0.5
  %v1502 = vtanh.pop %v1492
  %v1503 = vmul.f32 %v1493, 0.5
  %v1504 = vtanh.pop %v1503
  %v1505 = vmul.f32 %v1504, 0.5
  %v1506 = vadd.f32 %v1505, 0.5
  %v1507 = vmul.f32 %v1501, %v1338
  %v1508 = vmul.f32 %v1497, %v1502
  %v1509 = vadd.f32 %v1507, %v1508
  %v1510 = vtanh.pop %v1509
  %v1511 = vmul.f32 %v1506, %v1510
  %s1512 = smul.u32 6, 4
  %s1513 = smul.addr %s1512, 8
  %s1514 = scalar_lea.vmem [#allocation2], %s1513
  %v1515 = vld [vmem:[%s1514] sm:$0xff]
  %v1516 = vld [vmem:[%s1514 + $0x8] sm:$0xff]
  %v1517 = vld [vmem:[%s1514 + $0x10] sm:$0xff]
  %v1518 = vld [vmem:[%s1514 + $0x18] sm:$0xff]
  %1519 = vmatprep.subr.mxu0 %v421
  %1520 = vmatpush1.msra.mxu0 %v420
  %1521 = vmatprep.subr.mxu0 %v425
  %1522 = vmatpush1.msra.mxu0 %v424
  %1523 = vmatprep.subr.mxu0 %v429
  %1524 = vmatpush1.msra.mxu0 %v428
  %1525 = vmatprep.subr.mxu0 %v433
  %1526 = vmatpush1.msra.mxu0 %v432
  %1527 = vmatprep.subr.mxu0 %v437
  %1528 = vmatpush1.msra.mxu0 %v436
  %1529 = vmatprep.subr.mxu0 %v441
  %1530 = vmatpush1.msra.mxu0 %v440
  %1531 = vmatprep.subr.mxu0 %v445
  %1532 = vmatpush1.msra.mxu0 %v444
  %1533 = vmatprep.subr.mxu0 %v449
  %1534 = vmatpush1.msra.mxu0 %v448
  %1535 = vmatprep.subr.mxu0 %v453
  %1536 = vmatpush1.msra.mxu0 %v452
  %1537 = vmatprep.subr.mxu0 %v457
  %1538 = vmatpush1.msra.mxu0 %v456
  %1539 = vmatprep.subr.mxu0 %v461
  %1540 = vmatpush1.msra.mxu0 %v460
  %1541 = vmatprep.subr.mxu0 %v465
  %1542 = vmatpush1.msra.mxu0 %v464
  %1543 = vmatprep.subr.mxu0 %v469
  %1544 = vmatpush1.msra.mxu0 %v468
  %1545 = vmatprep.subr.mxu0 %v473
  %1546 = vmatpush1.msra.mxu0 %v472
  %1547 = vmatprep.subr.mxu0 %v477
  %1548 = vmatpush1.msra.mxu0 %v476
  %1549 = vmatprep.subr.mxu0 %v481
  %1550 = vmatpush1.msra.mxu0 %v480
  %1551 = vmatprep.subr.mxu0 0.0
  %1552 = vmatpush1.msra.mxu0 0.0
  %1553 = vmatprep.subr.mxu0 0.0
  %1554 = vmatpush1.msra.mxu0 0.0
  %1555 = vmatprep.subr.mxu0 0.0
  %1556 = vmatpush1.msra.mxu0 0.0
  %1557 = vmatprep.subr.mxu0 0.0
  %1558 = vmatpush1.msra.mxu0 0.0
  %1559 = vmatprep.subr.mxu0 0.0
  %1560 = vmatpush1.msra.mxu0 0.0
  %1561 = vmatprep.subr.mxu0 0.0
  %1562 = vmatpush1.msra.mxu0 0.0
  %1563 = vmatprep.subr.mxu0 0.0
  %1564 = vmatpush1.msra.mxu0 0.0
  %1565 = vmatprep.subr.mxu0 0.0
  %1566 = vmatpush1.msra.mxu0 0.0
  %1567 = vmatprep.subr.mxu0 0.0
  %1568 = vmatpush1.msra.mxu0 0.0
  %1569 = vmatprep.subr.mxu0 0.0
  %1570 = vmatpush1.msra.mxu0 0.0
  %1571 = vmatprep.subr.mxu0 0.0
  %1572 = vmatpush1.msra.mxu0 0.0
  %1573 = vmatprep.subr.mxu0 0.0
  %1574 = vmatpush1.msra.mxu0 0.0
  %1575 = vmatprep.subr.mxu0 0.0
  %1576 = vmatpush1.msra.mxu0 0.0
  %1577 = vmatprep.subr.mxu0 0.0
  %1578 = vmatpush1.msra.mxu0 0.0
  %1579 = vmatprep.subr.mxu0 0.0
  %1580 = vmatpush1.msra.mxu0 0.0
  %1581 = vmatprep.subr.mxu0 0.0
  %1582 = vmatpush1.msra.mxu0 0.0
  %1583 = vmatprep.mubr.f32.mxu0 0.0
  %1584 = vmatmul.mubr.f32.gmra.mrb[0].mxu0 %v1511
  %v1585 = vpop.f32.mrb[0].mxu0
  %v1586 = vadd.f32 0.0, %v1585
  %v1587 = vpop.f32.mrb[0].mxu0
  %v1588 = vadd.f32 0.0, %v1587
  %1589 = vdwg.mxu0
  %1590 = vmatprep.subr.mxu0 %v423
  %1591 = vmatpush1.msra.mxu0 %v422
  %1592 = vmatprep.subr.mxu0 %v427
  %1593 = vmatpush1.msra.mxu0 %v426
  %1594 = vmatprep.subr.mxu0 %v431
  %1595 = vmatpush1.msra.mxu0 %v430
  %1596 = vmatprep.subr.mxu0 %v435
  %1597 = vmatpush1.msra.mxu0 %v434
  %1598 = vmatprep.subr.mxu0 %v439
  %1599 = vmatpush1.msra.mxu0 %v438
  %1600 = vmatprep.subr.mxu0 %v443
  %1601 = vmatpush1.msra.mxu0 %v442
  %1602 = vmatprep.subr.mxu0 %v447
  %1603 = vmatpush1.msra.mxu0 %v446
  %1604 = vmatprep.subr.mxu0 %v451
  %1605 = vmatpush1.msra.mxu0 %v450
  %1606 = vmatprep.subr.mxu0 %v455
  %1607 = vmatpush1.msra.mxu0 %v454
  %1608 = vmatprep.subr.mxu0 %v459
  %1609 = vmatpush1.msra.mxu0 %v458
  %1610 = vmatprep.subr.mxu0 %v463
  %1611 = vmatpush1.msra.mxu0 %v462
  %1612 = vmatprep.subr.mxu0 %v467
  %1613 = vmatpush1.msra.mxu0 %v466
  %1614 = vmatprep.subr.mxu0 %v471
  %1615 = vmatpush1.msra.mxu0 %v470
  %1616 = vmatprep.subr.mxu0 %v475
  %1617 = vmatpush1.msra.mxu0 %v474
  %1618 = vmatprep.subr.mxu0 %v479
  %1619 = vmatpush1.msra.mxu0 %v478
  %1620 = vmatprep.subr.mxu0 %v483
  %1621 = vmatpush1.msra.mxu0 %v482
  %1622 = vmatprep.subr.mxu0 0.0
  %1623 = vmatpush1.msra.mxu0 0.0
  %1624 = vmatprep.subr.mxu0 0.0
  %1625 = vmatpush1.msra.mxu0 0.0
  %1626 = vmatprep.subr.mxu0 0.0
  %1627 = vmatpush1.msra.mxu0 0.0
  %1628 = vmatprep.subr.mxu0 0.0
  %1629 = vmatpush1.msra.mxu0 0.0
  %1630 = vmatprep.subr.mxu0 0.0
  %1631 = vmatpush1.msra.mxu0 0.0
  %1632 = vmatprep.subr.mxu0 0.0
  %1633 = vmatpush1.msra.mxu0 0.0
  %1634 = vmatprep.subr.mxu0 0.0
  %1635 = vmatpush1.msra.mxu0 0.0
  %1636 = vmatprep.subr.mxu0 0.0
  %1637 = vmatpush1.msra.mxu0 0.0
  %1638 = vmatprep.subr.mxu0 0.0
  %1639 = vmatpush1.msra.mxu0 0.0
  %1640 = vmatprep.subr.mxu0 0.0
  %1641 = vmatpush1.msra.mxu0 0.0
  %1642 = vmatprep.subr.mxu0 0.0
  %1643 = vmatpush1.msra.mxu0 0.0
  %1644 = vmatprep.subr.mxu0 0.0
  %1645 = vmatpush1.msra.mxu0 0.0
  %1646 = vmatprep.subr.mxu0 0.0
  %1647 = vmatpush1.msra.mxu0 0.0
  %1648 = vmatprep.subr.mxu0 0.0
  %1649 = vmatpush1.msra.mxu0 0.0
  %1650 = vmatprep.subr.mxu0 0.0
  %1651 = vmatpush1.msra.mxu0 0.0
  %1652 = vmatprep.subr.mxu0 0.0
  %1653 = vmatpush1.msra.mxu0 0.0
  %1654 = vmatprep.mubr.f32.mxu0 0.0
  %1655 = vmatmul.mubr.f32.gmra.mrb[0].mxu0 %v1511
  %v1656 = vpop.f32.mrb[0].mxu0
  %v1657 = vadd.f32 0.0, %v1656
  %v1658 = vpop.f32.mrb[0].mxu0
  %v1659 = vadd.f32 0.0, %v1658
  %1660 = vdwg.mxu0
  %v1661 = vadd.f32 %v1515, %v1586
  %v1662 = vadd.f32 %v1516, %v1588
  %v1663 = vadd.f32 %v1517, %v1657
  %v1664 = vadd.f32 %v1518, %v1659
  %v1665 = vmul.f32 %v1661, 0.5
  %v1666 = vtanh.pop %v1665
  %v1667 = vmul.f32 %v1666, 0.5
  %v1668 = vadd.f32 %v1667, 0.5
  %v1669 = vmul.f32 %v1662, 0.5
  %v1670 = vtanh.pop %v1669
  %v1671 = vmul.f32 %v1670, 0.5
  %v1672 = vadd.f32 %v1671, 0.5
  %v1673 = vtanh.pop %v1663
  %v1674 = vmul.f32 %v1664, 0.5
  %v1675 = vtanh.pop %v1674
  %v1676 = vmul.f32 %v1675, 0.5
  %v1677 = vadd.f32 %v1676, 0.5
  %v1678 = vmul.f32 %v1672, %v1509
  %v1679 = vmul.f32 %v1668, %v1673
  %v1680 = vadd.f32 %v1678, %v1679
  %v1681 = vtanh.pop %v1680
  %v1682 = vmul.f32 %v1677, %v1681
  %s1683 = smul.u32 7, 4
  %s1684 = smul.addr %s1683, 8
  %s1685 = scalar_lea.vmem [#allocation2], %s1684
  %v1686 = vld [vmem:[%s1685] sm:$0xff]
  %v1687 = vld [vmem:[%s1685 + $0x8] sm:$0xff]
  %v1688 = vld [vmem:[%s1685 + $0x10] sm:$0xff]
  %v1689 = vld [vmem:[%s1685 + $0x18] sm:$0xff]
  %1690 = vmatprep.subr.mxu0 %v421
  %1691 = vmatpush1.msra.mxu0 %v420
  %1692 = vmatprep.subr.mxu0 %v425
  %1693 = vmatpush1.msra.mxu0 %v424
  %1694 = vmatprep.subr.mxu0 %v429
  %1695 = vmatpush1.msra.mxu0 %v428
  %1696 = vmatprep.subr.mxu0 %v433
  %1697 = vmatpush1.msra.mxu0 %v432
  %1698 = vmatprep.subr.mxu0 %v437
  %1699 = vmatpush1.msra.mxu0 %v436
  %1700 = vmatprep.subr.mxu0 %v441
  %1701 = vmatpush1.msra.mxu0 %v440
  %1702 = vmatprep.subr.mxu0 %v445
  %1703 = vmatpush1.msra.mxu0 %v444
  %1704 = vmatprep.subr.mxu0 %v449
  %1705 = vmatpush1.msra.mxu0 %v448
  %1706 = vmatprep.subr.mxu0 %v453
  %1707 = vmatpush1.msra.mxu0 %v452
  %1708 = vmatprep.subr.mxu0 %v457
  %1709 = vmatpush1.msra.mxu0 %v456
  %1710 = vmatprep.subr.mxu0 %v461
  %1711 = vmatpush1.msra.mxu0 %v460
  %1712 = vmatprep.subr.mxu0 %v465
  %1713 = vmatpush1.msra.mxu0 %v464
  %1714 = vmatprep.subr.mxu0 %v469
  %1715 = vmatpush1.msra.mxu0 %v468
  %1716 = vmatprep.subr.mxu0 %v473
  %1717 = vmatpush1.msra.mxu0 %v472
  %1718 = vmatprep.subr.mxu0 %v477
  %1719 = vmatpush1.msra.mxu0 %v476
  %1720 = vmatprep.subr.mxu0 %v481
  %1721 = vmatpush1.msra.mxu0 %v480
  %1722 = vmatprep.subr.mxu0 0.0
  %1723 = vmatpush1.msra.mxu0 0.0
  %1724 = vmatprep.subr.mxu0 0.0
  %1725 = vmatpush1.msra.mxu0 0.0
  %1726 = vmatprep.subr.mxu0 0.0
  %1727 = vmatpush1.msra.mxu0 0.0
  %1728 = vmatprep.subr.mxu0 0.0
  %1729 = vmatpush1.msra.mxu0 0.0
  %1730 = vmatprep.subr.mxu0 0.0
  %1731 = vmatpush1.msra.mxu0 0.0
  %1732 = vmatprep.subr.mxu0 0.0
  %1733 = vmatpush1.msra.mxu0 0.0
  %1734 = vmatprep.subr.mxu0 0.0
  %1735 = vmatpush1.msra.mxu0 0.0
  %1736 = vmatprep.subr.mxu0 0.0
  %1737 = vmatpush1.msra.mxu0 0.0
  %1738 = vmatprep.subr.mxu0 0.0
  %1739 = vmatpush1.msra.mxu0 0.0
  %1740 = vmatprep.subr.mxu0 0.0
  %1741 = vmatpush1.msra.mxu0 0.0
  %1742 = vmatprep.subr.mxu0 0.0
  %1743 = vmatpush1.msra.mxu0 0.0
  %1744 = vmatprep.subr.mxu0 0.0
  %1745 = vmatpush1.msra.mxu0 0.0
  %1746 = vmatprep.subr.mxu0 0.0
  %1747 = vmatpush1.msra.mxu0 0.0
  %1748 = vmatprep.subr.mxu0 0.0
  %1749 = vmatpush1.msra.mxu0 0.0
  %1750 = vmatprep.subr.mxu0 0.0
  %1751 = vmatpush1.msra.mxu0 0.0
  %1752 = vmatprep.subr.mxu0 0.0
  %1753 = vmatpush1.msra.mxu0 0.0
  %1754 = vmatprep.mubr.f32.mxu0 0.0
  %1755 = vmatmul.mubr.f32.gmra.mrb[0].mxu0 %v1682
  %v1756 = vpop.f32.mrb[0].mxu0
  %v1757 = vadd.f32 0.0, %v1756
  %v1758 = vpop.f32.mrb[0].mxu0
  %v1759 = vadd.f32 0.0, %v1758
  %1760 = vdwg.mxu0
  %1761 = vmatprep.subr.mxu0 %v423
  %1762 = vmatpush1.msra.mxu0 %v422
  %1763 = vmatprep.subr.mxu0 %v427
  %1764 = vmatpush1.msra.mxu0 %v426
  %1765 = vmatprep.subr.mxu0 %v431
  %1766 = vmatpush1.msra.mxu0 %v430
  %1767 = vmatprep.subr.mxu0 %v435
  %1768 = vmatpush1.msra.mxu0 %v434
  %1769 = vmatprep.subr.mxu0 %v439
  %1770 = vmatpush1.msra.mxu0 %v438
  %1771 = vmatprep.subr.mxu0 %v443
  %1772 = vmatpush1.msra.mxu0 %v442
  %1773 = vmatprep.subr.mxu0 %v447
  %1774 = vmatpush1.msra.mxu0 %v446
  %1775 = vmatprep.subr.mxu0 %v451
  %1776 = vmatpush1.msra.mxu0 %v450
  %1777 = vmatprep.subr.mxu0 %v455
  %1778 = vmatpush1.msra.mxu0 %v454
  %1779 = vmatprep.subr.mxu0 %v459
  %1780 = vmatpush1.msra.mxu0 %v458
  %1781 = vmatprep.subr.mxu0 %v463
  %1782 = vmatpush1.msra.mxu0 %v462
  %1783 = vmatprep.subr.mxu0 %v467
  %1784 = vmatpush1.msra.mxu0 %v466
  %1785 = vmatprep.subr.mxu0 %v471
  %1786 = vmatpush1.msra.mxu0 %v470
  %1787 = vmatprep.subr.mxu0 %v475
  %1788 = vmatpush1.msra.mxu0 %v474
  %1789 = vmatprep.subr.mxu0 %v479
  %1790 = vmatpush1.msra.mxu0 %v478
  %1791 = vmatprep.subr.mxu0 %v483
  %1792 = vmatpush1.msra.mxu0 %v482
  %1793 = vmatprep.subr.mxu0 0.0
  %1794 = vmatpush1.msra.mxu0 0.0
  %1795 = vmatprep.subr.mxu0 0.0
  %1796 = vmatpush1.msra.mxu0 0.0
  %1797 = vmatprep.subr.mxu0 0.0
  %1798 = vmatpush1.msra.mxu0 0.0
  %1799 = vmatprep.subr.mxu0 0.0
  %1800 = vmatpush1.msra.mxu0 0.0
  %1801 = vmatprep.subr.mxu0 0.0
  %1802 = vmatpush1.msra.mxu0 0.0
  %1803 = vmatprep.subr.mxu0 0.0
  %1804 = vmatpush1.msra.mxu0 0.0
  %1805 = vmatprep.subr.mxu0 0.0
  %1806 = vmatpush1.msra.mxu0 0.0
  %1807 = vmatprep.subr.mxu0 0.0
  %1808 = vmatpush1.msra.mxu0 0.0
  %1809 = vmatprep.subr.mxu0 0.0
  %1810 = vmatpush1.msra.mxu0 0.0
  %1811 = vmatprep.subr.mxu0 0.0
  %1812 = vmatpush1.msra.mxu0 0.0
  %1813 = vmatprep.subr.mxu0 0.0
  %1814 = vmatpush1.msra.mxu0 0.0
  %1815 = vmatprep.subr.mxu0 0.0
  %1816 = vmatpush1.msra.mxu0 0.0
  %1817 = vmatprep.subr.mxu0 0.0
  %1818 = vmatpush1.msra.mxu0 0.0
  %1819 = vmatprep.subr.mxu0 0.0
  %1820 = vmatpush1.msra.mxu0 0.0
  %1821 = vmatprep.subr.mxu0 0.0
  %1822 = vmatpush1.msra.mxu0 0.0
  %1823 = vmatprep.subr.mxu0 0.0
  %1824 = vmatpush1.msra.mxu0 0.0
  %1825 = vmatprep.mubr.f32.mxu0 0.0
  %1826 = vmatmul.mubr.f32.gmra.mrb[0].mxu0 %v1682
  %v1827 = vpop.f32.mrb[0].mxu0
  %v1828 = vadd.f32 0.0, %v1827
  %v1829 = vpop.f32.mrb[0].mxu0
  %v1830 = vadd.f32 0.0, %v1829
  %1831 = vdwg.mxu0
  %v1832 = vadd.f32 %v1686, %v1757
  %v1833 = vadd.f32 %v1687, %v1759
  %v1834 = vadd.f32 %v1688, %v1828
  %v1835 = vadd.f32 %v1689, %v1830
  %v1836 = vmul.f32 %v1832, 0.5
  %v1837 = vtanh.pop %v1836
  %v1838 = vmul.f32 %v1837, 0.5
  %v1839 = vadd.f32 %v1838, 0.5
  %v1840 = vmul.f32 %v1833, 0.5
  %v1841 = vtanh.pop %v1840
  %v1842 = vmul.f32 %v1841, 0.5
  %v1843 = vadd.f32 %v1842, 0.5
  %v1844 = vtanh.pop %v1834
  %v1845 = vmul.f32 %v1835, 0.5
  %v1846 = vtanh.pop %v1845
  %v1847 = vmul.f32 %v1846, 0.5
  %v1848 = vadd.f32 %v1847, 0.5
  %v1849 = vmul.f32 %v1843, %v1680
  %v1850 = vmul.f32 %v1839, %v1844
  %v1851 = vadd.f32 %v1849, %v1850
  %v1852 = vtanh.pop %v1851
  %v1853 = vmul.f32 %v1848, %v1852
  %s1854 = smul.u32 8, 4
  %s1855 = smul.addr %s1854, 8
  %s1856 = scalar_lea.vmem [#allocation2], %s1855
  %v1857 = vld [vmem:[%s1856] sm:$0xff]
  %v1858 = vld [vmem:[%s1856 + $0x8] sm:$0xff]
  %v1859 = vld [vmem:[%s1856 + $0x10] sm:$0xff]
  %v1860 = vld [vmem:[%s1856 + $0x18] sm:$0xff]
  %1861 = vmatprep.subr.mxu0 %v421
  %1862 = vmatpush1.msra.mxu0 %v420
  %1863 = vmatprep.subr.mxu0 %v425
  %1864 = vmatpush1.msra.mxu0 %v424
  %1865 = vmatprep.subr.mxu0 %v429
  %1866 = vmatpush1.msra.mxu0 %v428
  %1867 = vmatprep.subr.mxu0 %v433
  %1868 = vmatpush1.msra.mxu0 %v432
  %1869 = vmatprep.subr.mxu0 %v437
  %1870 = vmatpush1.msra.mxu0 %v436
  %1871 = vmatprep.subr.mxu0 %v441
  %1872 = vmatpush1.msra.mxu0 %v440
  %1873 = vmatprep.subr.mxu0 %v445
  %1874 = vmatpush1.msra.mxu0 %v444
  %1875 = vmatprep.subr.mxu0 %v449
  %1876 = vmatpush1.msra.mxu0 %v448
  %1877 = vmatprep.subr.mxu0 %v453
  %1878 = vmatpush1.msra.mxu0 %v452
  %1879 = vmatprep.subr.mxu0 %v457
  %1880 = vmatpush1.msra.mxu0 %v456
  %1881 = vmatprep.subr.mxu0 %v461
  %1882 = vmatpush1.msra.mxu0 %v460
  %1883 = vmatprep.subr.mxu0 %v465
  %1884 = vmatpush1.msra.mxu0 %v464
  %1885 = vmatprep.subr.mxu0 %v469
  %1886 = vmatpush1.msra.mxu0 %v468
  %1887 = vmatprep.subr.mxu0 %v473
  %1888 = vmatpush1.msra.mxu0 %v472
  %1889 = vmatprep.subr.mxu0 %v477
  %1890 = vmatpush1.msra.mxu0 %v476
  %1891 = vmatprep.subr.mxu0 %v481
  %1892 = vmatpush1.msra.mxu0 %v480
  %1893 = vmatprep.subr.mxu0 0.0
  %1894 = vmatpush1.msra.mxu0 0.0
  %1895 = vmatprep.subr.mxu0 0.0
  %1896 = vmatpush1.msra.mxu0 0.0
  %1897 = vmatprep.subr.mxu0 0.0
  %1898 = vmatpush1.msra.mxu0 0.0
  %1899 = vmatprep.subr.mxu0 0.0
  %1900 = vmatpush1.msra.mxu0 0.0
  %1901 = vmatprep.subr.mxu0 0.0
  %1902 = vmatpush1.msra.mxu0 0.0
  %1903 = vmatprep.subr.mxu0 0.0
  %1904 = vmatpush1.msra.mxu0 0.0
  %1905 = vmatprep.subr.mxu0 0.0
  %1906 = vmatpush1.msra.mxu0 0.0
  %1907 = vmatprep.subr.mxu0 0.0
  %1908 = vmatpush1.msra.mxu0 0.0
  %1909 = vmatprep.subr.mxu0 0.0
  %1910 = vmatpush1.msra.mxu0 0.0
  %1911 = vmatprep.subr.mxu0 0.0
  %1912 = vmatpush1.msra.mxu0 0.0
  %1913 = vmatprep.subr.mxu0 0.0
  %1914 = vmatpush1.msra.mxu0 0.0
  %1915 = vmatprep.subr.mxu0 0.0
  %1916 = vmatpush1.msra.mxu0 0.0
  %1917 = vmatprep.subr.mxu0 0.0
  %1918 = vmatpush1.msra.mxu0 0.0
  %1919 = vmatprep.subr.mxu0 0.0
  %1920 = vmatpush1.msra.mxu0 0.0
  %1921 = vmatprep.subr.mxu0 0.0
  %1922 = vmatpush1.msra.mxu0 0.0
  %1923 = vmatprep.subr.mxu0 0.0
  %1924 = vmatpush1.msra.mxu0 0.0
  %1925 = vmatprep.mubr.f32.mxu0 0.0
  %1926 = vmatmul.mubr.f32.gmra.mrb[0].mxu0 %v1853
  %v1927 = vpop.f32.mrb[0].mxu0
  %v1928 = vadd.f32 0.0, %v1927
  %v1929 = vpop.f32.mrb[0].mxu0
  %v1930 = vadd.f32 0.0, %v1929
  %1931 = vdwg.mxu0
  %1932 = vmatprep.subr.mxu0 %v423
  %1933 = vmatpush1.msra.mxu0 %v422
  %1934 = vmatprep.subr.mxu0 %v427
  %1935 = vmatpush1.msra.mxu0 %v426
  %1936 = vmatprep.subr.mxu0 %v431
  %1937 = vmatpush1.msra.mxu0 %v430
  %1938 = vmatprep.subr.mxu0 %v435
  %1939 = vmatpush1.msra.mxu0 %v434
  %1940 = vmatprep.subr.mxu0 %v439
  %1941 = vmatpush1.msra.mxu0 %v438
  %1942 = vmatprep.subr.mxu0 %v443
  %1943 = vmatpush1.msra.mxu0 %v442
  %1944 = vmatprep.subr.mxu0 %v447
  %1945 = vmatpush1.msra.mxu0 %v446
  %1946 = vmatprep.subr.mxu0 %v451
  %1947 = vmatpush1.msra.mxu0 %v450
  %1948 = vmatprep.subr.mxu0 %v455
  %1949 = vmatpush1.msra.mxu0 %v454
  %1950 = vmatprep.subr.mxu0 %v459
  %1951 = vmatpush1.msra.mxu0 %v458
  %1952 = vmatprep.subr.mxu0 %v463
  %1953 = vmatpush1.msra.mxu0 %v462
  %1954 = vmatprep.subr.mxu0 %v467
  %1955 = vmatpush1.msra.mxu0 %v466
  %1956 = vmatprep.subr.mxu0 %v471
  %1957 = vmatpush1.msra.mxu0 %v470
  %1958 = vmatprep.subr.mxu0 %v475
  %1959 = vmatpush1.msra.mxu0 %v474
  %1960 = vmatprep.subr.mxu0 %v479
  %1961 = vmatpush1.msra.mxu0 %v478
  %1962 = vmatprep.subr.mxu0 %v483
  %1963 = vmatpush1.msra.mxu0 %v482
  %1964 = vmatprep.subr.mxu0 0.0
  %1965 = vmatpush1.msra.mxu0 0.0
  %1966 = vmatprep.subr.mxu0 0.0
  %1967 = vmatpush1.msra.mxu0 0.0
  %1968 = vmatprep.subr.mxu0 0.0
  %1969 = vmatpush1.msra.mxu0 0.0
  %1970 = vmatprep.subr.mxu0 0.0
  %1971 = vmatpush1.msra.mxu0 0.0
  %1972 = vmatprep.subr.mxu0 0.0
  %1973 = vmatpush1.msra.mxu0 0.0
  %1974 = vmatprep.subr.mxu0 0.0
  %1975 = vmatpush1.msra.mxu0 0.0
  %1976 = vmatprep.subr.mxu0 0.0
  %1977 = vmatpush1.msra.mxu0 0.0
  %1978 = vmatprep.subr.mxu0 0.0
  %1979 = vmatpush1.msra.mxu0 0.0
  %1980 = vmatprep.subr.mxu0 0.0
  %1981 = vmatpush1.msra.mxu0 0.0
  %1982 = vmatprep.subr.mxu0 0.0
  %1983 = vmatpush1.msra.mxu0 0.0
  %1984 = vmatprep.subr.mxu0 0.0
  %1985 = vmatpush1.msra.mxu0 0.0
  %1986 = vmatprep.subr.mxu0 0.0
  %1987 = vmatpush1.msra.mxu0 0.0
  %1988 = vmatprep.subr.mxu0 0.0
  %1989 = vmatpush1.msra.mxu0 0.0
  %1990 = vmatprep.subr.mxu0 0.0
  %1991 = vmatpush1.msra.mxu0 0.0
  %1992 = vmatprep.subr.mxu0 0.0
  %1993 = vmatpush1.msra.mxu0 0.0
  %1994 = vmatprep.subr.mxu0 0.0
  %1995 = vmatpush1.msra.mxu0 0.0
  %1996 = vmatprep.mubr.f32.mxu0 0.0
  %1997 = vmatmul.mubr.f32.gmra.mrb[0].mxu0 %v1853
  %v1998 = vpop.f32.mrb[0].mxu0
  %v1999 = vadd.f32 0.0, %v1998
  %v2000 = vpop.f32.mrb[0].mxu0
  %v2001 = vadd.f32 0.0, %v2000
  %2002 = vdwg.mxu0
  %v2003 = vadd.f32 %v1857, %v1928
  %v2004 = vadd.f32 %v1858, %v1930
  %v2005 = vadd.f32 %v1859, %v1999
  %v2006 = vadd.f32 %v1860, %v2001
  %v2007 = vmul.f32 %v2003, 0.5
  %v2008 = vtanh.pop %v2007
  %v2009 = vmul.f32 %v2008, 0.5
  %v2010 = vadd.f32 %v2009, 0.5
  %v2011 = vmul.f32 %v2004, 0.5
  %v2012 = vtanh.pop %v2011
  %v2013 = vmul.f32 %v2012, 0.5
  %v2014 = vadd.f32 %v2013, 0.5
  %v2015 = vtanh.pop %v2005
  %v2016 = vmul.f32 %v2006, 0.5
  %v2017 = vtanh.pop %v2016
  %v2018 = vmul.f32 %v2017, 0.5
  %v2019 = vadd.f32 %v2018, 0.5
  %v2020 = vmul.f32 %v2014, %v1851
  %v2021 = vmul.f32 %v2010, %v2015
  %v2022 = vadd.f32 %v2020, %v2021
  %v2023 = vtanh.pop %v2022
  %v2024 = vmul.f32 %v2019, %v2023
  %s2025 = smul.u32 9, 4
  %s2026 = smul.addr %s2025, 8
  %s2027 = scalar_lea.vmem [#allocation2], %s2026
  %v2028 = vld [vmem:[%s2027] sm:$0xff]
  %v2029 = vld [vmem:[%s2027 + $0x8] sm:$0xff]
  %v2030 = vld [vmem:[%s2027 + $0x10] sm:$0xff]
  %v2031 = vld [vmem:[%s2027 + $0x18] sm:$0xff]
  %2032 = vmatprep.subr.mxu0 %v421
  %2033 = vmatpush1.msra.mxu0 %v420
  %2034 = vmatprep.subr.mxu0 %v425
  %2035 = vmatpush1.msra.mxu0 %v424
  %2036 = vmatprep.subr.mxu0 %v429
  %2037 = vmatpush1.msra.mxu0 %v428
  %2038 = vmatprep.subr.mxu0 %v433
  %2039 = vmatpush1.msra.mxu0 %v432
  %2040 = vmatprep.subr.mxu0 %v437
  %2041 = vmatpush1.msra.mxu0 %v436
  %2042 = vmatprep.subr.mxu0 %v441
  %2043 = vmatpush1.msra.mxu0 %v440
  %2044 = vmatprep.subr.mxu0 %v445
  %2045 = vmatpush1.msra.mxu0 %v444
  %2046 = vmatprep.subr.mxu0 %v449
  %2047 = vmatpush1.msra.mxu0 %v448
  %2048 = vmatprep.subr.mxu0 %v453
  %2049 = vmatpush1.msra.mxu0 %v452
  %2050 = vmatprep.subr.mxu0 %v457
  %2051 = vmatpush1.msra.mxu0 %v456
  %2052 = vmatprep.subr.mxu0 %v461
  %2053 = vmatpush1.msra.mxu0 %v460
  %2054 = vmatprep.subr.mxu0 %v465
  %2055 = vmatpush1.msra.mxu0 %v464
  %2056 = vmatprep.subr.mxu0 %v469
  %2057 = vmatpush1.msra.mxu0 %v468
  %2058 = vmatprep.subr.mxu0 %v473
  %2059 = vmatpush1.msra.mxu0 %v472
  %2060 = vmatprep.subr.mxu0 %v477
  %2061 = vmatpush1.msra.mxu0 %v476
  %2062 = vmatprep.subr.mxu0 %v481
  %2063 = vmatpush1.msra.mxu0 %v480
  %2064 = vmatprep.subr.mxu0 0.0
  %2065 = vmatpush1.msra.mxu0 0.0
  %2066 = vmatprep.subr.mxu0 0.0
  %2067 = vmatpush1.msra.mxu0 0.0
  %2068 = vmatprep.subr.mxu0 0.0
  %2069 = vmatpush1.msra.mxu0 0.0
  %2070 = vmatprep.subr.mxu0 0.0
  %2071 = vmatpush1.msra.mxu0 0.0
  %2072 = vmatprep.subr.mxu0 0.0
  %2073 = vmatpush1.msra.mxu0 0.0
  %2074 = vmatprep.subr.mxu0 0.0
  %2075 = vmatpush1.msra.mxu0 0.0
  %2076 = vmatprep.subr.mxu0 0.0
  %2077 = vmatpush1.msra.mxu0 0.0
  %2078 = vmatprep.subr.mxu0 0.0
  %2079 = vmatpush1.msra.mxu0 0.0
  %2080 = vmatprep.subr.mxu0 0.0
  %2081 = vmatpush1.msra.mxu0 0.0
  %2082 = vmatprep.subr.mxu0 0.0
  %2083 = vmatpush1.msra.mxu0 0.0
  %2084 = vmatprep.subr.mxu0 0.0
  %2085 = vmatpush1.msra.mxu0 0.0
  %2086 = vmatprep.subr.mxu0 0.0
  %2087 = vmatpush1.msra.mxu0 0.0
  %2088 = vmatprep.subr.mxu0 0.0
  %2089 = vmatpush1.msra.mxu0 0.0
  %2090 = vmatprep.subr.mxu0 0.0
  %2091 = vmatpush1.msra.mxu0 0.0
  %2092 = vmatprep.subr.mxu0 0.0
  %2093 = vmatpush1.msra.mxu0 0.0
  %2094 = vmatprep.subr.mxu0 0.0
  %2095 = vmatpush1.msra.mxu0 0.0
  %2096 = vmatprep.mubr.f32.mxu0 0.0
  %2097 = vmatmul.mubr.f32.gmra.mrb[0].mxu0 %v2024
  %v2098 = vpop.f32.mrb[0].mxu0
  %v2099 = vadd.f32 0.0, %v2098
  %v2100 = vpop.f32.mrb[0].mxu0
  %v2101 = vadd.f32 0.0, %v2100
  %2102 = vdwg.mxu0
  %2103 = vmatprep.subr.mxu0 %v423
  %2104 = vmatpush1.msra.mxu0 %v422
  %2105 = vmatprep.subr.mxu0 %v427
  %2106 = vmatpush1.msra.mxu0 %v426
  %2107 = vmatprep.subr.mxu0 %v431
  %2108 = vmatpush1.msra.mxu0 %v430
  %2109 = vmatprep.subr.mxu0 %v435
  %2110 = vmatpush1.msra.mxu0 %v434
  %2111 = vmatprep.subr.mxu0 %v439
  %2112 = vmatpush1.msra.mxu0 %v438
  %2113 = vmatprep.subr.mxu0 %v443
  %2114 = vmatpush1.msra.mxu0 %v442
  %2115 = vmatprep.subr.mxu0 %v447
  %2116 = vmatpush1.msra.mxu0 %v446
  %2117 = vmatprep.subr.mxu0 %v451
  %2118 = vmatpush1.msra.mxu0 %v450
  %2119 = vmatprep.subr.mxu0 %v455
  %2120 = vmatpush1.msra.mxu0 %v454
  %2121 = vmatprep.subr.mxu0 %v459
  %2122 = vmatpush1.msra.mxu0 %v458
  %2123 = vmatprep.subr.mxu0 %v463
  %2124 = vmatpush1.msra.mxu0 %v462
  %2125 = vmatprep.subr.mxu0 %v467
  %2126 = vmatpush1.msra.mxu0 %v466
  %2127 = vmatprep.subr.mxu0 %v471
  %2128 = vmatpush1.msra.mxu0 %v470
  %2129 = vmatprep.subr.mxu0 %v475
  %2130 = vmatpush1.msra.mxu0 %v474
  %2131 = vmatprep.subr.mxu0 %v479
  %2132 = vmatpush1.msra.mxu0 %v478
  %2133 = vmatprep.subr.mxu0 %v483
  %2134 = vmatpush1.msra.mxu0 %v482
  %2135 = vmatprep.subr.mxu0 0.0
  %2136 = vmatpush1.msra.mxu0 0.0
  %2137 = vmatprep.subr.mxu0 0.0
  %2138 = vmatpush1.msra.mxu0 0.0
  %2139 = vmatprep.subr.mxu0 0.0
  %2140 = vmatpush1.msra.mxu0 0.0
  %2141 = vmatprep.subr.mxu0 0.0
  %2142 = vmatpush1.msra.mxu0 0.0
  %2143 = vmatprep.subr.mxu0 0.0
  %2144 = vmatpush1.msra.mxu0 0.0
  %2145 = vmatprep.subr.mxu0 0.0
  %2146 = vmatpush1.msra.mxu0 0.0
  %2147 = vmatprep.subr.mxu0 0.0
  %2148 = vmatpush1.msra.mxu0 0.0
  %2149 = vmatprep.subr.mxu0 0.0
  %2150 = vmatpush1.msra.mxu0 0.0
  %2151 = vmatprep.subr.mxu0 0.0
  %2152 = vmatpush1.msra.mxu0 0.0
  %2153 = vmatprep.subr.mxu0 0.0
  %2154 = vmatpush1.msra.mxu0 0.0
  %2155 = vmatprep.subr.mxu0 0.0
  %2156 = vmatpush1.msra.mxu0 0.0
  %2157 = vmatprep.subr.mxu0 0.0
  %2158 = vmatpush1.msra.mxu0 0.0
  %2159 = vmatprep.subr.mxu0 0.0
  %2160 = vmatpush1.msra.mxu0 0.0
  %2161 = vmatprep.subr.mxu0 0.0
  %2162 = vmatpush1.msra.mxu0 0.0
  %2163 = vmatprep.subr.mxu0 0.0
  %2164 = vmatpush1.msra.mxu0 0.0
  %2165 = vmatprep.subr.mxu0 0.0
  %2166 = vmatpush1.msra.mxu0 0.0
  %2167 = vmatprep.mubr.f32.mxu0 0.0
  %2168 = vmatmul.mubr.f32.gmra.mrb[0].mxu0 %v2024
  %v2169 = vpop.f32.mrb[0].mxu0
  %v2170 = vadd.f32 0.0, %v2169
  %v2171 = vpop.f32.mrb[0].mxu0
  %v2172 = vadd.f32 0.0, %v2171
  %2173 = vdwg.mxu0
  %v2174 = vadd.f32 %v2028, %v2099
  %v2175 = vadd.f32 %v2029, %v2101
  %v2176 = vadd.f32 %v2030, %v2170
  %v2177 = vadd.f32 %v2031, %v2172
  %v2178 = vmul.f32 %v2174, 0.5
  %v2179 = vtanh.pop %v2178
  %v2180 = vmul.f32 %v2179, 0.5
  %v2181 = vadd.f32 %v2180, 0.5
  %v2182 = vmul.f32 %v2175, 0.5
  %v2183 = vtanh.pop %v2182
  %v2184 = vmul.f32 %v2183, 0.5
  %v2185 = vadd.f32 %v2184, 0.5
  %v2186 = vtanh.pop %v2176
  %v2187 = vmul.f32 %v2177, 0.5
  %v2188 = vtanh.pop %v2187
  %v2189 = vmul.f32 %v2188, 0.5
  %v2190 = vadd.f32 %v2189, 0.5
  %v2191 = vmul.f32 %v2185, %v2022
  %v2192 = vmul.f32 %v2181, %v2186
  %v2193 = vadd.f32 %v2191, %v2192
  %v2194 = vtanh.pop %v2193
  %v2195 = vmul.f32 %v2190, %v2194
  %2196 = vst [vmem:[#allocation3] sm:$0xff] %v2195
  %2197 = vst [vmem:[#allocation4] sm:$0xff] %v2193
  // Predicated region
  $region38: #{ganslstm_core_forward.1} parent=0 // pred_check
    %p2198 = pneg %p29
  $region39: #{ganslstm_core_forward.1} parent=0 // pred_check_branch
    %2200 = sbr.rel (%p2198) target = $region41
  $region40: #{ganslstm_core_forward.1} parent=0 // pred_region
    %v2201 = vld [vmem:[%s4] sm:$0xff]
    %v2202 = vld [vmem:[%s4 + $0x8] sm:$0xff]
    %v2203 = vld [vmem:[%s4 + $0x10] sm:$0xff]
    %v2204 = vld [vmem:[%s4 + $0x18] sm:$0xff]
    %v2205 = vld [vmem:[%s4 + $0x20] sm:$0xff]
    %v2206 = vld [vmem:[%s4 + $0x28] sm:$0xff]
    %v2207 = vld [vmem:[%s4 + $0x30] sm:$0xff]
    %v2208 = vld [vmem:[%s4 + $0x38] sm:$0xff]
    %v2209 = vld [vmem:[%s4 + $0x40] sm:$0xff]
    %v2210 = vld [vmem:[%s4 + $0x48] sm:$0xff]
    %v2211 = vld [vmem:[%s4 + $0x50] sm:$0xff]
    %v2212 = vld [vmem:[%s4 + $0x58] sm:$0xff]
    %v2213 = vld [vmem:[%s4 + $0x60] sm:$0xff]
    %v2214 = vld [vmem:[%s4 + $0x68] sm:$0xff]
    %v2215 = vld [vmem:[%s4 + $0x70] sm:$0xff]
    %v2216 = vld [vmem:[%s4 + $0x78] sm:$0xff]
    %v2217 = vld [vmem:[%s5] sm:$0x1]
    %v2219 = vlaneseq
    %v2220 = vshrl.u32 %v2219, 7
    %v2221 = vsub.s32 0, %v2220
    %v2222 = vrot.slane %v2217, %v2221
    %2224 = vmatprep.subr.mxu0 0.0
    %2225 = vmatpush1.msra.mxu0 %v2201
    %2226 = vmatprep.subr.mxu0 0.0
    %2227 = vmatpush1.msra.mxu0 %v2202
    %2228 = vmatprep.subr.mxu0 0.0
    %2229 = vmatpush1.msra.mxu0 %v2203
    %2230 = vmatprep.subr.mxu0 0.0
    %2231 = vmatpush1.msra.mxu0 %v2204
    %2232 = vmatprep.subr.mxu0 0.0
    %2233 = vmatpush1.msra.mxu0 %v2205
    %2234 = vmatprep.subr.mxu0 0.0
    %2235 = vmatpush1.msra.mxu0 %v2206
    %2236 = vmatprep.subr.mxu0 0.0
    %2237 = vmatpush1.msra.mxu0 %v2207
    %2238 = vmatprep.subr.mxu0 0.0
    %2239 = vmatpush1.msra.mxu0 %v2208
    %2240 = vmatprep.subr.mxu0 0.0
    %2241 = vmatpush1.msra.mxu0 %v2209
    %2242 = vmatprep.subr.mxu0 0.0
    %2243 = vmatpush1.msra.mxu0 %v2210
    %2244 = vmatprep.subr.mxu0 0.0
    %2245 = vmatpush1.msra.mxu0 %v2211
    %2246 = vmatprep.subr.mxu0 0.0
    %2247 = vmatpush1.msra.mxu0 %v2212
    %2248 = vmatprep.subr.mxu0 0.0
    %2249 = vmatpush1.msra.mxu0 %v2213
    %2250 = vmatprep.subr.mxu0 0.0
    %2251 = vmatpush1.msra.mxu0 %v2214
    %2252 = vmatprep.subr.mxu0 0.0
    %2253 = vmatpush1.msra.mxu0 %v2215
    %2254 = vmatprep.subr.mxu0 0.0
    %2255 = vmatpush1.msra.mxu0 %v2216
    %2256 = vmatprep.subr.mxu0 0.0
    %2257 = vmatpush1.msra.mxu0 0.0
    %2258 = vmatprep.subr.mxu0 0.0
    %2259 = vmatpush1.msra.mxu0 0.0
    %2260 = vmatprep.subr.mxu0 0.0
    %2261 = vmatpush1.msra.mxu0 0.0
    %2262 = vmatprep.subr.mxu0 0.0
    %2263 = vmatpush1.msra.mxu0 0.0
    %2264 = vmatprep.subr.mxu0 0.0
    %2265 = vmatpush1.msra.mxu0 0.0
    %2266 = vmatprep.subr.mxu0 0.0
    %2267 = vmatpush1.msra.mxu0 0.0
    %2268 = vmatprep.subr.mxu0 0.0
    %2269 = vmatpush1.msra.mxu0 0.0
    %2270 = vmatprep.subr.mxu0 0.0
    %2271 = vmatpush1.msra.mxu0 0.0
    %2272 = vmatprep.subr.mxu0 0.0
    %2273 = vmatpush1.msra.mxu0 0.0
    %2274 = vmatprep.subr.mxu0 0.0
    %2275 = vmatpush1.msra.mxu0 0.0
    %2276 = vmatprep.subr.mxu0 0.0
    %2277 = vmatpush1.msra.mxu0 0.0
    %2278 = vmatprep.subr.mxu0 0.0
    %2279 = vmatpush1.msra.mxu0 0.0
    %2280 = vmatprep.subr.mxu0 0.0
    %2281 = vmatpush1.msra.mxu0 0.0
    %2282 = vmatprep.subr.mxu0 0.0
    %2283 = vmatpush1.msra.mxu0 0.0
    %2284 = vmatprep.subr.mxu0 0.0
    %2285 = vmatpush1.msra.mxu0 0.0
    %2286 = vmatprep.subr.mxu0 0.0
    %2287 = vmatpush1.msra.mxu0 0.0
    %2288 = vmatprep.mubr.f32.mxu0 0.0
    %2289 = vmatmul.mubr.f32.gmra.mrb[0].mxu0 %v2195
    %v2290 = vpop.f32.mrb[0].mxu0
    %v2291 = vadd.f32 %v2222, %v2290
    %v2292 = vpop.f32.mrb[0].mxu0
    %2293 = vdwg.mxu0
    %v2294 = vmax.f32 %v2291, 0.0
    %v2295 = vld [vmem:[%s6] sm:$0xff]
    %v2296 = vld [vmem:[%s6 + $0x8] sm:$0xff]
    %v2297 = vld [vmem:[%s6 + $0x10] sm:$0xff]
    %v2298 = vld [vmem:[%s6 + $0x18] sm:$0xff]
    %v2299 = vld [vmem:[%s6 + $0x20] sm:$0xff]
    %v2300 = vld [vmem:[%s6 + $0x28] sm:$0xff]
    %v2301 = vld [vmem:[%s6 + $0x30] sm:$0xff]
    %v2302 = vld [vmem:[%s6 + $0x38] sm:$0xff]
    %v2303 = vld [vmem:[%s6 + $0x40] sm:$0xff]
    %v2304 = vld [vmem:[%s6 + $0x48] sm:$0xff]
    %v2305 = vld [vmem:[%s6 + $0x50] sm:$0xff]
    %v2306 = vld [vmem:[%s6 + $0x58] sm:$0xff]
    %v2307 = vld [vmem:[%s6 + $0x60] sm:$0xff]
    %v2308 = vld [vmem:[%s6 + $0x68] sm:$0xff]
    %v2309 = vld [vmem:[%s6 + $0x70] sm:$0xff]
    %v2310 = vld [vmem:[%s6 + $0x78] sm:$0xff]
    %v2311 = vld [vmem:[%s7] sm:$0x1]
    %v2313 = vlaneseq
    %v2314 = vshrl.u32 %v2313, 7
    %v2315 = vsub.s32 0, %v2314
    %v2316 = vrot.slane %v2311, %v2315
    %2318 = vmatprep.subr.mxu0 0.0
    %2319 = vmatpush1.msra.mxu0 %v2295
    %2320 = vmatprep.subr.mxu0 0.0
    %2321 = vmatpush1.msra.mxu0 %v2296
    %2322 = vmatprep.subr.mxu0 0.0
    %2323 = vmatpush1.msra.mxu0 %v2297
    %2324 = vmatprep.subr.mxu0 0.0
    %2325 = vmatpush1.msra.mxu0 %v2298
    %2326 = vmatprep.subr.mxu0 0.0
    %2327 = vmatpush1.msra.mxu0 %v2299
    %2328 = vmatprep.subr.mxu0 0.0
    %2329 = vmatpush1.msra.mxu0 %v2300
    %2330 = vmatprep.subr.mxu0 0.0
    %2331 = vmatpush1.msra.mxu0 %v2301
    %2332 = vmatprep.subr.mxu0 0.0
    %2333 = vmatpush1.msra.mxu0 %v2302
    %2334 = vmatprep.subr.mxu0 0.0
    %2335 = vmatpush1.msra.mxu0 %v2303
    %2336 = vmatprep.subr.mxu0 0.0
    %2337 = vmatpush1.msra.mxu0 %v2304
    %2338 = vmatprep.subr.mxu0 0.0
    %2339 = vmatpush1.msra.mxu0 %v2305
    %2340 = vmatprep.subr.mxu0 0.0
    %2341 = vmatpush1.msra.mxu0 %v2306
    %2342 = vmatprep.subr.mxu0 0.0
    %2343 = vmatpush1.msra.mxu0 %v2307
    %2344 = vmatprep.subr.mxu0 0.0
    %2345 = vmatpush1.msra.mxu0 %v2308
    %2346 = vmatprep.subr.mxu0 0.0
    %2347 = vmatpush1.msra.mxu0 %v2309
    %2348 = vmatprep.subr.mxu0 0.0
    %2349 = vmatpush1.msra.mxu0 %v2310
    %2350 = vmatprep.subr.mxu0 0.0
    %2351 = vmatpush1.msra.mxu0 0.0
    %2352 = vmatprep.subr.mxu0 0.0
    %2353 = vmatpush1.msra.mxu0 0.0
    %2354 = vmatprep.subr.mxu0 0.0
    %2355 = vmatpush1.msra.mxu0 0.0
    %2356 = vmatprep.subr.mxu0 0.0
    %2357 = vmatpush1.msra.mxu0 0.0
    %2358 = vmatprep.subr.mxu0 0.0
    %2359 = vmatpush1.msra.mxu0 0.0
    %2360 = vmatprep.subr.mxu0 0.0
    %2361 = vmatpush1.msra.mxu0 0.0
    %2362 = vmatprep.subr.mxu0 0.0
    %2363 = vmatpush1.msra.mxu0 0.0
    %2364 = vmatprep.subr.mxu0 0.0
    %2365 = vmatpush1.msra.mxu0 0.0
    %2366 = vmatprep.subr.mxu0 0.0
    %2367 = vmatpush1.msra.mxu0 0.0
    %2368 = vmatprep.subr.mxu0 0.0
    %2369 = vmatpush1.msra.mxu0 0.0
    %2370 = vmatprep.subr.mxu0 0.0
    %2371 = vmatpush1.msra.mxu0 0.0
    %2372 = vmatprep.subr.mxu0 0.0
    %2373 = vmatpush1.msra.mxu0 0.0
    %2374 = vmatprep.subr.mxu0 0.0
    %2375 = vmatpush1.msra.mxu0 0.0
    %2376 = vmatprep.subr.mxu0 0.0
    %2377 = vmatpush1.msra.mxu0 0.0
    %2378 = vmatprep.subr.mxu0 0.0
    %2379 = vmatpush1.msra.mxu0 0.0
    %2380 = vmatprep.subr.mxu0 0.0
    %2381 = vmatpush1.msra.mxu0 0.0
    %2382 = vmatprep.mubr.f32.mxu0 0.0
    %2383 = vmatmul.mubr.f32.gmra.mrb[0].mxu0 %v2294
    %v2384 = vpop.f32.mrb[0].mxu0
    %v2385 = vadd.f32 %v2316, %v2384
    %v2386 = vpop.f32.mrb[0].mxu0
    %2387 = vdwg.mxu0
    %2388 = vst [vmem:[%s8] sm:$0xff] %v2385
  $region41: #{ganslstm_core_forward.1} parent=0 // pred_fallthru
    _
  // Predicated region
  $region42: #{ganslstm_core_forward.1} parent=0 // pred_check
    _
  $region43: #{ganslstm_core_forward.1} parent=0 // pred_check_branch
    %2390 = sbr.rel (0) target = $region45
  $region44: #{ganslstm_core_forward.1} parent=0 // pred_region
    _
  $region45: #{ganslstm_core_forward.1} parent=0 // pred_fallthru
    _
  // Predicated region
  $region46: #{ganslstm_core_forward.1} parent=0 // pred_check
    _
  $region47: #{ganslstm_core_forward.1} parent=0 // pred_check_branch
    %2392 = sbr.rel (0) target = $region49
  $region48: #{ganslstm_core_forward.1} parent=0 // pred_region
    _
  $region49: #{ganslstm_core_forward.1} parent=0 // pred_fallthru
    _

</llo_original>
